<compile_context>
chip_gen: v7x
topology: tpu7x:2x2x1
jax: 0.10.0
libtpu: 0.0.40
codegen_flags: <defaults>
</compile_context>

<pallas_src>
import functools

import numpy as np

import jax
import jax.numpy as jnp
from jax.experimental import pallas as pl
from jax.experimental.pallas import tpu as pltpu


# ----------------------------------------------------------------------------
# Static host-side constants (hoisted out of the per-call wrappers)
# ----------------------------------------------------------------------------
@functools.lru_cache(maxsize=None)
def _neighbor_valid_mask(H, W):
    """(9, H*W) 0/1 mask: neighbour (kh*3+kw) in-bounds at each spatial pos."""
    m = np.zeros((9, H * W), np.float32)
    hh = np.arange(H)[:, None]
    ww = np.arange(W)[None, :]
    ki = 0
    for dh in (-1, 0, 1):
        for dw in (-1, 0, 1):
            ok = ((hh + dh >= 0) & (hh + dh < H) & (ww + dw >= 0) & (ww + dw < W))
            m[ki] = ok.reshape(-1).astype(np.float32)
            ki += 1
    return m


@functools.lru_cache(maxsize=None)
def _bandstop_mask(H, W, cuton):
    """fftshift -> zero centre block -> ifftshift, expressed as a multiplicative
    mask on the UNSHIFTED spectrum.  Exact when H and W are even (the two
    half-size rolls cancel)."""
    cy, cx = H // 2, W // 2
    rh, rw = int(cuton * cy), int(cuton * cx)
    m = np.ones((H, W), np.float32)
    m[cy - rh:cy + rh, cx - rw:cx + rw] = 0.0        # mask in the shifted frame
    m = np.roll(m, -cy, axis=0)                      # move back to unshifted frame
    m = np.roll(m, -cx, axis=1)
    return m.reshape(-1)


def _nearest_upsample(y, H, W):
    """F.interpolate(y, (H, W), mode='nearest').

    NOTE: in the reference the upsample runs AFTER conv1+BN+ReLU.  A 1x1 conv,
    ReLU and training-mode BN all commute exactly with an integer-factor
    nearest upsample (each source pixel is replicated the same number of
    times, so batch statistics are unchanged), so we hoist it in front of the
    fused kernel.
    """
    B, C, Hy, Wy = y.shape
    if H % Hy == 0 and W % Wy == 0:
        fy, fx = H // Hy, W // Wy
        return jnp.broadcast_to(y[:, :, :, None, :, None],
                                (B, C, Hy, fy, Wy, fx)).reshape(B, C, H, W)
    # TODO(synk): non-integer nearest upsample breaks the BN-stat equivalence
    # of the hoist; fall back to a plain gather (stats then differ slightly).
    hi = (jnp.arange(H) * Hy) // H
    wi = (jnp.arange(W) * Wy) // W
    return y[:, :, hi[:, None], wi[None, :]]


# ----------------------------------------------------------------------------
# Kernel A : fused conv1_x / conv1 + BN + ReLU + AttentionConv
# ----------------------------------------------------------------------------
def _make_fused_attention_kernel(width):
    def kernel(xy_ref, w_in_ref, w_qkv_ref, rel_ref, valid_ref, o_ref):
        B, _, S = xy_ref.shape
        C = rel_ref.shape[0]                         # mid_channel
        n_tok = float(B * S)
        eps = 1e-5

        # ---- both 1x1 input convs as ONE MXU matmul per batch --------------
        # w_in = [[W1x, 0], [0, W1y]] : rows 0..C-1 -> x path, C..2C-1 -> y path
        w_in = w_in_ref[...]                          # (2C, Cx+Cy)
        z = []
        tot = jnp.zeros((2 * C, 1), jnp.float32)
        for b in range(B):
            zb = jnp.dot(w_in, xy_ref[b], preferred_element_type=jnp.float32)
            z.append(zb)                              # (2C, S)
            tot = tot + jnp.sum(zb, axis=1, keepdims=True)
        mean = tot / n_tok

        sq = jnp.zeros((2 * C, 1), jnp.float32)
        for b in range(B):
            d = z[b] - mean
            sq = sq + jnp.sum(d * d, axis=1, keepdims=True)
        inv_std = jax.lax.rsqrt(sq / n_tok + eps)     # per-channel BN (train stats)

        # w_qkv = [[0, Wq], [Wk, 0], [Wv, 0]] : q from the y half, k/v from x
        w_qkv = w_qkv_ref[...]                        # (3C, 2C)
        rel = rel_ref[...]                            # (C, 9)

        for b in range(B):
            x1y1 = jnp.maximum((z[b] - mean) * inv_std, 0.0)          # (2C, S)
            qkv = jnp.dot(w_qkv, x1y1, preferred_element_type=jnp.float32)
            q = qkv[:C]
            k = qkv[C:2 * C]
            v = qkv[2 * C:]

            # ---- streaming 9-neighbour softmax (online max / denom / acc) --
            m = jnp.full((C, S), -jnp.inf, jnp.float32)
            den = jnp.zeros((C, S), jnp.float32)
            acc = jnp.zeros((C, S), jnp.float32)
            ki = 0
            for kh in range(3):
                for kw in range(3):
                    off = (kh - 1) * width + (kw - 1)         # static int
                    sh = (-off) % S
                    if sh == 0:
                        k_sh, v_sh = k, v
                    else:
                        k_sh = pltpu.roll(k, sh, axis=1)      # XLU lane rotate
                        v_sh = pltpu.roll(v, sh, axis=1)
                    valid = valid_ref[ki:ki + 1, :]           # (1, S) 0/1
                    # zero-padded neighbours: k = 0 + rel, v = 0 (as in torch)
                    k_sh = k_sh * valid + rel[:, ki:ki + 1]
                    v_sh = v_sh * valid
                    s = q * k_sh
                    m_new = jnp.maximum(m, s)
                    alpha = jnp.exp(m - m_new)
                    p = jnp.exp(s - m_new)
                    den = den * alpha + p
                    acc = acc * alpha + p * v_sh
                    m = m_new
                    ki += 1
            o_ref[b] = acc * pl.reciprocal(den, approx=True)   # EUP reciprocal
    return kernel


def fused_attention(xy_bcs, params, H, W):
    B, Cin_tot, S = xy_bcs.shape
    w_in = params["w_in"].astype(jnp.float32)       # (2*Cmid, Cx+Cy)
    w_qkv = params["w_qkv"].astype(jnp.float32)     # (3*Cmid, 2*Cmid)
    rel9 = params["rel9"].astype(jnp.float32)       # (Cmid, 9)
    Cmid = rel9.shape[0]
    valid9 = jnp.asarray(_neighbor_valid_mask(H, W))  # (9, S) compile-time const

    return pl.pallas_call(
        _make_fused_attention_kernel(W),
        out_shape=jax.ShapeDtypeStruct((B, Cmid, S), jnp.float32),
        grid=(1,),
        in_specs=[
            pl.BlockSpec((B, Cin_tot, S), lambda i: (0, 0, 0)),
            pl.BlockSpec((2 * Cmid, Cin_tot), lambda i: (0, 0)),
            pl.BlockSpec((3 * Cmid, 2 * Cmid), lambda i: (0, 0)),
            pl.BlockSpec((Cmid, 9), lambda i: (0, 0)),
            pl.BlockSpec((9, S), lambda i: (0, 0)),
        ],
        out_specs=pl.BlockSpec((B, Cmid, S), lambda i: (0, 0, 0)),
    )(xy_bcs.astype(jnp.float32), w_in, w_qkv, rel9, valid9)


# ----------------------------------------------------------------------------
# Kernel B : FAM complex spectral channel mix  'bixy,ioxy->boxy'
# ----------------------------------------------------------------------------
def _fam_mix_kernel(xr_ref, xi_ref, wr_ref, wi_ref, or_ref, oi_ref):
    B, Cin, S = xr_ref.shape
    Cout = wr_ref.shape[1]
    for b in range(B):
        xr = xr_ref[b]                                  # (Cin, S)
        xi = xi_ref[b]
        accr = jnp.zeros((Cout, S), jnp.float32)
        acci = jnp.zeros((Cout, S), jnp.float32)
        for i in range(Cin):                            # weights vary per (x,y):
            xri = xr[i:i + 1, :]                        # not a matmul -> VPU FMA
            xii = xi[i:i + 1, :]
            wri = wr_ref[i]                             # (Cout, S)
            wii = wi_ref[i]
            accr = accr + xri * wri - xii * wii
            acci = acci + xri * wii + xii * wri
        or_ref[b] = accr
        oi_ref[b] = acci


def fam_spectral_mix(x_ft_bcs, w1, H, W, cuton):
    B, Cin, S = x_ft_bcs.shape
    Cout = w1.shape[1]
    w1s = w1.reshape(Cin, Cout, S)

    even = (Cout % 2 == 0) and (H % 2 == 0) and (W % 2 == 0)
    if even:
        # fold fftshift / band-stop / ifftshift into the weights (static mask)
        w1s = w1s * jnp.asarray(_bandstop_mask(H, W, float(cuton)))

    xr = jnp.real(x_ft_bcs).astype(jnp.float32)
    xi = jnp.imag(x_ft_bcs).astype(jnp.float32)
    wr = jnp.real(w1s).astype(jnp.float32)
    wi = jnp.imag(w1s).astype(jnp.float32)

    out_r, out_i = pl.pallas_call(
        _fam_mix_kernel,
        out_shape=(jax.ShapeDtypeStruct((B, Cout, S), jnp.float32),
                   jax.ShapeDtypeStruct((B, Cout, S), jnp.float32)),
        grid=(1,),
        in_specs=[pl.BlockSpec((B, Cin, S), lambda i: (0, 0, 0)),
                  pl.BlockSpec((B, Cin, S), lambda i: (0, 0, 0)),
                  pl.BlockSpec((Cin, Cout, S), lambda i: (0, 0, 0)),
                  pl.BlockSpec((Cin, Cout, S), lambda i: (0, 0, 0))],
        out_specs=(pl.BlockSpec((B, Cout, S), lambda i: (0, 0, 0)),
                   pl.BlockSpec((B, Cout, S), lambda i: (0, 0, 0))),
    )(xr, xi, wr, wi)
    return jax.lax.complex(out_r, out_i), even


# ----------------------------------------------------------------------------
# Kernel C : FAM epilogue  rate1*ifft + rate2*(w0 conv + bias) -> BN -> ReLU
# ----------------------------------------------------------------------------
def _fam_epilogue_kernel(fam_ref, x_ref, w0_ref, b0_ref, rate_ref, o_ref):
    B, Cmid, S = x_ref.shape
    Cout = w0_ref.shape[0]
    w0 = w0_ref[...]                                    # (Cout, Cmid)
    b0 = b0_ref[...]                                    # (Cout, 1)
    r1 = rate_ref[0]                                    # SMEM scalars
    r2 = rate_ref[1]
    n_tok = float(B * S)

    outs = []
    tot = jnp.zeros((Cout, 1), jnp.float32)
    for b in range(B):
        conv = jnp.dot(w0, x_ref[b], preferred_element_type=jnp.float32)
        out = r1 * fam_ref[b] + r2 * (conv + b0)
        outs.append(out)
        tot = tot + jnp.sum(out, axis=1, keepdims=True)
    mean = tot / n_tok

    sq = jnp.zeros((Cout, 1), jnp.float32)
    for b in range(B):
        d = outs[b] - mean
        sq = sq + jnp.sum(d * d, axis=1, keepdims=True)
    inv = jax.lax.rsqrt(sq / n_tok + 1e-5)

    for b in range(B):
        o_ref[b] = jnp.maximum((outs[b] - mean) * inv, 0.0)


def fam_epilogue(fam_bcs, x_att_bcs, params):
    B, Cout, S = fam_bcs.shape
    Cmid = x_att_bcs.shape[1]
    w0 = params["w0_w"].astype(jnp.float32)               # (Cout, Cmid)
    b0 = params["w0_b"].astype(jnp.float32)[:, None]      # (Cout, 1)
    rates = jnp.stack([params["rate1"], params["rate2"]]).astype(jnp.float32)
    return pl.pallas_call(
        _fam_epilogue_kernel,
        out_shape=jax.ShapeDtypeStruct((B, Cout, S), jnp.float32),
        grid=(1,),
        in_specs=[pl.BlockSpec((B, Cout, S), lambda i: (0, 0, 0)),
                  pl.BlockSpec((B, Cmid, S), lambda i: (0, 0, 0)),
                  pl.BlockSpec((Cout, Cmid), lambda i: (0, 0)),
                  pl.BlockSpec((Cout, 1), lambda i: (0, 0)),
                  pl.BlockSpec(memory_space=pltpu.MemorySpace.SMEM)],
        out_specs=pl.BlockSpec((B, Cout, S), lambda i: (0, 0, 0)),
    )(fam_bcs.astype(jnp.float32), x_att_bcs.astype(jnp.float32), w0, b0, rates)


# ----------------------------------------------------------------------------
# Forward pass (FFT glue in plain JAX, hot paths in 3 Pallas kernels)
# ----------------------------------------------------------------------------
def crossatf_forward(params, x, y, cuton=0.1):
    """CROSSATF.forward(x, y) -> (conv2(att(x, y)), att(x, y))."""
    B, Cx, H, W = x.shape
    _, Cy, Hy, Wy = y.shape
    S = H * W

    # nearest upsample hoisted in front of the fused kernel (exact, see helper)
    y_up = _nearest_upsample(y.astype(jnp.float32), H, W)
    xy = jnp.concatenate([x.astype(jnp.float32), y_up], axis=1).reshape(B, Cx + Cy, S)

    # kernel A: conv1_x / conv1 + BN + ReLU + AttentionConv, fully fused
    att = fused_attention(xy, params, H, W)               # (B, Cmid, S)
    Cmid = att.shape[1]
    att_img = att.reshape(B, Cmid, H, W)

    # ---- conv2 = FAM_Module + BN + ReLU ----
    # TODO(synk): FFTs have no Pallas equivalent; fftn/ifftn stay in XLA.
    # torch.fft.fftn with no dim arg -> FFT over ALL dims (incl. batch & chan).
    x_ft = jnp.fft.fftn(att_img, norm="ortho")

    # kernel B: complex spectral channel mix (cuton band-stop folded into w1)
    out_ft, folded = fam_spectral_mix(x_ft.reshape(B, Cmid, S),
                                      params["fam_w1"], H, W, cuton)
    Cout = out_ft.shape[1]
    out_ft = out_ft.reshape(B, Cout, H, W)

    if not folded:
        # odd-dim fallback: explicit batch_fftshift2d / band-stop / ifftshift
        shifted = out_ft
        for dim in (1, 2, 3):
            n = shifted.shape[dim] // 2 + (shifted.shape[dim] % 2)
            shifted = jnp.roll(shifted, -n, axis=dim)
        cy, cx = H // 2, W // 2
        rh, rw = int(cuton * cy), int(cuton * cx)
        if rh > 0 and rw > 0:
            shifted = shifted.at[:, :, cy - rh:cy + rh, cx - rw:cx + rw].set(0)
        for dim in (3, 2, 1):
            n = shifted.shape[dim] // 2
            shifted = jnp.roll(shifted, -n, axis=dim)
        out_ft = shifted

    # torch.fft.ifftn(s=(H, W)) -> inverse FFT over the last two dims only.
    ifft_real = jnp.real(jnp.fft.ifftn(out_ft, s=(H, W), axes=(-2, -1),
                                       norm="ortho"))      # (B, Cout, H, W)

    # kernel C: rate1*ifft + rate2*(w0 conv + bias) + BN + ReLU
    out = fam_epilogue(ifft_real.reshape(B, Cout, S), att, params)
    return out.reshape(B, Cout, H, W), att_img


# ----------------------------------------------------------------------------
# Deterministic parameter construction (synthetic, not a checkpoint load).
# Block-stacked / packed forms are built here so the per-call wrapper does no
# host-side assembly work.
# ----------------------------------------------------------------------------
def make_params(key, in_channel, in_channel_x, mid_channel, out_channel, out_shape):
    ks = jax.random.split(key, 10)
    f32 = jnp.float32
    conv1_w = 0.1 * jax.random.normal(ks[0], (mid_channel, in_channel), f32)
    conv1x_w = 0.1 * jax.random.normal(ks[1], (mid_channel, in_channel_x), f32)
    q_w = 0.1 * jax.random.normal(ks[2], (mid_channel, mid_channel), f32)
    k_w = 0.1 * jax.random.normal(ks[3], (mid_channel, mid_channel), f32)
    v_w = 0.1 * jax.random.normal(ks[4], (mid_channel, mid_channel), f32)
    rel_h = jax.random.normal(ks[5], (mid_channel // 2, 3), f32)
    rel_w = jax.random.normal(ks[6], (mid_channel // 2, 3), f32)

    # block-stacked input-conv weight: rows 0..C-1 act on x channels, C..2C-1 on y
    w_in = jnp.zeros((2 * mid_channel, in_channel_x + in_channel), f32)
    w_in = w_in.at[:mid_channel, :in_channel_x].set(conv1x_w)
    w_in = w_in.at[mid_channel:, in_channel_x:].set(conv1_w)

    # block-stacked q/k/v projection: q reads the y half of [x1; y1], k/v read x1
    w_qkv = jnp.zeros((3 * mid_channel, 2 * mid_channel), f32)
    w_qkv = w_qkv.at[:mid_channel, mid_channel:].set(q_w)
    w_qkv = w_qkv.at[mid_channel:2 * mid_channel, :mid_channel].set(k_w)
    w_qkv = w_qkv.at[2 * mid_channel:, :mid_channel].set(v_w)

    # rel bias packed as (C, 9): first C/2 channels follow rel_h[kh], second
    # C/2 follow rel_w[kw]  (matches the PyTorch unfold/cat order, ki = kh*3+kw)
    rel9 = jnp.stack(
        [jnp.concatenate([rel_h[:, kh], rel_w[:, kw]], axis=0)
         for kh in range(3) for kw in range(3)], axis=1)   # (C, 9)

    scale = 1.0 / (mid_channel * out_channel)
    params = {
        "w_in": w_in,
        "w_qkv": w_qkv,
        "rel9": rel9,
        "fam_w1": (scale * jax.random.uniform(
                       ks[7], (mid_channel, out_channel, out_shape, out_shape), f32)
                   + 1j * scale * jax.random.uniform(
                       ks[8], (mid_channel, out_channel, out_shape, out_shape), f32)
                   ).astype(jnp.complex64),
        "w0_w": 0.1 * jax.random.normal(ks[9], (out_channel, mid_channel), f32),
        "w0_b": jnp.zeros((out_channel,), f32),
        "rate1": jnp.float32(0.5),   # init_rate_half
        "rate2": jnp.float32(0.5),
    }
    return params


if __name__ == "__main__":
    # CROSSATF(in_channel=4, in_channel_x=4, mid_channel=8, out_channel=8,
    #          fuse=True, out_shape=16)
    B, IN_CH, IN_CH_X, MID, OUT, HW = 2, 4, 4, 8, 8, 16

    root = jax.random.PRNGKey(0)
    kx, ky, kp = jax.random.split(root, 3)
    x = jax.random.normal(kx, (B, IN_CH_X, HW, HW), jnp.float32)
    y = jax.random.normal(ky, (B, IN_CH, HW // 2, HW // 2), jnp.float32)
    params = make_params(kp, IN_CH, IN_CH_X, MID, OUT, HW)

    fwd = jax.jit(crossatf_forward)
    out, att = fwd(params, x, y)
    jax.block_until_ready((out, att))
    assert out.shape == (B, OUT, HW, HW) and att.shape == (B, MID, HW, HW)
    assert bool(jnp.all(jnp.isfinite(out))) and bool(jnp.all(jnp.isfinite(att)))
    print("KERNEL_OK")
</pallas_src>

<mosaic_0001>
module attributes {stable_mosaic.version = 11 : i64} {
  func.func @kernel(%arg0: i32, %arg1: memref<2x8x256xf32, #tpu.memory_space<vmem>>, %arg2: memref<16x8xf32, #tpu.memory_space<vmem>>, %arg3: memref<24x16xf32, #tpu.memory_space<vmem>>, %arg4: memref<8x9xf32, #tpu.memory_space<vmem>>, %arg5: memref<9x256xf32, #tpu.memory_space<vmem>>, %arg6: memref<2x8x256xf32, #tpu.memory_space<vmem>>) attributes {dimension_semantics = [#tpu.dimension_semantics<arbitrary>], iteration_bounds = array<i64: 1>, scalar_prefetch = 0 : i64, scratch_operands = 0 : i64, tpu.core_type = #tpu.core_type<tc>, window_params = [{pipeline_mode = #tpu.pipeline_mode<synchronous>, transform_indices = @transform_0, window_bounds = array<i64: 2, 8, 256>}, {pipeline_mode = #tpu.pipeline_mode<synchronous>, transform_indices = @transform_1, window_bounds = array<i64: 16, 8>}, {pipeline_mode = #tpu.pipeline_mode<synchronous>, transform_indices = @transform_2, window_bounds = array<i64: 24, 16>}, {pipeline_mode = #tpu.pipeline_mode<synchronous>, transform_indices = @transform_3, window_bounds = array<i64: 8, 9>}, {pipeline_mode = #tpu.pipeline_mode<synchronous>, transform_indices = @transform_4, window_bounds = array<i64: 9, 256>}, {pipeline_mode = #tpu.pipeline_mode<synchronous>, transform_indices = @transform_5, window_bounds = array<i64: 2, 8, 256>}]} {
    %c0 = arith.constant 0 : index
    %c0_0 = arith.constant 0 : index
    %0 = vector.load %arg2[%c0, %c0_0] : memref<16x8xf32, #tpu.memory_space<vmem>>, vector<16x8xf32>
    %cst = arith.constant 0.000000e+00 : f32
    %1 = vector.broadcast %cst : f32 to vector<16x1xf32>
    %c0_1 = arith.constant 0 : index
    %c0_2 = arith.constant 0 : index
    %c0_3 = arith.constant 0 : index
    %2 = vector.load %arg1[%c0_1, %c0_2, %c0_3] : memref<2x8x256xf32, #tpu.memory_space<vmem>>, vector<1x8x256xf32>
    %3 = vector.shape_cast %2 : vector<1x8x256xf32> to vector<8x256xf32>
    %cst_4 = arith.constant dense<0.000000e+00> : vector<16x256xf32>
    %4 = tpu.matmul %0, %3, %cst_4 {dimension_numbers = #tpu.dot_dimension_numbers<[1], [0], [0], [1], [0, 0, 1, 1], [], []>} : vector<16x8xf32>, vector<8x256xf32>, vector<16x256xf32> -> vector<16x256xf32>
    %cst_5 = arith.constant dense<0.000000e+00> : vector<16xf32>
    %5 = vector.multi_reduction <add>, %4, %cst_5 [1] : vector<16x256xf32> to vector<16xf32>
    %6 = vector.shape_cast %5 : vector<16xf32> to vector<16x1xf32>
    %7 = arith.addf %1, %6 : vector<16x1xf32>
    %c1 = arith.constant 1 : index
    %c0_6 = arith.constant 0 : index
    %c0_7 = arith.constant 0 : index
    %8 = vector.load %arg1[%c1, %c0_6, %c0_7] : memref<2x8x256xf32, #tpu.memory_space<vmem>>, vector<1x8x256xf32>
    %9 = vector.shape_cast %8 : vector<1x8x256xf32> to vector<8x256xf32>
    %cst_8 = arith.constant dense<0.000000e+00> : vector<16x256xf32>
    %10 = tpu.matmul %0, %9, %cst_8 {dimension_numbers = #tpu.dot_dimension_numbers<[1], [0], [0], [1], [0, 0, 1, 1], [], []>} : vector<16x8xf32>, vector<8x256xf32>, vector<16x256xf32> -> vector<16x256xf32>
    %cst_9 = arith.constant dense<0.000000e+00> : vector<16xf32>
    %11 = vector.multi_reduction <add>, %10, %cst_9 [1] : vector<16x256xf32> to vector<16xf32>
    %12 = vector.shape_cast %11 : vector<16xf32> to vector<16x1xf32>
    %13 = arith.addf %7, %12 : vector<16x1xf32>
    %cst_10 = arith.constant 5.120000e+02 : f32
    %14 = vector.broadcast %cst_10 : f32 to vector<16x1xf32>
    %15 = arith.divf %13, %14 : vector<16x1xf32>
    %cst_11 = arith.constant 0.000000e+00 : f32
    %16 = vector.broadcast %cst_11 : f32 to vector<16x1xf32>
    %17 = vector.broadcast %15 : vector<16x1xf32> to vector<16x256xf32>
    %18 = arith.subf %4, %17 : vector<16x256xf32>
    %19 = arith.mulf %18, %18 : vector<16x256xf32>
    %cst_12 = arith.constant dense<0.000000e+00> : vector<16xf32>
    %20 = vector.multi_reduction <add>, %19, %cst_12 [1] : vector<16x256xf32> to vector<16xf32>
    %21 = vector.shape_cast %20 : vector<16xf32> to vector<16x1xf32>
    %22 = arith.addf %16, %21 : vector<16x1xf32>
    %23 = vector.broadcast %15 : vector<16x1xf32> to vector<16x256xf32>
    %24 = arith.subf %10, %23 : vector<16x256xf32>
    %25 = arith.mulf %24, %24 : vector<16x256xf32>
    %cst_13 = arith.constant dense<0.000000e+00> : vector<16xf32>
    %26 = vector.multi_reduction <add>, %25, %cst_13 [1] : vector<16x256xf32> to vector<16xf32>
    %27 = vector.shape_cast %26 : vector<16xf32> to vector<16x1xf32>
    %28 = arith.addf %22, %27 : vector<16x1xf32>
    %cst_14 = arith.constant 5.120000e+02 : f32
    %29 = vector.broadcast %cst_14 : f32 to vector<16x1xf32>
    %30 = arith.divf %28, %29 : vector<16x1xf32>
    %cst_15 = arith.constant 9.99999974E-6 : f32
    %31 = vector.broadcast %cst_15 : f32 to vector<16x1xf32>
    %32 = arith.addf %30, %31 : vector<16x1xf32>
    %33 = math.rsqrt %32 : vector<16x1xf32>
    %c0_16 = arith.constant 0 : index
    %c0_17 = arith.constant 0 : index
    %34 = vector.load %arg3[%c0_16, %c0_17] : memref<24x16xf32, #tpu.memory_space<vmem>>, vector<24x16xf32>
    %c0_18 = arith.constant 0 : index
    %c0_19 = arith.constant 0 : index
    %35 = vector.load %arg4[%c0_18, %c0_19] : memref<8x9xf32, #tpu.memory_space<vmem>>, vector<8x9xf32>
    %36 = vector.broadcast %15 : vector<16x1xf32> to vector<16x256xf32>
    %37 = arith.subf %4, %36 : vector<16x256xf32>
    %38 = vector.broadcast %33 : vector<16x1xf32> to vector<16x256xf32>
    %39 = arith.mulf %37, %38 : vector<16x256xf32>
    %cst_20 = arith.constant 0.000000e+00 : f32
    %40 = vector.broadcast %cst_20 : f32 to vector<16x256xf32>
    %41 = arith.maximumf %39, %40 : vector<16x256xf32>
    %cst_21 = arith.constant dense<0.000000e+00> : vector<24x256xf32>
    %42 = tpu.matmul %34, %41, %cst_21 {dimension_numbers = #tpu.dot_dimension_numbers<[1], [0], [0], [1], [0, 0, 1, 1], [], []>} : vector<24x16xf32>, vector<16x256xf32>, vector<24x256xf32> -> vector<24x256xf32>
    %43 = vector.extract_strided_slice %42 {offsets = [0, 0], sizes = [8, 256], strides = [1, 1]} : vector<24x256xf32> to vector<8x256xf32>
    %44 = vector.extract_strided_slice %42 {offsets = [8, 0], sizes = [8, 256], strides = [1, 1]} : vector<24x256xf32> to vector<8x256xf32>
    %45 = vector.extract_strided_slice %42 {offsets = [16, 0], sizes = [8, 256], strides = [1, 1]} : vector<24x256xf32> to vector<8x256xf32>
    %cst_22 = arith.constant 0xFF800000 : f32
    %46 = vector.broadcast %cst_22 : f32 to vector<8x256xf32>
    %cst_23 = arith.constant 0.000000e+00 : f32
    %47 = vector.broadcast %cst_23 : f32 to vector<8x256xf32>
    %cst_24 = arith.constant 0.000000e+00 : f32
    %48 = vector.broadcast %cst_24 : f32 to vector<8x256xf32>
    %c17_i32 = arith.constant 17 : i32
    %49 = tpu.dynamic_rotate %44 by %c17_i32 dim 1 : vector<8x256xf32>, i32 -> vector<8x256xf32>
    %c17_i32_25 = arith.constant 17 : i32
    %50 = tpu.dynamic_rotate %45 by %c17_i32_25 dim 1 : vector<8x256xf32>, i32 -> vector<8x256xf32>
    %c0_26 = arith.constant 0 : index
    %c0_27 = arith.constant 0 : index
    %51 = vector.load %arg5[%c0_26, %c0_27] : memref<9x256xf32, #tpu.memory_space<vmem>>, vector<1x256xf32>
    %52 = vector.broadcast %51 : vector<1x256xf32> to vector<8x256xf32>
    %53 = arith.mulf %49, %52 : vector<8x256xf32>
    %54 = vector.extract_strided_slice %35 {offsets = [0, 0], sizes = [8, 1], strides = [1, 1]} : vector<8x9xf32> to vector<8x1xf32>
    %55 = vector.broadcast %54 : vector<8x1xf32> to vector<8x256xf32>
    %56 = arith.addf %53, %55 : vector<8x256xf32>
    %57 = vector.broadcast %51 : vector<1x256xf32> to vector<8x256xf32>
    %58 = arith.mulf %50, %57 : vector<8x256xf32>
    %59 = arith.mulf %43, %56 : vector<8x256xf32>
    %60 = arith.maximumf %46, %59 : vector<8x256xf32>
    %61 = arith.subf %46, %60 : vector<8x256xf32>
    %62 = math.exp %61 : vector<8x256xf32>
    %63 = arith.subf %59, %60 : vector<8x256xf32>
    %64 = math.exp %63 : vector<8x256xf32>
    %65 = arith.mulf %47, %62 : vector<8x256xf32>
    %66 = arith.addf %65, %64 : vector<8x256xf32>
    %67 = arith.mulf %48, %62 : vector<8x256xf32>
    %68 = arith.mulf %64, %58 : vector<8x256xf32>
    %69 = arith.addf %67, %68 : vector<8x256xf32>
    %c16_i32 = arith.constant 16 : i32
    %70 = tpu.dynamic_rotate %44 by %c16_i32 dim 1 : vector<8x256xf32>, i32 -> vector<8x256xf32>
    %c16_i32_28 = arith.constant 16 : i32
    %71 = tpu.dynamic_rotate %45 by %c16_i32_28 dim 1 : vector<8x256xf32>, i32 -> vector<8x256xf32>
    %c1_29 = arith.constant 1 : index
    %c0_30 = arith.constant 0 : index
    %72 = vector.load %arg5[%c1_29, %c0_30] : memref<9x256xf32, #tpu.memory_space<vmem>>, vector<1x256xf32>
    %73 = vector.broadcast %72 : vector<1x256xf32> to vector<8x256xf32>
    %74 = arith.mulf %70, %73 : vector<8x256xf32>
    %75 = vector.extract_strided_slice %35 {offsets = [0, 1], sizes = [8, 1], strides = [1, 1]} : vector<8x9xf32> to vector<8x1xf32>
    %76 = vector.broadcast %75 : vector<8x1xf32> to vector<8x256xf32>
    %77 = arith.addf %74, %76 : vector<8x256xf32>
    %78 = vector.broadcast %72 : vector<1x256xf32> to vector<8x256xf32>
    %79 = arith.mulf %71, %78 : vector<8x256xf32>
    %80 = arith.mulf %43, %77 : vector<8x256xf32>
    %81 = arith.maximumf %60, %80 : vector<8x256xf32>
    %82 = arith.subf %60, %81 : vector<8x256xf32>
    %83 = math.exp %82 : vector<8x256xf32>
    %84 = arith.subf %80, %81 : vector<8x256xf32>
    %85 = math.exp %84 : vector<8x256xf32>
    %86 = arith.mulf %66, %83 : vector<8x256xf32>
    %87 = arith.addf %86, %85 : vector<8x256xf32>
    %88 = arith.mulf %69, %83 : vector<8x256xf32>
    %89 = arith.mulf %85, %79 : vector<8x256xf32>
    %90 = arith.addf %88, %89 : vector<8x256xf32>
    %c15_i32 = arith.constant 15 : i32
    %91 = tpu.dynamic_rotate %44 by %c15_i32 dim 1 : vector<8x256xf32>, i32 -> vector<8x256xf32>
    %c15_i32_31 = arith.constant 15 : i32
    %92 = tpu.dynamic_rotate %45 by %c15_i32_31 dim 1 : vector<8x256xf32>, i32 -> vector<8x256xf32>
    %c2 = arith.constant 2 : index
    %c0_32 = arith.constant 0 : index
    %93 = vector.load %arg5[%c2, %c0_32] : memref<9x256xf32, #tpu.memory_space<vmem>>, vector<1x256xf32>
    %94 = vector.broadcast %93 : vector<1x256xf32> to vector<8x256xf32>
    %95 = arith.mulf %91, %94 : vector<8x256xf32>
    %96 = vector.extract_strided_slice %35 {offsets = [0, 2], sizes = [8, 1], strides = [1, 1]} : vector<8x9xf32> to vector<8x1xf32>
    %97 = vector.broadcast %96 : vector<8x1xf32> to vector<8x256xf32>
    %98 = arith.addf %95, %97 : vector<8x256xf32>
    %99 = vector.broadcast %93 : vector<1x256xf32> to vector<8x256xf32>
    %100 = arith.mulf %92, %99 : vector<8x256xf32>
    %101 = arith.mulf %43, %98 : vector<8x256xf32>
    %102 = arith.maximumf %81, %101 : vector<8x256xf32>
    %103 = arith.subf %81, %102 : vector<8x256xf32>
    %104 = math.exp %103 : vector<8x256xf32>
    %105 = arith.subf %101, %102 : vector<8x256xf32>
    %106 = math.exp %105 : vector<8x256xf32>
    %107 = arith.mulf %87, %104 : vector<8x256xf32>
    %108 = arith.addf %107, %106 : vector<8x256xf32>
    %109 = arith.mulf %90, %104 : vector<8x256xf32>
    %110 = arith.mulf %106, %100 : vector<8x256xf32>
    %111 = arith.addf %109, %110 : vector<8x256xf32>
    %c1_i32 = arith.constant 1 : i32
    %112 = tpu.dynamic_rotate %44 by %c1_i32 dim 1 : vector<8x256xf32>, i32 -> vector<8x256xf32>
    %c1_i32_33 = arith.constant 1 : i32
    %113 = tpu.dynamic_rotate %45 by %c1_i32_33 dim 1 : vector<8x256xf32>, i32 -> vector<8x256xf32>
    %c3 = arith.constant 3 : index
    %c0_34 = arith.constant 0 : index
    %114 = vector.load %arg5[%c3, %c0_34] : memref<9x256xf32, #tpu.memory_space<vmem>>, vector<1x256xf32>
    %115 = vector.broadcast %114 : vector<1x256xf32> to vector<8x256xf32>
    %116 = arith.mulf %112, %115 : vector<8x256xf32>
    %117 = vector.extract_strided_slice %35 {offsets = [0, 3], sizes = [8, 1], strides = [1, 1]} : vector<8x9xf32> to vector<8x1xf32>
    %118 = vector.broadcast %117 : vector<8x1xf32> to vector<8x256xf32>
    %119 = arith.addf %116, %118 : vector<8x256xf32>
    %120 = vector.broadcast %114 : vector<1x256xf32> to vector<8x256xf32>
    %121 = arith.mulf %113, %120 : vector<8x256xf32>
    %122 = arith.mulf %43, %119 : vector<8x256xf32>
    %123 = arith.maximumf %102, %122 : vector<8x256xf32>
    %124 = arith.subf %102, %123 : vector<8x256xf32>
    %125 = math.exp %124 : vector<8x256xf32>
    %126 = arith.subf %122, %123 : vector<8x256xf32>
    %127 = math.exp %126 : vector<8x256xf32>
    %128 = arith.mulf %108, %125 : vector<8x256xf32>
    %129 = arith.addf %128, %127 : vector<8x256xf32>
    %130 = arith.mulf %111, %125 : vector<8x256xf32>
    %131 = arith.mulf %127, %121 : vector<8x256xf32>
    %132 = arith.addf %130, %131 : vector<8x256xf32>
    %c4 = arith.constant 4 : index
    %c0_35 = arith.constant 0 : index
    %133 = vector.load %arg5[%c4, %c0_35] : memref<9x256xf32, #tpu.memory_space<vmem>>, vector<1x256xf32>
    %134 = vector.broadcast %133 : vector<1x256xf32> to vector<8x256xf32>
    %135 = arith.mulf %44, %134 : vector<8x256xf32>
    %136 = vector.extract_strided_slice %35 {offsets = [0, 4], sizes = [8, 1], strides = [1, 1]} : vector<8x9xf32> to vector<8x1xf32>
    %137 = vector.broadcast %136 : vector<8x1xf32> to vector<8x256xf32>
    %138 = arith.addf %135, %137 : vector<8x256xf32>
    %139 = vector.broadcast %133 : vector<1x256xf32> to vector<8x256xf32>
    %140 = arith.mulf %45, %139 : vector<8x256xf32>
    %141 = arith.mulf %43, %138 : vector<8x256xf32>
    %142 = arith.maximumf %123, %141 : vector<8x256xf32>
    %143 = arith.subf %123, %142 : vector<8x256xf32>
    %144 = math.exp %143 : vector<8x256xf32>
    %145 = arith.subf %141, %142 : vector<8x256xf32>
    %146 = math.exp %145 : vector<8x256xf32>
    %147 = arith.mulf %129, %144 : vector<8x256xf32>
    %148 = arith.addf %147, %146 : vector<8x256xf32>
    %149 = arith.mulf %132, %144 : vector<8x256xf32>
    %150 = arith.mulf %146, %140 : vector<8x256xf32>
    %151 = arith.addf %149, %150 : vector<8x256xf32>
    %c255_i32 = arith.constant 255 : i32
    %152 = tpu.dynamic_rotate %44 by %c255_i32 dim 1 : vector<8x256xf32>, i32 -> vector<8x256xf32>
    %c255_i32_36 = arith.constant 255 : i32
    %153 = tpu.dynamic_rotate %45 by %c255_i32_36 dim 1 : vector<8x256xf32>, i32 -> vector<8x256xf32>
    %c5 = arith.constant 5 : index
    %c0_37 = arith.constant 0 : index
    %154 = vector.load %arg5[%c5, %c0_37] : memref<9x256xf32, #tpu.memory_space<vmem>>, vector<1x256xf32>
    %155 = vector.broadcast %154 : vector<1x256xf32> to vector<8x256xf32>
    %156 = arith.mulf %152, %155 : vector<8x256xf32>
    %157 = vector.extract_strided_slice %35 {offsets = [0, 5], sizes = [8, 1], strides = [1, 1]} : vector<8x9xf32> to vector<8x1xf32>
    %158 = vector.broadcast %157 : vector<8x1xf32> to vector<8x256xf32>
    %159 = arith.addf %156, %158 : vector<8x256xf32>
    %160 = vector.broadcast %154 : vector<1x256xf32> to vector<8x256xf32>
    %161 = arith.mulf %153, %160 : vector<8x256xf32>
    %162 = arith.mulf %43, %159 : vector<8x256xf32>
    %163 = arith.maximumf %142, %162 : vector<8x256xf32>
    %164 = arith.subf %142, %163 : vector<8x256xf32>
    %165 = math.exp %164 : vector<8x256xf32>
    %166 = arith.subf %162, %163 : vector<8x256xf32>
    %167 = math.exp %166 : vector<8x256xf32>
    %168 = arith.mulf %148, %165 : vector<8x256xf32>
    %169 = arith.addf %168, %167 : vector<8x256xf32>
    %170 = arith.mulf %151, %165 : vector<8x256xf32>
    %171 = arith.mulf %167, %161 : vector<8x256xf32>
    %172 = arith.addf %170, %171 : vector<8x256xf32>
    %c241_i32 = arith.constant 241 : i32
    %173 = tpu.dynamic_rotate %44 by %c241_i32 dim 1 : vector<8x256xf32>, i32 -> vector<8x256xf32>
    %c241_i32_38 = arith.constant 241 : i32
    %174 = tpu.dynamic_rotate %45 by %c241_i32_38 dim 1 : vector<8x256xf32>, i32 -> vector<8x256xf32>
    %c6 = arith.constant 6 : index
    %c0_39 = arith.constant 0 : index
    %175 = vector.load %arg5[%c6, %c0_39] : memref<9x256xf32, #tpu.memory_space<vmem>>, vector<1x256xf32>
    %176 = vector.broadcast %175 : vector<1x256xf32> to vector<8x256xf32>
    %177 = arith.mulf %173, %176 : vector<8x256xf32>
    %178 = vector.extract_strided_slice %35 {offsets = [0, 6], sizes = [8, 1], strides = [1, 1]} : vector<8x9xf32> to vector<8x1xf32>
    %179 = vector.broadcast %178 : vector<8x1xf32> to vector<8x256xf32>
    %180 = arith.addf %177, %179 : vector<8x256xf32>
    %181 = vector.broadcast %175 : vector<1x256xf32> to vector<8x256xf32>
    %182 = arith.mulf %174, %181 : vector<8x256xf32>
    %183 = arith.mulf %43, %180 : vector<8x256xf32>
    %184 = arith.maximumf %163, %183 : vector<8x256xf32>
    %185 = arith.subf %163, %184 : vector<8x256xf32>
    %186 = math.exp %185 : vector<8x256xf32>
    %187 = arith.subf %183, %184 : vector<8x256xf32>
    %188 = math.exp %187 : vector<8x256xf32>
    %189 = arith.mulf %169, %186 : vector<8x256xf32>
    %190 = arith.addf %189, %188 : vector<8x256xf32>
    %191 = arith.mulf %172, %186 : vector<8x256xf32>
    %192 = arith.mulf %188, %182 : vector<8x256xf32>
    %193 = arith.addf %191, %192 : vector<8x256xf32>
    %c240_i32 = arith.constant 240 : i32
    %194 = tpu.dynamic_rotate %44 by %c240_i32 dim 1 : vector<8x256xf32>, i32 -> vector<8x256xf32>
    %c240_i32_40 = arith.constant 240 : i32
    %195 = tpu.dynamic_rotate %45 by %c240_i32_40 dim 1 : vector<8x256xf32>, i32 -> vector<8x256xf32>
    %c7 = arith.constant 7 : index
    %c0_41 = arith.constant 0 : index
    %196 = vector.load %arg5[%c7, %c0_41] : memref<9x256xf32, #tpu.memory_space<vmem>>, vector<1x256xf32>
    %197 = vector.broadcast %196 : vector<1x256xf32> to vector<8x256xf32>
    %198 = arith.mulf %194, %197 : vector<8x256xf32>
    %199 = vector.extract_strided_slice %35 {offsets = [0, 7], sizes = [8, 1], strides = [1, 1]} : vector<8x9xf32> to vector<8x1xf32>
    %200 = vector.broadcast %199 : vector<8x1xf32> to vector<8x256xf32>
    %201 = arith.addf %198, %200 : vector<8x256xf32>
    %202 = vector.broadcast %196 : vector<1x256xf32> to vector<8x256xf32>
    %203 = arith.mulf %195, %202 : vector<8x256xf32>
    %204 = arith.mulf %43, %201 : vector<8x256xf32>
    %205 = arith.maximumf %184, %204 : vector<8x256xf32>
    %206 = arith.subf %184, %205 : vector<8x256xf32>
    %207 = math.exp %206 : vector<8x256xf32>
    %208 = arith.subf %204, %205 : vector<8x256xf32>
    %209 = math.exp %208 : vector<8x256xf32>
    %210 = arith.mulf %190, %207 : vector<8x256xf32>
    %211 = arith.addf %210, %209 : vector<8x256xf32>
    %212 = arith.mulf %193, %207 : vector<8x256xf32>
    %213 = arith.mulf %209, %203 : vector<8x256xf32>
    %214 = arith.addf %212, %213 : vector<8x256xf32>
    %c239_i32 = arith.constant 239 : i32
    %215 = tpu.dynamic_rotate %44 by %c239_i32 dim 1 : vector<8x256xf32>, i32 -> vector<8x256xf32>
    %c239_i32_42 = arith.constant 239 : i32
    %216 = tpu.dynamic_rotate %45 by %c239_i32_42 dim 1 : vector<8x256xf32>, i32 -> vector<8x256xf32>
    %c8 = arith.constant 8 : index
    %c0_43 = arith.constant 0 : index
    %217 = vector.load %arg5[%c8, %c0_43] : memref<9x256xf32, #tpu.memory_space<vmem>>, vector<1x256xf32>
    %218 = vector.broadcast %217 : vector<1x256xf32> to vector<8x256xf32>
    %219 = arith.mulf %215, %218 : vector<8x256xf32>
    %220 = vector.extract_strided_slice %35 {offsets = [0, 8], sizes = [8, 1], strides = [1, 1]} : vector<8x9xf32> to vector<8x1xf32>
    %221 = vector.broadcast %220 : vector<8x1xf32> to vector<8x256xf32>
    %222 = arith.addf %219, %221 : vector<8x256xf32>
    %223 = vector.broadcast %217 : vector<1x256xf32> to vector<8x256xf32>
    %224 = arith.mulf %216, %223 : vector<8x256xf32>
    %225 = arith.mulf %43, %222 : vector<8x256xf32>
    %226 = arith.maximumf %205, %225 : vector<8x256xf32>
    %227 = arith.subf %205, %226 : vector<8x256xf32>
    %228 = math.exp %227 : vector<8x256xf32>
    %229 = arith.subf %225, %226 : vector<8x256xf32>
    %230 = math.exp %229 : vector<8x256xf32>
    %231 = arith.mulf %211, %228 : vector<8x256xf32>
    %232 = arith.addf %231, %230 : vector<8x256xf32>
    %233 = arith.mulf %214, %228 : vector<8x256xf32>
    %234 = arith.mulf %230, %224 : vector<8x256xf32>
    %235 = arith.addf %233, %234 : vector<8x256xf32>
    %236 = tpu.reciprocal %232 {approx = true} : vector<8x256xf32> -> vector<8x256xf32>
    %237 = arith.mulf %235, %236 : vector<8x256xf32>
    %c0_44 = arith.constant 0 : index
    %c0_45 = arith.constant 0 : index
    %c0_46 = arith.constant 0 : index
    %238 = vector.load %arg6[%c0_44, %c0_45, %c0_46] : memref<2x8x256xf32, #tpu.memory_space<vmem>>, vector<1x8x256xf32>
    %239 = vector.shape_cast %238 : vector<1x8x256xf32> to vector<8x256xf32>
    %240 = vector.shape_cast %237 : vector<8x256xf32> to vector<1x8x256xf32>
    tpu.vector_store %arg6[%c0_44, %c0_45, %c0_46], %240 {strides = array<i32>} : memref<2x8x256xf32, #tpu.memory_space<vmem>>, vector<1x8x256xf32>,
    %241 = vector.broadcast %15 : vector<16x1xf32> to vector<16x256xf32>
    %242 = arith.subf %10, %241 : vector<16x256xf32>
    %243 = vector.broadcast %33 : vector<16x1xf32> to vector<16x256xf32>
    %244 = arith.mulf %242, %243 : vector<16x256xf32>
    %cst_47 = arith.constant 0.000000e+00 : f32
    %245 = vector.broadcast %cst_47 : f32 to vector<16x256xf32>
    %246 = arith.maximumf %244, %245 : vector<16x256xf32>
    %cst_48 = arith.constant dense<0.000000e+00> : vector<24x256xf32>
    %247 = tpu.matmul %34, %246, %cst_48 {dimension_numbers = #tpu.dot_dimension_numbers<[1], [0], [0], [1], [0, 0, 1, 1], [], []>} : vector<24x16xf32>, vector<16x256xf32>, vector<24x256xf32> -> vector<24x256xf32>
    %248 = vector.extract_strided_slice %247 {offsets = [0, 0], sizes = [8, 256], strides = [1, 1]} : vector<24x256xf32> to vector<8x256xf32>
    %249 = vector.extract_strided_slice %247 {offsets = [8, 0], sizes = [8, 256], strides = [1, 1]} : vector<24x256xf32> to vector<8x256xf32>
    %250 = vector.extract_strided_slice %247 {offsets = [16, 0], sizes = [8, 256], strides = [1, 1]} : vector<24x256xf32> to vector<8x256xf32>
    %cst_49 = arith.constant 0xFF800000 : f32
    %251 = vector.broadcast %cst_49 : f32 to vector<8x256xf32>
    %cst_50 = arith.constant 0.000000e+00 : f32
    %252 = vector.broadcast %cst_50 : f32 to vector<8x256xf32>
    %cst_51 = arith.constant 0.000000e+00 : f32
    %253 = vector.broadcast %cst_51 : f32 to vector<8x256xf32>
    %c17_i32_52 = arith.constant 17 : i32
    %254 = tpu.dynamic_rotate %249 by %c17_i32_52 dim 1 : vector<8x256xf32>, i32 -> vector<8x256xf32>
    %c17_i32_53 = arith.constant 17 : i32
    %255 = tpu.dynamic_rotate %250 by %c17_i32_53 dim 1 : vector<8x256xf32>, i32 -> vector<8x256xf32>
    %c0_54 = arith.constant 0 : index
    %c0_55 = arith.constant 0 : index
    %256 = vector.load %arg5[%c0_54, %c0_55] : memref<9x256xf32, #tpu.memory_space<vmem>>, vector<1x256xf32>
    %257 = vector.broadcast %256 : vector<1x256xf32> to vector<8x256xf32>
    %258 = arith.mulf %254, %257 : vector<8x256xf32>
    %259 = vector.extract_strided_slice %35 {offsets = [0, 0], sizes = [8, 1], strides = [1, 1]} : vector<8x9xf32> to vector<8x1xf32>
    %260 = vector.broadcast %259 : vector<8x1xf32> to vector<8x256xf32>
    %261 = arith.addf %258, %260 : vector<8x256xf32>
    %262 = vector.broadcast %256 : vector<1x256xf32> to vector<8x256xf32>
    %263 = arith.mulf %255, %262 : vector<8x256xf32>
    %264 = arith.mulf %248, %261 : vector<8x256xf32>
    %265 = arith.maximumf %251, %264 : vector<8x256xf32>
    %266 = arith.subf %251, %265 : vector<8x256xf32>
    %267 = math.exp %266 : vector<8x256xf32>
    %268 = arith.subf %264, %265 : vector<8x256xf32>
    %269 = math.exp %268 : vector<8x256xf32>
    %270 = arith.mulf %252, %267 : vector<8x256xf32>
    %271 = arith.addf %270, %269 : vector<8x256xf32>
    %272 = arith.mulf %253, %267 : vector<8x256xf32>
    %273 = arith.mulf %269, %263 : vector<8x256xf32>
    %274 = arith.addf %272, %273 : vector<8x256xf32>
    %c16_i32_56 = arith.constant 16 : i32
    %275 = tpu.dynamic_rotate %249 by %c16_i32_56 dim 1 : vector<8x256xf32>, i32 -> vector<8x256xf32>
    %c16_i32_57 = arith.constant 16 : i32
    %276 = tpu.dynamic_rotate %250 by %c16_i32_57 dim 1 : vector<8x256xf32>, i32 -> vector<8x256xf32>
    %c1_58 = arith.constant 1 : index
    %c0_59 = arith.constant 0 : index
    %277 = vector.load %arg5[%c1_58, %c0_59] : memref<9x256xf32, #tpu.memory_space<vmem>>, vector<1x256xf32>
    %278 = vector.broadcast %277 : vector<1x256xf32> to vector<8x256xf32>
    %279 = arith.mulf %275, %278 : vector<8x256xf32>
    %280 = vector.extract_strided_slice %35 {offsets = [0, 1], sizes = [8, 1], strides = [1, 1]} : vector<8x9xf32> to vector<8x1xf32>
    %281 = vector.broadcast %280 : vector<8x1xf32> to vector<8x256xf32>
    %282 = arith.addf %279, %281 : vector<8x256xf32>
    %283 = vector.broadcast %277 : vector<1x256xf32> to vector<8x256xf32>
    %284 = arith.mulf %276, %283 : vector<8x256xf32>
    %285 = arith.mulf %248, %282 : vector<8x256xf32>
    %286 = arith.maximumf %265, %285 : vector<8x256xf32>
    %287 = arith.subf %265, %286 : vector<8x256xf32>
    %288 = math.exp %287 : vector<8x256xf32>
    %289 = arith.subf %285, %286 : vector<8x256xf32>
    %290 = math.exp %289 : vector<8x256xf32>
    %291 = arith.mulf %271, %288 : vector<8x256xf32>
    %292 = arith.addf %291, %290 : vector<8x256xf32>
    %293 = arith.mulf %274, %288 : vector<8x256xf32>
    %294 = arith.mulf %290, %284 : vector<8x256xf32>
    %295 = arith.addf %293, %294 : vector<8x256xf32>
    %c15_i32_60 = arith.constant 15 : i32
    %296 = tpu.dynamic_rotate %249 by %c15_i32_60 dim 1 : vector<8x256xf32>, i32 -> vector<8x256xf32>
    %c15_i32_61 = arith.constant 15 : i32
    %297 = tpu.dynamic_rotate %250 by %c15_i32_61 dim 1 : vector<8x256xf32>, i32 -> vector<8x256xf32>
    %c2_62 = arith.constant 2 : index
    %c0_63 = arith.constant 0 : index
    %298 = vector.load %arg5[%c2_62, %c0_63] : memref<9x256xf32, #tpu.memory_space<vmem>>, vector<1x256xf32>
    %299 = vector.broadcast %298 : vector<1x256xf32> to vector<8x256xf32>
    %300 = arith.mulf %296, %299 : vector<8x256xf32>
    %301 = vector.extract_strided_slice %35 {offsets = [0, 2], sizes = [8, 1], strides = [1, 1]} : vector<8x9xf32> to vector<8x1xf32>
    %302 = vector.broadcast %301 : vector<8x1xf32> to vector<8x256xf32>
    %303 = arith.addf %300, %302 : vector<8x256xf32>
    %304 = vector.broadcast %298 : vector<1x256xf32> to vector<8x256xf32>
    %305 = arith.mulf %297, %304 : vector<8x256xf32>
    %306 = arith.mulf %248, %303 : vector<8x256xf32>
    %307 = arith.maximumf %286, %306 : vector<8x256xf32>
    %308 = arith.subf %286, %307 : vector<8x256xf32>
    %309 = math.exp %308 : vector<8x256xf32>
    %310 = arith.subf %306, %307 : vector<8x256xf32>
    %311 = math.exp %310 : vector<8x256xf32>
    %312 = arith.mulf %292, %309 : vector<8x256xf32>
    %313 = arith.addf %312, %311 : vector<8x256xf32>
    %314 = arith.mulf %295, %309 : vector<8x256xf32>
    %315 = arith.mulf %311, %305 : vector<8x256xf32>
    %316 = arith.addf %314, %315 : vector<8x256xf32>
    %c1_i32_64 = arith.constant 1 : i32
    %317 = tpu.dynamic_rotate %249 by %c1_i32_64 dim 1 : vector<8x256xf32>, i32 -> vector<8x256xf32>
    %c1_i32_65 = arith.constant 1 : i32
    %318 = tpu.dynamic_rotate %250 by %c1_i32_65 dim 1 : vector<8x256xf32>, i32 -> vector<8x256xf32>
    %c3_66 = arith.constant 3 : index
    %c0_67 = arith.constant 0 : index
    %319 = vector.load %arg5[%c3_66, %c0_67] : memref<9x256xf32, #tpu.memory_space<vmem>>, vector<1x256xf32>
    %320 = vector.broadcast %319 : vector<1x256xf32> to vector<8x256xf32>
    %321 = arith.mulf %317, %320 : vector<8x256xf32>
    %322 = vector.extract_strided_slice %35 {offsets = [0, 3], sizes = [8, 1], strides = [1, 1]} : vector<8x9xf32> to vector<8x1xf32>
    %323 = vector.broadcast %322 : vector<8x1xf32> to vector<8x256xf32>
    %324 = arith.addf %321, %323 : vector<8x256xf32>
    %325 = vector.broadcast %319 : vector<1x256xf32> to vector<8x256xf32>
    %326 = arith.mulf %318, %325 : vector<8x256xf32>
    %327 = arith.mulf %248, %324 : vector<8x256xf32>
    %328 = arith.maximumf %307, %327 : vector<8x256xf32>
    %329 = arith.subf %307, %328 : vector<8x256xf32>
    %330 = math.exp %329 : vector<8x256xf32>
    %331 = arith.subf %327, %328 : vector<8x256xf32>
    %332 = math.exp %331 : vector<8x256xf32>
    %333 = arith.mulf %313, %330 : vector<8x256xf32>
    %334 = arith.addf %333, %332 : vector<8x256xf32>
    %335 = arith.mulf %316, %330 : vector<8x256xf32>
    %336 = arith.mulf %332, %326 : vector<8x256xf32>
    %337 = arith.addf %335, %336 : vector<8x256xf32>
    %c4_68 = arith.constant 4 : index
    %c0_69 = arith.constant 0 : index
    %338 = vector.load %arg5[%c4_68, %c0_69] : memref<9x256xf32, #tpu.memory_space<vmem>>, vector<1x256xf32>
    %339 = vector.broadcast %338 : vector<1x256xf32> to vector<8x256xf32>
    %340 = arith.mulf %249, %339 : vector<8x256xf32>
    %341 = vector.extract_strided_slice %35 {offsets = [0, 4], sizes = [8, 1], strides = [1, 1]} : vector<8x9xf32> to vector<8x1xf32>
    %342 = vector.broadcast %341 : vector<8x1xf32> to vector<8x256xf32>
    %343 = arith.addf %340, %342 : vector<8x256xf32>
    %344 = vector.broadcast %338 : vector<1x256xf32> to vector<8x256xf32>
    %345 = arith.mulf %250, %344 : vector<8x256xf32>
    %346 = arith.mulf %248, %343 : vector<8x256xf32>
    %347 = arith.maximumf %328, %346 : vector<8x256xf32>
    %348 = arith.subf %328, %347 : vector<8x256xf32>
    %349 = math.exp %348 : vector<8x256xf32>
    %350 = arith.subf %346, %347 : vector<8x256xf32>
    %351 = math.exp %350 : vector<8x256xf32>
    %352 = arith.mulf %334, %349 : vector<8x256xf32>
    %353 = arith.addf %352, %351 : vector<8x256xf32>
    %354 = arith.mulf %337, %349 : vector<8x256xf32>
    %355 = arith.mulf %351, %345 : vector<8x256xf32>
    %356 = arith.addf %354, %355 : vector<8x256xf32>
    %c255_i32_70 = arith.constant 255 : i32
    %357 = tpu.dynamic_rotate %249 by %c255_i32_70 dim 1 : vector<8x256xf32>, i32 -> vector<8x256xf32>
    %c255_i32_71 = arith.constant 255 : i32
    %358 = tpu.dynamic_rotate %250 by %c255_i32_71 dim 1 : vector<8x256xf32>, i32 -> vector<8x256xf32>
    %c5_72 = arith.constant 5 : index
    %c0_73 = arith.constant 0 : index
    %359 = vector.load %arg5[%c5_72, %c0_73] : memref<9x256xf32, #tpu.memory_space<vmem>>, vector<1x256xf32>
    %360 = vector.broadcast %359 : vector<1x256xf32> to vector<8x256xf32>
    %361 = arith.mulf %357, %360 : vector<8x256xf32>
    %362 = vector.extract_strided_slice %35 {offsets = [0, 5], sizes = [8, 1], strides = [1, 1]} : vector<8x9xf32> to vector<8x1xf32>
    %363 = vector.broadcast %362 : vector<8x1xf32> to vector<8x256xf32>
    %364 = arith.addf %361, %363 : vector<8x256xf32>
    %365 = vector.broadcast %359 : vector<1x256xf32> to vector<8x256xf32>
    %366 = arith.mulf %358, %365 : vector<8x256xf32>
    %367 = arith.mulf %248, %364 : vector<8x256xf32>
    %368 = arith.maximumf %347, %367 : vector<8x256xf32>
    %369 = arith.subf %347, %368 : vector<8x256xf32>
    %370 = math.exp %369 : vector<8x256xf32>
    %371 = arith.subf %367, %368 : vector<8x256xf32>
    %372 = math.exp %371 : vector<8x256xf32>
    %373 = arith.mulf %353, %370 : vector<8x256xf32>
    %374 = arith.addf %373, %372 : vector<8x256xf32>
    %375 = arith.mulf %356, %370 : vector<8x256xf32>
    %376 = arith.mulf %372, %366 : vector<8x256xf32>
    %377 = arith.addf %375, %376 : vector<8x256xf32>
    %c241_i32_74 = arith.constant 241 : i32
    %378 = tpu.dynamic_rotate %249 by %c241_i32_74 dim 1 : vector<8x256xf32>, i32 -> vector<8x256xf32>
    %c241_i32_75 = arith.constant 241 : i32
    %379 = tpu.dynamic_rotate %250 by %c241_i32_75 dim 1 : vector<8x256xf32>, i32 -> vector<8x256xf32>
    %c6_76 = arith.constant 6 : index
    %c0_77 = arith.constant 0 : index
    %380 = vector.load %arg5[%c6_76, %c0_77] : memref<9x256xf32, #tpu.memory_space<vmem>>, vector<1x256xf32>
    %381 = vector.broadcast %380 : vector<1x256xf32> to vector<8x256xf32>
    %382 = arith.mulf %378, %381 : vector<8x256xf32>
    %383 = vector.extract_strided_slice %35 {offsets = [0, 6], sizes = [8, 1], strides = [1, 1]} : vector<8x9xf32> to vector<8x1xf32>
    %384 = vector.broadcast %383 : vector<8x1xf32> to vector<8x256xf32>
    %385 = arith.addf %382, %384 : vector<8x256xf32>
    %386 = vector.broadcast %380 : vector<1x256xf32> to vector<8x256xf32>
    %387 = arith.mulf %379, %386 : vector<8x256xf32>
    %388 = arith.mulf %248, %385 : vector<8x256xf32>
    %389 = arith.maximumf %368, %388 : vector<8x256xf32>
    %390 = arith.subf %368, %389 : vector<8x256xf32>
    %391 = math.exp %390 : vector<8x256xf32>
    %392 = arith.subf %388, %389 : vector<8x256xf32>
    %393 = math.exp %392 : vector<8x256xf32>
    %394 = arith.mulf %374, %391 : vector<8x256xf32>
    %395 = arith.addf %394, %393 : vector<8x256xf32>
    %396 = arith.mulf %377, %391 : vector<8x256xf32>
    %397 = arith.mulf %393, %387 : vector<8x256xf32>
    %398 = arith.addf %396, %397 : vector<8x256xf32>
    %c240_i32_78 = arith.constant 240 : i32
    %399 = tpu.dynamic_rotate %249 by %c240_i32_78 dim 1 : vector<8x256xf32>, i32 -> vector<8x256xf32>
    %c240_i32_79 = arith.constant 240 : i32
    %400 = tpu.dynamic_rotate %250 by %c240_i32_79 dim 1 : vector<8x256xf32>, i32 -> vector<8x256xf32>
    %c7_80 = arith.constant 7 : index
    %c0_81 = arith.constant 0 : index
    %401 = vector.load %arg5[%c7_80, %c0_81] : memref<9x256xf32, #tpu.memory_space<vmem>>, vector<1x256xf32>
    %402 = vector.broadcast %401 : vector<1x256xf32> to vector<8x256xf32>
    %403 = arith.mulf %399, %402 : vector<8x256xf32>
    %404 = vector.extract_strided_slice %35 {offsets = [0, 7], sizes = [8, 1], strides = [1, 1]} : vector<8x9xf32> to vector<8x1xf32>
    %405 = vector.broadcast %404 : vector<8x1xf32> to vector<8x256xf32>
    %406 = arith.addf %403, %405 : vector<8x256xf32>
    %407 = vector.broadcast %401 : vector<1x256xf32> to vector<8x256xf32>
    %408 = arith.mulf %400, %407 : vector<8x256xf32>
    %409 = arith.mulf %248, %406 : vector<8x256xf32>
    %410 = arith.maximumf %389, %409 : vector<8x256xf32>
    %411 = arith.subf %389, %410 : vector<8x256xf32>
    %412 = math.exp %411 : vector<8x256xf32>
    %413 = arith.subf %409, %410 : vector<8x256xf32>
    %414 = math.exp %413 : vector<8x256xf32>
    %415 = arith.mulf %395, %412 : vector<8x256xf32>
    %416 = arith.addf %415, %414 : vector<8x256xf32>
    %417 = arith.mulf %398, %412 : vector<8x256xf32>
    %418 = arith.mulf %414, %408 : vector<8x256xf32>
    %419 = arith.addf %417, %418 : vector<8x256xf32>
    %c239_i32_82 = arith.constant 239 : i32
    %420 = tpu.dynamic_rotate %249 by %c239_i32_82 dim 1 : vector<8x256xf32>, i32 -> vector<8x256xf32>
    %c239_i32_83 = arith.constant 239 : i32
    %421 = tpu.dynamic_rotate %250 by %c239_i32_83 dim 1 : vector<8x256xf32>, i32 -> vector<8x256xf32>
    %c8_84 = arith.constant 8 : index
    %c0_85 = arith.constant 0 : index
    %422 = vector.load %arg5[%c8_84, %c0_85] : memref<9x256xf32, #tpu.memory_space<vmem>>, vector<1x256xf32>
    %423 = vector.broadcast %422 : vector<1x256xf32> to vector<8x256xf32>
    %424 = arith.mulf %420, %423 : vector<8x256xf32>
    %425 = vector.extract_strided_slice %35 {offsets = [0, 8], sizes = [8, 1], strides = [1, 1]} : vector<8x9xf32> to vector<8x1xf32>
    %426 = vector.broadcast %425 : vector<8x1xf32> to vector<8x256xf32>
    %427 = arith.addf %424, %426 : vector<8x256xf32>
    %428 = vector.broadcast %422 : vector<1x256xf32> to vector<8x256xf32>
    %429 = arith.mulf %421, %428 : vector<8x256xf32>
    %430 = arith.mulf %248, %427 : vector<8x256xf32>
    %431 = arith.maximumf %410, %430 : vector<8x256xf32>
    %432 = arith.subf %410, %431 : vector<8x256xf32>
    %433 = math.exp %432 : vector<8x256xf32>
    %434 = arith.subf %430, %431 : vector<8x256xf32>
    %435 = math.exp %434 : vector<8x256xf32>
    %436 = arith.mulf %416, %433 : vector<8x256xf32>
    %437 = arith.addf %436, %435 : vector<8x256xf32>
    %438 = arith.mulf %419, %433 : vector<8x256xf32>
    %439 = arith.mulf %435, %429 : vector<8x256xf32>
    %440 = arith.addf %438, %439 : vector<8x256xf32>
    %441 = tpu.reciprocal %437 {approx = true} : vector<8x256xf32> -> vector<8x256xf32>
    %442 = arith.mulf %440, %441 : vector<8x256xf32>
    %c1_86 = arith.constant 1 : index
    %c0_87 = arith.constant 0 : index
    %c0_88 = arith.constant 0 : index
    %443 = vector.load %arg6[%c1_86, %c0_87, %c0_88] : memref<2x8x256xf32, #tpu.memory_space<vmem>>, vector<1x8x256xf32>
    %444 = vector.shape_cast %443 : vector<1x8x256xf32> to vector<8x256xf32>
    %445 = vector.shape_cast %442 : vector<8x256xf32> to vector<1x8x256xf32>
    tpu.vector_store %arg6[%c1_86, %c0_87, %c0_88], %445 {strides = array<i32>} : memref<2x8x256xf32, #tpu.memory_space<vmem>>, vector<1x8x256xf32>,
    return
  }
  func.func @transform_0(%arg0: i32) -> (i32, i32, i32) {
    %c0_i32 = arith.constant 0 : i32
    %c0_i32_0 = arith.constant 0 : i32
    %c0_i32_1 = arith.constant 0 : i32
    %c0_i32_2 = arith.constant 0 : i32
    return %c0_i32, %c0_i32_0, %c0_i32_1 : i32, i32, i32
  }
  func.func @transform_1(%arg0: i32) -> (i32, i32) {
    %c0_i32 = arith.constant 0 : i32
    %c0_i32_0 = arith.constant 0 : i32
    %c0_i32_1 = arith.constant 0 : i32
    return %c0_i32, %c0_i32_0 : i32, i32
  }
  func.func @transform_2(%arg0: i32) -> (i32, i32) {
    %c0_i32 = arith.constant 0 : i32
    %c0_i32_0 = arith.constant 0 : i32
    %c0_i32_1 = arith.constant 0 : i32
    return %c0_i32, %c0_i32_0 : i32, i32
  }
  func.func @transform_3(%arg0: i32) -> (i32, i32) {
    %c0_i32 = arith.constant 0 : i32
    %c0_i32_0 = arith.constant 0 : i32
    %c0_i32_1 = arith.constant 0 : i32
    return %c0_i32, %c0_i32_0 : i32, i32
  }
  func.func @transform_4(%arg0: i32) -> (i32, i32) {
    %c0_i32 = arith.constant 0 : i32
    %c0_i32_0 = arith.constant 0 : i32
    %c0_i32_1 = arith.constant 0 : i32
    return %c0_i32, %c0_i32_0 : i32, i32
  }
  func.func @transform_5(%arg0: i32) -> (i32, i32, i32) {
    %c0_i32 = arith.constant 0 : i32
    %c0_i32_0 = arith.constant 0 : i32
    %c0_i32_1 = arith.constant 0 : i32
    %c0_i32_2 = arith.constant 0 : i32
    return %c0_i32, %c0_i32_0, %c0_i32_1 : i32, i32, i32
  }
}

module attributes {stable_mosaic.version = 11 : i64} {
  func.func @_fam_mix_kernel(%arg0: i32, %arg1: memref<2x8x256xf32, #tpu.memory_space<vmem>>, %arg2: memref<2x8x256xf32, #tpu.memory_space<vmem>>, %arg3: memref<8x8x256xf32, #tpu.memory_space<vmem>>, %arg4: memref<8x8x256xf32, #tpu.memory_space<vmem>>, %arg5: memref<2x8x256xf32, #tpu.memory_space<vmem>>, %arg6: memref<2x8x256xf32, #tpu.memory_space<vmem>>) attributes {dimension_semantics = [#tpu.dimension_semantics<arbitrary>], iteration_bounds = array<i64: 1>, scalar_prefetch = 0 : i64, scratch_operands = 0 : i64, tpu.core_type = #tpu.core_type<tc>, window_params = [{pipeline_mode = #tpu.pipeline_mode<synchronous>, transform_indices = @transform_0, window_bounds = array<i64: 2, 8, 256>}, {pipeline_mode = #tpu.pipeline_mode<synchronous>, transform_indices = @transform_1, window_bounds = array<i64: 2, 8, 256>}, {pipeline_mode = #tpu.pipeline_mode<synchronous>, transform_indices = @transform_2, window_bounds = array<i64: 8, 8, 256>}, {pipeline_mode = #tpu.pipeline_mode<synchronous>, transform_indices = @transform_3, window_bounds = array<i64: 8, 8, 256>}, {pipeline_mode = #tpu.pipeline_mode<synchronous>, transform_indices = @transform_4, window_bounds = array<i64: 2, 8, 256>}, {pipeline_mode = #tpu.pipeline_mode<synchronous>, transform_indices = @transform_5, window_bounds = array<i64: 2, 8, 256>}]} {
    %c0 = arith.constant 0 : index
    %c0_0 = arith.constant 0 : index
    %c0_1 = arith.constant 0 : index
    %0 = vector.load %arg1[%c0, %c0_0, %c0_1] : memref<2x8x256xf32, #tpu.memory_space<vmem>>, vector<1x8x256xf32>
    %1 = vector.shape_cast %0 : vector<1x8x256xf32> to vector<8x256xf32>
    %c0_2 = arith.constant 0 : index
    %c0_3 = arith.constant 0 : index
    %c0_4 = arith.constant 0 : index
    %2 = vector.load %arg2[%c0_2, %c0_3, %c0_4] : memref<2x8x256xf32, #tpu.memory_space<vmem>>, vector<1x8x256xf32>
    %3 = vector.shape_cast %2 : vector<1x8x256xf32> to vector<8x256xf32>
    %cst = arith.constant 0.000000e+00 : f32
    %4 = vector.broadcast %cst : f32 to vector<8x256xf32>
    %cst_5 = arith.constant 0.000000e+00 : f32
    %5 = vector.broadcast %cst_5 : f32 to vector<8x256xf32>
    %6 = vector.extract_strided_slice %1 {offsets = [0, 0], sizes = [1, 256], strides = [1, 1]} : vector<8x256xf32> to vector<1x256xf32>
    %7 = vector.extract_strided_slice %3 {offsets = [0, 0], sizes = [1, 256], strides = [1, 1]} : vector<8x256xf32> to vector<1x256xf32>
    %c0_6 = arith.constant 0 : index
    %c0_7 = arith.constant 0 : index
    %c0_8 = arith.constant 0 : index
    %8 = vector.load %arg3[%c0_6, %c0_7, %c0_8] : memref<8x8x256xf32, #tpu.memory_space<vmem>>, vector<1x8x256xf32>
    %9 = vector.shape_cast %8 : vector<1x8x256xf32> to vector<8x256xf32>
    %c0_9 = arith.constant 0 : index
    %c0_10 = arith.constant 0 : index
    %c0_11 = arith.constant 0 : index
    %10 = vector.load %arg4[%c0_9, %c0_10, %c0_11] : memref<8x8x256xf32, #tpu.memory_space<vmem>>, vector<1x8x256xf32>
    %11 = vector.shape_cast %10 : vector<1x8x256xf32> to vector<8x256xf32>
    %12 = vector.broadcast %6 : vector<1x256xf32> to vector<8x256xf32>
    %13 = arith.mulf %12, %9 : vector<8x256xf32>
    %14 = arith.addf %4, %13 : vector<8x256xf32>
    %15 = vector.broadcast %7 : vector<1x256xf32> to vector<8x256xf32>
    %16 = arith.mulf %15, %11 : vector<8x256xf32>
    %17 = arith.subf %14, %16 : vector<8x256xf32>
    %18 = vector.broadcast %6 : vector<1x256xf32> to vector<8x256xf32>
    %19 = arith.mulf %18, %11 : vector<8x256xf32>
    %20 = arith.addf %5, %19 : vector<8x256xf32>
    %21 = vector.broadcast %7 : vector<1x256xf32> to vector<8x256xf32>
    %22 = arith.mulf %21, %9 : vector<8x256xf32>
    %23 = arith.addf %20, %22 : vector<8x256xf32>
    %24 = vector.extract_strided_slice %1 {offsets = [1, 0], sizes = [1, 256], strides = [1, 1]} : vector<8x256xf32> to vector<1x256xf32>
    %25 = vector.extract_strided_slice %3 {offsets = [1, 0], sizes = [1, 256], strides = [1, 1]} : vector<8x256xf32> to vector<1x256xf32>
    %c1 = arith.constant 1 : index
    %c0_12 = arith.constant 0 : index
    %c0_13 = arith.constant 0 : index
    %26 = vector.load %arg3[%c1, %c0_12, %c0_13] : memref<8x8x256xf32, #tpu.memory_space<vmem>>, vector<1x8x256xf32>
    %27 = vector.shape_cast %26 : vector<1x8x256xf32> to vector<8x256xf32>
    %c1_14 = arith.constant 1 : index
    %c0_15 = arith.constant 0 : index
    %c0_16 = arith.constant 0 : index
    %28 = vector.load %arg4[%c1_14, %c0_15, %c0_16] : memref<8x8x256xf32, #tpu.memory_space<vmem>>, vector<1x8x256xf32>
    %29 = vector.shape_cast %28 : vector<1x8x256xf32> to vector<8x256xf32>
    %30 = vector.broadcast %24 : vector<1x256xf32> to vector<8x256xf32>
    %31 = arith.mulf %30, %27 : vector<8x256xf32>
    %32 = arith.addf %17, %31 : vector<8x256xf32>
    %33 = vector.broadcast %25 : vector<1x256xf32> to vector<8x256xf32>
    %34 = arith.mulf %33, %29 : vector<8x256xf32>
    %35 = arith.subf %32, %34 : vector<8x256xf32>
    %36 = vector.broadcast %24 : vector<1x256xf32> to vector<8x256xf32>
    %37 = arith.mulf %36, %29 : vector<8x256xf32>
    %38 = arith.addf %23, %37 : vector<8x256xf32>
    %39 = vector.broadcast %25 : vector<1x256xf32> to vector<8x256xf32>
    %40 = arith.mulf %39, %27 : vector<8x256xf32>
    %41 = arith.addf %38, %40 : vector<8x256xf32>
    %42 = vector.extract_strided_slice %1 {offsets = [2, 0], sizes = [1, 256], strides = [1, 1]} : vector<8x256xf32> to vector<1x256xf32>
    %43 = vector.extract_strided_slice %3 {offsets = [2, 0], sizes = [1, 256], strides = [1, 1]} : vector<8x256xf32> to vector<1x256xf32>
    %c2 = arith.constant 2 : index
    %c0_17 = arith.constant 0 : index
    %c0_18 = arith.constant 0 : index
    %44 = vector.load %arg3[%c2, %c0_17, %c0_18] : memref<8x8x256xf32, #tpu.memory_space<vmem>>, vector<1x8x256xf32>
    %45 = vector.shape_cast %44 : vector<1x8x256xf32> to vector<8x256xf32>
    %c2_19 = arith.constant 2 : index
    %c0_20 = arith.constant 0 : index
    %c0_21 = arith.constant 0 : index
    %46 = vector.load %arg4[%c2_19, %c0_20, %c0_21] : memref<8x8x256xf32, #tpu.memory_space<vmem>>, vector<1x8x256xf32>
    %47 = vector.shape_cast %46 : vector<1x8x256xf32> to vector<8x256xf32>
    %48 = vector.broadcast %42 : vector<1x256xf32> to vector<8x256xf32>
    %49 = arith.mulf %48, %45 : vector<8x256xf32>
    %50 = arith.addf %35, %49 : vector<8x256xf32>
    %51 = vector.broadcast %43 : vector<1x256xf32> to vector<8x256xf32>
    %52 = arith.mulf %51, %47 : vector<8x256xf32>
    %53 = arith.subf %50, %52 : vector<8x256xf32>
    %54 = vector.broadcast %42 : vector<1x256xf32> to vector<8x256xf32>
    %55 = arith.mulf %54, %47 : vector<8x256xf32>
    %56 = arith.addf %41, %55 : vector<8x256xf32>
    %57 = vector.broadcast %43 : vector<1x256xf32> to vector<8x256xf32>
    %58 = arith.mulf %57, %45 : vector<8x256xf32>
    %59 = arith.addf %56, %58 : vector<8x256xf32>
    %60 = vector.extract_strided_slice %1 {offsets = [3, 0], sizes = [1, 256], strides = [1, 1]} : vector<8x256xf32> to vector<1x256xf32>
    %61 = vector.extract_strided_slice %3 {offsets = [3, 0], sizes = [1, 256], strides = [1, 1]} : vector<8x256xf32> to vector<1x256xf32>
    %c3 = arith.constant 3 : index
    %c0_22 = arith.constant 0 : index
    %c0_23 = arith.constant 0 : index
    %62 = vector.load %arg3[%c3, %c0_22, %c0_23] : memref<8x8x256xf32, #tpu.memory_space<vmem>>, vector<1x8x256xf32>
    %63 = vector.shape_cast %62 : vector<1x8x256xf32> to vector<8x256xf32>
    %c3_24 = arith.constant 3 : index
    %c0_25 = arith.constant 0 : index
    %c0_26 = arith.constant 0 : index
    %64 = vector.load %arg4[%c3_24, %c0_25, %c0_26] : memref<8x8x256xf32, #tpu.memory_space<vmem>>, vector<1x8x256xf32>
    %65 = vector.shape_cast %64 : vector<1x8x256xf32> to vector<8x256xf32>
    %66 = vector.broadcast %60 : vector<1x256xf32> to vector<8x256xf32>
    %67 = arith.mulf %66, %63 : vector<8x256xf32>
    %68 = arith.addf %53, %67 : vector<8x256xf32>
    %69 = vector.broadcast %61 : vector<1x256xf32> to vector<8x256xf32>
    %70 = arith.mulf %69, %65 : vector<8x256xf32>
    %71 = arith.subf %68, %70 : vector<8x256xf32>
    %72 = vector.broadcast %60 : vector<1x256xf32> to vector<8x256xf32>
    %73 = arith.mulf %72, %65 : vector<8x256xf32>
    %74 = arith.addf %59, %73 : vector<8x256xf32>
    %75 = vector.broadcast %61 : vector<1x256xf32> to vector<8x256xf32>
    %76 = arith.mulf %75, %63 : vector<8x256xf32>
    %77 = arith.addf %74, %76 : vector<8x256xf32>
    %78 = vector.extract_strided_slice %1 {offsets = [4, 0], sizes = [1, 256], strides = [1, 1]} : vector<8x256xf32> to vector<1x256xf32>
    %79 = vector.extract_strided_slice %3 {offsets = [4, 0], sizes = [1, 256], strides = [1, 1]} : vector<8x256xf32> to vector<1x256xf32>
    %c4 = arith.constant 4 : index
    %c0_27 = arith.constant 0 : index
    %c0_28 = arith.constant 0 : index
    %80 = vector.load %arg3[%c4, %c0_27, %c0_28] : memref<8x8x256xf32, #tpu.memory_space<vmem>>, vector<1x8x256xf32>
    %81 = vector.shape_cast %80 : vector<1x8x256xf32> to vector<8x256xf32>
    %c4_29 = arith.constant 4 : index
    %c0_30 = arith.constant 0 : index
    %c0_31 = arith.constant 0 : index
    %82 = vector.load %arg4[%c4_29, %c0_30, %c0_31] : memref<8x8x256xf32, #tpu.memory_space<vmem>>, vector<1x8x256xf32>
    %83 = vector.shape_cast %82 : vector<1x8x256xf32> to vector<8x256xf32>
    %84 = vector.broadcast %78 : vector<1x256xf32> to vector<8x256xf32>
    %85 = arith.mulf %84, %81 : vector<8x256xf32>
    %86 = arith.addf %71, %85 : vector<8x256xf32>
    %87 = vector.broadcast %79 : vector<1x256xf32> to vector<8x256xf32>
    %88 = arith.mulf %87, %83 : vector<8x256xf32>
    %89 = arith.subf %86, %88 : vector<8x256xf32>
    %90 = vector.broadcast %78 : vector<1x256xf32> to vector<8x256xf32>
    %91 = arith.mulf %90, %83 : vector<8x256xf32>
    %92 = arith.addf %77, %91 : vector<8x256xf32>
    %93 = vector.broadcast %79 : vector<1x256xf32> to vector<8x256xf32>
    %94 = arith.mulf %93, %81 : vector<8x256xf32>
    %95 = arith.addf %92, %94 : vector<8x256xf32>
    %96 = vector.extract_strided_slice %1 {offsets = [5, 0], sizes = [1, 256], strides = [1, 1]} : vector<8x256xf32> to vector<1x256xf32>
    %97 = vector.extract_strided_slice %3 {offsets = [5, 0], sizes = [1, 256], strides = [1, 1]} : vector<8x256xf32> to vector<1x256xf32>
    %c5 = arith.constant 5 : index
    %c0_32 = arith.constant 0 : index
    %c0_33 = arith.constant 0 : index
    %98 = vector.load %arg3[%c5, %c0_32, %c0_33] : memref<8x8x256xf32, #tpu.memory_space<vmem>>, vector<1x8x256xf32>
    %99 = vector.shape_cast %98 : vector<1x8x256xf32> to vector<8x256xf32>
    %c5_34 = arith.constant 5 : index
    %c0_35 = arith.constant 0 : index
    %c0_36 = arith.constant 0 : index
    %100 = vector.load %arg4[%c5_34, %c0_35, %c0_36] : memref<8x8x256xf32, #tpu.memory_space<vmem>>, vector<1x8x256xf32>
    %101 = vector.shape_cast %100 : vector<1x8x256xf32> to vector<8x256xf32>
    %102 = vector.broadcast %96 : vector<1x256xf32> to vector<8x256xf32>
    %103 = arith.mulf %102, %99 : vector<8x256xf32>
    %104 = arith.addf %89, %103 : vector<8x256xf32>
    %105 = vector.broadcast %97 : vector<1x256xf32> to vector<8x256xf32>
    %106 = arith.mulf %105, %101 : vector<8x256xf32>
    %107 = arith.subf %104, %106 : vector<8x256xf32>
    %108 = vector.broadcast %96 : vector<1x256xf32> to vector<8x256xf32>
    %109 = arith.mulf %108, %101 : vector<8x256xf32>
    %110 = arith.addf %95, %109 : vector<8x256xf32>
    %111 = vector.broadcast %97 : vector<1x256xf32> to vector<8x256xf32>
    %112 = arith.mulf %111, %99 : vector<8x256xf32>
    %113 = arith.addf %110, %112 : vector<8x256xf32>
    %114 = vector.extract_strided_slice %1 {offsets = [6, 0], sizes = [1, 256], strides = [1, 1]} : vector<8x256xf32> to vector<1x256xf32>
    %115 = vector.extract_strided_slice %3 {offsets = [6, 0], sizes = [1, 256], strides = [1, 1]} : vector<8x256xf32> to vector<1x256xf32>
    %c6 = arith.constant 6 : index
    %c0_37 = arith.constant 0 : index
    %c0_38 = arith.constant 0 : index
    %116 = vector.load %arg3[%c6, %c0_37, %c0_38] : memref<8x8x256xf32, #tpu.memory_space<vmem>>, vector<1x8x256xf32>
    %117 = vector.shape_cast %116 : vector<1x8x256xf32> to vector<8x256xf32>
    %c6_39 = arith.constant 6 : index
    %c0_40 = arith.constant 0 : index
    %c0_41 = arith.constant 0 : index
    %118 = vector.load %arg4[%c6_39, %c0_40, %c0_41] : memref<8x8x256xf32, #tpu.memory_space<vmem>>, vector<1x8x256xf32>
    %119 = vector.shape_cast %118 : vector<1x8x256xf32> to vector<8x256xf32>
    %120 = vector.broadcast %114 : vector<1x256xf32> to vector<8x256xf32>
    %121 = arith.mulf %120, %117 : vector<8x256xf32>
    %122 = arith.addf %107, %121 : vector<8x256xf32>
    %123 = vector.broadcast %115 : vector<1x256xf32> to vector<8x256xf32>
    %124 = arith.mulf %123, %119 : vector<8x256xf32>
    %125 = arith.subf %122, %124 : vector<8x256xf32>
    %126 = vector.broadcast %114 : vector<1x256xf32> to vector<8x256xf32>
    %127 = arith.mulf %126, %119 : vector<8x256xf32>
    %128 = arith.addf %113, %127 : vector<8x256xf32>
    %129 = vector.broadcast %115 : vector<1x256xf32> to vector<8x256xf32>
    %130 = arith.mulf %129, %117 : vector<8x256xf32>
    %131 = arith.addf %128, %130 : vector<8x256xf32>
    %132 = vector.extract_strided_slice %1 {offsets = [7, 0], sizes = [1, 256], strides = [1, 1]} : vector<8x256xf32> to vector<1x256xf32>
    %133 = vector.extract_strided_slice %3 {offsets = [7, 0], sizes = [1, 256], strides = [1, 1]} : vector<8x256xf32> to vector<1x256xf32>
    %c7 = arith.constant 7 : index
    %c0_42 = arith.constant 0 : index
    %c0_43 = arith.constant 0 : index
    %134 = vector.load %arg3[%c7, %c0_42, %c0_43] : memref<8x8x256xf32, #tpu.memory_space<vmem>>, vector<1x8x256xf32>
    %135 = vector.shape_cast %134 : vector<1x8x256xf32> to vector<8x256xf32>
    %c7_44 = arith.constant 7 : index
    %c0_45 = arith.constant 0 : index
    %c0_46 = arith.constant 0 : index
    %136 = vector.load %arg4[%c7_44, %c0_45, %c0_46] : memref<8x8x256xf32, #tpu.memory_space<vmem>>, vector<1x8x256xf32>
    %137 = vector.shape_cast %136 : vector<1x8x256xf32> to vector<8x256xf32>
    %138 = vector.broadcast %132 : vector<1x256xf32> to vector<8x256xf32>
    %139 = arith.mulf %138, %135 : vector<8x256xf32>
    %140 = arith.addf %125, %139 : vector<8x256xf32>
    %141 = vector.broadcast %133 : vector<1x256xf32> to vector<8x256xf32>
    %142 = arith.mulf %141, %137 : vector<8x256xf32>
    %143 = arith.subf %140, %142 : vector<8x256xf32>
    %144 = vector.broadcast %132 : vector<1x256xf32> to vector<8x256xf32>
    %145 = arith.mulf %144, %137 : vector<8x256xf32>
    %146 = arith.addf %131, %145 : vector<8x256xf32>
    %147 = vector.broadcast %133 : vector<1x256xf32> to vector<8x256xf32>
    %148 = arith.mulf %147, %135 : vector<8x256xf32>
    %149 = arith.addf %146, %148 : vector<8x256xf32>
    %c0_47 = arith.constant 0 : index
    %c0_48 = arith.constant 0 : index
    %c0_49 = arith.constant 0 : index
    %150 = vector.load %arg5[%c0_47, %c0_48, %c0_49] : memref<2x8x256xf32, #tpu.memory_space<vmem>>, vector<1x8x256xf32>
    %151 = vector.shape_cast %150 : vector<1x8x256xf32> to vector<8x256xf32>
    %152 = vector.shape_cast %143 : vector<8x256xf32> to vector<1x8x256xf32>
    tpu.vector_store %arg5[%c0_47, %c0_48, %c0_49], %152 {strides = array<i32>} : memref<2x8x256xf32, #tpu.memory_space<vmem>>, vector<1x8x256xf32>,
    %c0_50 = arith.constant 0 : index
    %c0_51 = arith.constant 0 : index
    %c0_52 = arith.constant 0 : index
    %153 = vector.load %arg6[%c0_50, %c0_51, %c0_52] : memref<2x8x256xf32, #tpu.memory_space<vmem>>, vector<1x8x256xf32>
    %154 = vector.shape_cast %153 : vector<1x8x256xf32> to vector<8x256xf32>
    %155 = vector.shape_cast %149 : vector<8x256xf32> to vector<1x8x256xf32>
    tpu.vector_store %arg6[%c0_50, %c0_51, %c0_52], %155 {strides = array<i32>} : memref<2x8x256xf32, #tpu.memory_space<vmem>>, vector<1x8x256xf32>,
    %c1_53 = arith.constant 1 : index
    %c0_54 = arith.constant 0 : index
    %c0_55 = arith.constant 0 : index
    %156 = vector.load %arg1[%c1_53, %c0_54, %c0_55] : memref<2x8x256xf32, #tpu.memory_space<vmem>>, vector<1x8x256xf32>
    %157 = vector.shape_cast %156 : vector<1x8x256xf32> to vector<8x256xf32>
    %c1_56 = arith.constant 1 : index
    %c0_57 = arith.constant 0 : index
    %c0_58 = arith.constant 0 : index
    %158 = vector.load %arg2[%c1_56, %c0_57, %c0_58] : memref<2x8x256xf32, #tpu.memory_space<vmem>>, vector<1x8x256xf32>
    %159 = vector.shape_cast %158 : vector<1x8x256xf32> to vector<8x256xf32>
    %cst_59 = arith.constant 0.000000e+00 : f32
    %160 = vector.broadcast %cst_59 : f32 to vector<8x256xf32>
    %cst_60 = arith.constant 0.000000e+00 : f32
    %161 = vector.broadcast %cst_60 : f32 to vector<8x256xf32>
    %162 = vector.extract_strided_slice %157 {offsets = [0, 0], sizes = [1, 256], strides = [1, 1]} : vector<8x256xf32> to vector<1x256xf32>
    %163 = vector.extract_strided_slice %159 {offsets = [0, 0], sizes = [1, 256], strides = [1, 1]} : vector<8x256xf32> to vector<1x256xf32>
    %c0_61 = arith.constant 0 : index
    %c0_62 = arith.constant 0 : index
    %c0_63 = arith.constant 0 : index
    %164 = vector.load %arg3[%c0_61, %c0_62, %c0_63] : memref<8x8x256xf32, #tpu.memory_space<vmem>>, vector<1x8x256xf32>
    %165 = vector.shape_cast %164 : vector<1x8x256xf32> to vector<8x256xf32>
    %c0_64 = arith.constant 0 : index
    %c0_65 = arith.constant 0 : index
    %c0_66 = arith.constant 0 : index
    %166 = vector.load %arg4[%c0_64, %c0_65, %c0_66] : memref<8x8x256xf32, #tpu.memory_space<vmem>>, vector<1x8x256xf32>
    %167 = vector.shape_cast %166 : vector<1x8x256xf32> to vector<8x256xf32>
    %168 = vector.broadcast %162 : vector<1x256xf32> to vector<8x256xf32>
    %169 = arith.mulf %168, %165 : vector<8x256xf32>
    %170 = arith.addf %160, %169 : vector<8x256xf32>
    %171 = vector.broadcast %163 : vector<1x256xf32> to vector<8x256xf32>
    %172 = arith.mulf %171, %167 : vector<8x256xf32>
    %173 = arith.subf %170, %172 : vector<8x256xf32>
    %174 = vector.broadcast %162 : vector<1x256xf32> to vector<8x256xf32>
    %175 = arith.mulf %174, %167 : vector<8x256xf32>
    %176 = arith.addf %161, %175 : vector<8x256xf32>
    %177 = vector.broadcast %163 : vector<1x256xf32> to vector<8x256xf32>
    %178 = arith.mulf %177, %165 : vector<8x256xf32>
    %179 = arith.addf %176, %178 : vector<8x256xf32>
    %180 = vector.extract_strided_slice %157 {offsets = [1, 0], sizes = [1, 256], strides = [1, 1]} : vector<8x256xf32> to vector<1x256xf32>
    %181 = vector.extract_strided_slice %159 {offsets = [1, 0], sizes = [1, 256], strides = [1, 1]} : vector<8x256xf32> to vector<1x256xf32>
    %c1_67 = arith.constant 1 : index
    %c0_68 = arith.constant 0 : index
    %c0_69 = arith.constant 0 : index
    %182 = vector.load %arg3[%c1_67, %c0_68, %c0_69] : memref<8x8x256xf32, #tpu.memory_space<vmem>>, vector<1x8x256xf32>
    %183 = vector.shape_cast %182 : vector<1x8x256xf32> to vector<8x256xf32>
    %c1_70 = arith.constant 1 : index
    %c0_71 = arith.constant 0 : index
    %c0_72 = arith.constant 0 : index
    %184 = vector.load %arg4[%c1_70, %c0_71, %c0_72] : memref<8x8x256xf32, #tpu.memory_space<vmem>>, vector<1x8x256xf32>
    %185 = vector.shape_cast %184 : vector<1x8x256xf32> to vector<8x256xf32>
    %186 = vector.broadcast %180 : vector<1x256xf32> to vector<8x256xf32>
    %187 = arith.mulf %186, %183 : vector<8x256xf32>
    %188 = arith.addf %173, %187 : vector<8x256xf32>
    %189 = vector.broadcast %181 : vector<1x256xf32> to vector<8x256xf32>
    %190 = arith.mulf %189, %185 : vector<8x256xf32>
    %191 = arith.subf %188, %190 : vector<8x256xf32>
    %192 = vector.broadcast %180 : vector<1x256xf32> to vector<8x256xf32>
    %193 = arith.mulf %192, %185 : vector<8x256xf32>
    %194 = arith.addf %179, %193 : vector<8x256xf32>
    %195 = vector.broadcast %181 : vector<1x256xf32> to vector<8x256xf32>
    %196 = arith.mulf %195, %183 : vector<8x256xf32>
    %197 = arith.addf %194, %196 : vector<8x256xf32>
    %198 = vector.extract_strided_slice %157 {offsets = [2, 0], sizes = [1, 256], strides = [1, 1]} : vector<8x256xf32> to vector<1x256xf32>
    %199 = vector.extract_strided_slice %159 {offsets = [2, 0], sizes = [1, 256], strides = [1, 1]} : vector<8x256xf32> to vector<1x256xf32>
    %c2_73 = arith.constant 2 : index
    %c0_74 = arith.constant 0 : index
    %c0_75 = arith.constant 0 : index
    %200 = vector.load %arg3[%c2_73, %c0_74, %c0_75] : memref<8x8x256xf32, #tpu.memory_space<vmem>>, vector<1x8x256xf32>
    %201 = vector.shape_cast %200 : vector<1x8x256xf32> to vector<8x256xf32>
    %c2_76 = arith.constant 2 : index
    %c0_77 = arith.constant 0 : index
    %c0_78 = arith.constant 0 : index
    %202 = vector.load %arg4[%c2_76, %c0_77, %c0_78] : memref<8x8x256xf32, #tpu.memory_space<vmem>>, vector<1x8x256xf32>
    %203 = vector.shape_cast %202 : vector<1x8x256xf32> to vector<8x256xf32>
    %204 = vector.broadcast %198 : vector<1x256xf32> to vector<8x256xf32>
    %205 = arith.mulf %204, %201 : vector<8x256xf32>
    %206 = arith.addf %191, %205 : vector<8x256xf32>
    %207 = vector.broadcast %199 : vector<1x256xf32> to vector<8x256xf32>
    %208 = arith.mulf %207, %203 : vector<8x256xf32>
    %209 = arith.subf %206, %208 : vector<8x256xf32>
    %210 = vector.broadcast %198 : vector<1x256xf32> to vector<8x256xf32>
    %211 = arith.mulf %210, %203 : vector<8x256xf32>
    %212 = arith.addf %197, %211 : vector<8x256xf32>
    %213 = vector.broadcast %199 : vector<1x256xf32> to vector<8x256xf32>
    %214 = arith.mulf %213, %201 : vector<8x256xf32>
    %215 = arith.addf %212, %214 : vector<8x256xf32>
    %216 = vector.extract_strided_slice %157 {offsets = [3, 0], sizes = [1, 256], strides = [1, 1]} : vector<8x256xf32> to vector<1x256xf32>
    %217 = vector.extract_strided_slice %159 {offsets = [3, 0], sizes = [1, 256], strides = [1, 1]} : vector<8x256xf32> to vector<1x256xf32>
    %c3_79 = arith.constant 3 : index
    %c0_80 = arith.constant 0 : index
    %c0_81 = arith.constant 0 : index
    %218 = vector.load %arg3[%c3_79, %c0_80, %c0_81] : memref<8x8x256xf32, #tpu.memory_space<vmem>>, vector<1x8x256xf32>
    %219 = vector.shape_cast %218 : vector<1x8x256xf32> to vector<8x256xf32>
    %c3_82 = arith.constant 3 : index
    %c0_83 = arith.constant 0 : index
    %c0_84 = arith.constant 0 : index
    %220 = vector.load %arg4[%c3_82, %c0_83, %c0_84] : memref<8x8x256xf32, #tpu.memory_space<vmem>>, vector<1x8x256xf32>
    %221 = vector.shape_cast %220 : vector<1x8x256xf32> to vector<8x256xf32>
    %222 = vector.broadcast %216 : vector<1x256xf32> to vector<8x256xf32>
    %223 = arith.mulf %222, %219 : vector<8x256xf32>
    %224 = arith.addf %209, %223 : vector<8x256xf32>
    %225 = vector.broadcast %217 : vector<1x256xf32> to vector<8x256xf32>
    %226 = arith.mulf %225, %221 : vector<8x256xf32>
    %227 = arith.subf %224, %226 : vector<8x256xf32>
    %228 = vector.broadcast %216 : vector<1x256xf32> to vector<8x256xf32>
    %229 = arith.mulf %228, %221 : vector<8x256xf32>
    %230 = arith.addf %215, %229 : vector<8x256xf32>
    %231 = vector.broadcast %217 : vector<1x256xf32> to vector<8x256xf32>
    %232 = arith.mulf %231, %219 : vector<8x256xf32>
    %233 = arith.addf %230, %232 : vector<8x256xf32>
    %234 = vector.extract_strided_slice %157 {offsets = [4, 0], sizes = [1, 256], strides = [1, 1]} : vector<8x256xf32> to vector<1x256xf32>
    %235 = vector.extract_strided_slice %159 {offsets = [4, 0], sizes = [1, 256], strides = [1, 1]} : vector<8x256xf32> to vector<1x256xf32>
    %c4_85 = arith.constant 4 : index
    %c0_86 = arith.constant 0 : index
    %c0_87 = arith.constant 0 : index
    %236 = vector.load %arg3[%c4_85, %c0_86, %c0_87] : memref<8x8x256xf32, #tpu.memory_space<vmem>>, vector<1x8x256xf32>
    %237 = vector.shape_cast %236 : vector<1x8x256xf32> to vector<8x256xf32>
    %c4_88 = arith.constant 4 : index
    %c0_89 = arith.constant 0 : index
    %c0_90 = arith.constant 0 : index
    %238 = vector.load %arg4[%c4_88, %c0_89, %c0_90] : memref<8x8x256xf32, #tpu.memory_space<vmem>>, vector<1x8x256xf32>
    %239 = vector.shape_cast %238 : vector<1x8x256xf32> to vector<8x256xf32>
    %240 = vector.broadcast %234 : vector<1x256xf32> to vector<8x256xf32>
    %241 = arith.mulf %240, %237 : vector<8x256xf32>
    %242 = arith.addf %227, %241 : vector<8x256xf32>
    %243 = vector.broadcast %235 : vector<1x256xf32> to vector<8x256xf32>
    %244 = arith.mulf %243, %239 : vector<8x256xf32>
    %245 = arith.subf %242, %244 : vector<8x256xf32>
    %246 = vector.broadcast %234 : vector<1x256xf32> to vector<8x256xf32>
    %247 = arith.mulf %246, %239 : vector<8x256xf32>
    %248 = arith.addf %233, %247 : vector<8x256xf32>
    %249 = vector.broadcast %235 : vector<1x256xf32> to vector<8x256xf32>
    %250 = arith.mulf %249, %237 : vector<8x256xf32>
    %251 = arith.addf %248, %250 : vector<8x256xf32>
    %252 = vector.extract_strided_slice %157 {offsets = [5, 0], sizes = [1, 256], strides = [1, 1]} : vector<8x256xf32> to vector<1x256xf32>
    %253 = vector.extract_strided_slice %159 {offsets = [5, 0], sizes = [1, 256], strides = [1, 1]} : vector<8x256xf32> to vector<1x256xf32>
    %c5_91 = arith.constant 5 : index
    %c0_92 = arith.constant 0 : index
    %c0_93 = arith.constant 0 : index
    %254 = vector.load %arg3[%c5_91, %c0_92, %c0_93] : memref<8x8x256xf32, #tpu.memory_space<vmem>>, vector<1x8x256xf32>
    %255 = vector.shape_cast %254 : vector<1x8x256xf32> to vector<8x256xf32>
    %c5_94 = arith.constant 5 : index
    %c0_95 = arith.constant 0 : index
    %c0_96 = arith.constant 0 : index
    %256 = vector.load %arg4[%c5_94, %c0_95, %c0_96] : memref<8x8x256xf32, #tpu.memory_space<vmem>>, vector<1x8x256xf32>
    %257 = vector.shape_cast %256 : vector<1x8x256xf32> to vector<8x256xf32>
    %258 = vector.broadcast %252 : vector<1x256xf32> to vector<8x256xf32>
    %259 = arith.mulf %258, %255 : vector<8x256xf32>
    %260 = arith.addf %245, %259 : vector<8x256xf32>
    %261 = vector.broadcast %253 : vector<1x256xf32> to vector<8x256xf32>
    %262 = arith.mulf %261, %257 : vector<8x256xf32>
    %263 = arith.subf %260, %262 : vector<8x256xf32>
    %264 = vector.broadcast %252 : vector<1x256xf32> to vector<8x256xf32>
    %265 = arith.mulf %264, %257 : vector<8x256xf32>
    %266 = arith.addf %251, %265 : vector<8x256xf32>
    %267 = vector.broadcast %253 : vector<1x256xf32> to vector<8x256xf32>
    %268 = arith.mulf %267, %255 : vector<8x256xf32>
    %269 = arith.addf %266, %268 : vector<8x256xf32>
    %270 = vector.extract_strided_slice %157 {offsets = [6, 0], sizes = [1, 256], strides = [1, 1]} : vector<8x256xf32> to vector<1x256xf32>
    %271 = vector.extract_strided_slice %159 {offsets = [6, 0], sizes = [1, 256], strides = [1, 1]} : vector<8x256xf32> to vector<1x256xf32>
    %c6_97 = arith.constant 6 : index
    %c0_98 = arith.constant 0 : index
    %c0_99 = arith.constant 0 : index
    %272 = vector.load %arg3[%c6_97, %c0_98, %c0_99] : memref<8x8x256xf32, #tpu.memory_space<vmem>>, vector<1x8x256xf32>
    %273 = vector.shape_cast %272 : vector<1x8x256xf32> to vector<8x256xf32>
    %c6_100 = arith.constant 6 : index
    %c0_101 = arith.constant 0 : index
    %c0_102 = arith.constant 0 : index
    %274 = vector.load %arg4[%c6_100, %c0_101, %c0_102] : memref<8x8x256xf32, #tpu.memory_space<vmem>>, vector<1x8x256xf32>
    %275 = vector.shape_cast %274 : vector<1x8x256xf32> to vector<8x256xf32>
    %276 = vector.broadcast %270 : vector<1x256xf32> to vector<8x256xf32>
    %277 = arith.mulf %276, %273 : vector<8x256xf32>
    %278 = arith.addf %263, %277 : vector<8x256xf32>
    %279 = vector.broadcast %271 : vector<1x256xf32> to vector<8x256xf32>
    %280 = arith.mulf %279, %275 : vector<8x256xf32>
    %281 = arith.subf %278, %280 : vector<8x256xf32>
    %282 = vector.broadcast %270 : vector<1x256xf32> to vector<8x256xf32>
    %283 = arith.mulf %282, %275 : vector<8x256xf32>
    %284 = arith.addf %269, %283 : vector<8x256xf32>
    %285 = vector.broadcast %271 : vector<1x256xf32> to vector<8x256xf32>
    %286 = arith.mulf %285, %273 : vector<8x256xf32>
    %287 = arith.addf %284, %286 : vector<8x256xf32>
    %288 = vector.extract_strided_slice %157 {offsets = [7, 0], sizes = [1, 256], strides = [1, 1]} : vector<8x256xf32> to vector<1x256xf32>
    %289 = vector.extract_strided_slice %159 {offsets = [7, 0], sizes = [1, 256], strides = [1, 1]} : vector<8x256xf32> to vector<1x256xf32>
    %c7_103 = arith.constant 7 : index
    %c0_104 = arith.constant 0 : index
    %c0_105 = arith.constant 0 : index
    %290 = vector.load %arg3[%c7_103, %c0_104, %c0_105] : memref<8x8x256xf32, #tpu.memory_space<vmem>>, vector<1x8x256xf32>
    %291 = vector.shape_cast %290 : vector<1x8x256xf32> to vector<8x256xf32>
    %c7_106 = arith.constant 7 : index
    %c0_107 = arith.constant 0 : index
    %c0_108 = arith.constant 0 : index
    %292 = vector.load %arg4[%c7_106, %c0_107, %c0_108] : memref<8x8x256xf32, #tpu.memory_space<vmem>>, vector<1x8x256xf32>
    %293 = vector.shape_cast %292 : vector<1x8x256xf32> to vector<8x256xf32>
    %294 = vector.broadcast %288 : vector<1x256xf32> to vector<8x256xf32>
    %295 = arith.mulf %294, %291 : vector<8x256xf32>
    %296 = arith.addf %281, %295 : vector<8x256xf32>
    %297 = vector.broadcast %289 : vector<1x256xf32> to vector<8x256xf32>
    %298 = arith.mulf %297, %293 : vector<8x256xf32>
    %299 = arith.subf %296, %298 : vector<8x256xf32>
    %300 = vector.broadcast %288 : vector<1x256xf32> to vector<8x256xf32>
    %301 = arith.mulf %300, %293 : vector<8x256xf32>
    %302 = arith.addf %287, %301 : vector<8x256xf32>
    %303 = vector.broadcast %289 : vector<1x256xf32> to vector<8x256xf32>
    %304 = arith.mulf %303, %291 : vector<8x256xf32>
    %305 = arith.addf %302, %304 : vector<8x256xf32>
    %c1_109 = arith.constant 1 : index
    %c0_110 = arith.constant 0 : index
    %c0_111 = arith.constant 0 : index
    %306 = vector.load %arg5[%c1_109, %c0_110, %c0_111] : memref<2x8x256xf32, #tpu.memory_space<vmem>>, vector<1x8x256xf32>
    %307 = vector.shape_cast %306 : vector<1x8x256xf32> to vector<8x256xf32>
    %308 = vector.shape_cast %299 : vector<8x256xf32> to vector<1x8x256xf32>
    tpu.vector_store %arg5[%c1_109, %c0_110, %c0_111], %308 {strides = array<i32>} : memref<2x8x256xf32, #tpu.memory_space<vmem>>, vector<1x8x256xf32>,
    %c1_112 = arith.constant 1 : index
    %c0_113 = arith.constant 0 : index
    %c0_114 = arith.constant 0 : index
    %309 = vector.load %arg6[%c1_112, %c0_113, %c0_114] : memref<2x8x256xf32, #tpu.memory_space<vmem>>, vector<1x8x256xf32>
    %310 = vector.shape_cast %309 : vector<1x8x256xf32> to vector<8x256xf32>
    %311 = vector.shape_cast %305 : vector<8x256xf32> to vector<1x8x256xf32>
    tpu.vector_store %arg6[%c1_112, %c0_113, %c0_114], %311 {strides = array<i32>} : memref<2x8x256xf32, #tpu.memory_space<vmem>>, vector<1x8x256xf32>,
    return
  }
  func.func @transform_0(%arg0: i32) -> (i32, i32, i32) {
    %c0_i32 = arith.constant 0 : i32
    %c0_i32_0 = arith.constant 0 : i32
    %c0_i32_1 = arith.constant 0 : i32
    %c0_i32_2 = arith.constant 0 : i32
    return %c0_i32, %c0_i32_0, %c0_i32_1 : i32, i32, i32
  }
  func.func @transform_1(%arg0: i32) -> (i32, i32, i32) {
    %c0_i32 = arith.constant 0 : i32
    %c0_i32_0 = arith.constant 0 : i32
    %c0_i32_1 = arith.constant 0 : i32
    %c0_i32_2 = arith.constant 0 : i32
    return %c0_i32, %c0_i32_0, %c0_i32_1 : i32, i32, i32
  }
  func.func @transform_2(%arg0: i32) -> (i32, i32, i32) {
    %c0_i32 = arith.constant 0 : i32
    %c0_i32_0 = arith.constant 0 : i32
    %c0_i32_1 = arith.constant 0 : i32
    %c0_i32_2 = arith.constant 0 : i32
    return %c0_i32, %c0_i32_0, %c0_i32_1 : i32, i32, i32
  }
  func.func @transform_3(%arg0: i32) -> (i32, i32, i32) {
    %c0_i32 = arith.constant 0 : i32
    %c0_i32_0 = arith.constant 0 : i32
    %c0_i32_1 = arith.constant 0 : i32
    %c0_i32_2 = arith.constant 0 : i32
    return %c0_i32, %c0_i32_0, %c0_i32_1 : i32, i32, i32
  }
  func.func @transform_4(%arg0: i32) -> (i32, i32, i32) {
    %c0_i32 = arith.constant 0 : i32
    %c0_i32_0 = arith.constant 0 : i32
    %c0_i32_1 = arith.constant 0 : i32
    %c0_i32_2 = arith.constant 0 : i32
    return %c0_i32, %c0_i32_0, %c0_i32_1 : i32, i32, i32
  }
  func.func @transform_5(%arg0: i32) -> (i32, i32, i32) {
    %c0_i32 = arith.constant 0 : i32
    %c0_i32_0 = arith.constant 0 : i32
    %c0_i32_1 = arith.constant 0 : i32
    %c0_i32_2 = arith.constant 0 : i32
    return %c0_i32, %c0_i32_0, %c0_i32_1 : i32, i32, i32
  }
}

module attributes {stable_mosaic.version = 11 : i64} {
  func.func @_fam_epilogue_kernel(%arg0: i32, %arg1: memref<2x8x256xf32, #tpu.memory_space<vmem>>, %arg2: memref<2x8x256xf32, #tpu.memory_space<vmem>>, %arg3: memref<8x8xf32, #tpu.memory_space<vmem>>, %arg4: memref<8x1xf32, #tpu.memory_space<vmem>>, %arg5: memref<2xf32, #tpu.memory_space<smem>>, %arg6: memref<2x8x256xf32, #tpu.memory_space<vmem>>) attributes {dimension_semantics = [#tpu.dimension_semantics<arbitrary>], iteration_bounds = array<i64: 1>, scalar_prefetch = 0 : i64, scratch_operands = 0 : i64, tpu.core_type = #tpu.core_type<tc>, window_params = [{pipeline_mode = #tpu.pipeline_mode<synchronous>, transform_indices = @transform_0, window_bounds = array<i64: 2, 8, 256>}, {pipeline_mode = #tpu.pipeline_mode<synchronous>, transform_indices = @transform_1, window_bounds = array<i64: 2, 8, 256>}, {pipeline_mode = #tpu.pipeline_mode<synchronous>, transform_indices = @transform_2, window_bounds = array<i64: 8, 8>}, {pipeline_mode = #tpu.pipeline_mode<synchronous>, transform_indices = @transform_3, window_bounds = array<i64: 8, 1>}, {transform_indices = @transform_4, window_bounds = array<i64: 2>}, {pipeline_mode = #tpu.pipeline_mode<synchronous>, transform_indices = @transform_5, window_bounds = array<i64: 2, 8, 256>}]} {
    %c0 = arith.constant 0 : index
    %c0_0 = arith.constant 0 : index
    %0 = vector.load %arg3[%c0, %c0_0] : memref<8x8xf32, #tpu.memory_space<vmem>>, vector<8x8xf32>
    %c0_1 = arith.constant 0 : index
    %c0_2 = arith.constant 0 : index
    %1 = vector.load %arg4[%c0_1, %c0_2] : memref<8x1xf32, #tpu.memory_space<vmem>>, vector<8x1xf32>
    %c0_3 = arith.constant 0 : index
    %2 = memref.load %arg5[%c0_3] : memref<2xf32, #tpu.memory_space<smem>>
    %c1 = arith.constant 1 : index
    %3 = memref.load %arg5[%c1] : memref<2xf32, #tpu.memory_space<smem>>
    %cst = arith.constant 0.000000e+00 : f32
    %4 = vector.broadcast %cst : f32 to vector<8x1xf32>
    %c0_4 = arith.constant 0 : index
    %c0_5 = arith.constant 0 : index
    %c0_6 = arith.constant 0 : index
    %5 = vector.load %arg2[%c0_4, %c0_5, %c0_6] : memref<2x8x256xf32, #tpu.memory_space<vmem>>, vector<1x8x256xf32>
    %6 = vector.shape_cast %5 : vector<1x8x256xf32> to vector<8x256xf32>
    %cst_7 = arith.constant dense<0.000000e+00> : vector<8x256xf32>
    %7 = tpu.matmul %0, %6, %cst_7 {dimension_numbers = #tpu.dot_dimension_numbers<[1], [0], [0], [1], [0, 0, 1, 1], [], []>} : vector<8x8xf32>, vector<8x256xf32>, vector<8x256xf32> -> vector<8x256xf32>
    %c0_8 = arith.constant 0 : index
    %c0_9 = arith.constant 0 : index
    %c0_10 = arith.constant 0 : index
    %8 = vector.load %arg1[%c0_8, %c0_9, %c0_10] : memref<2x8x256xf32, #tpu.memory_space<vmem>>, vector<1x8x256xf32>
    %9 = vector.shape_cast %8 : vector<1x8x256xf32> to vector<8x256xf32>
    %10 = vector.broadcast %2 : f32 to vector<8x256xf32>
    %11 = arith.mulf %10, %9 : vector<8x256xf32>
    %12 = vector.broadcast %1 : vector<8x1xf32> to vector<8x256xf32>
    %13 = arith.addf %7, %12 : vector<8x256xf32>
    %14 = vector.broadcast %3 : f32 to vector<8x256xf32>
    %15 = arith.mulf %14, %13 : vector<8x256xf32>
    %16 = arith.addf %11, %15 : vector<8x256xf32>
    %cst_11 = arith.constant dense<0.000000e+00> : vector<8xf32>
    %17 = vector.multi_reduction <add>, %16, %cst_11 [1] : vector<8x256xf32> to vector<8xf32>
    %18 = vector.shape_cast %17 : vector<8xf32> to vector<8x1xf32>
    %19 = arith.addf %4, %18 : vector<8x1xf32>
    %c1_12 = arith.constant 1 : index
    %c0_13 = arith.constant 0 : index
    %c0_14 = arith.constant 0 : index
    %20 = vector.load %arg2[%c1_12, %c0_13, %c0_14] : memref<2x8x256xf32, #tpu.memory_space<vmem>>, vector<1x8x256xf32>
    %21 = vector.shape_cast %20 : vector<1x8x256xf32> to vector<8x256xf32>
    %cst_15 = arith.constant dense<0.000000e+00> : vector<8x256xf32>
    %22 = tpu.matmul %0, %21, %cst_15 {dimension_numbers = #tpu.dot_dimension_numbers<[1], [0], [0], [1], [0, 0, 1, 1], [], []>} : vector<8x8xf32>, vector<8x256xf32>, vector<8x256xf32> -> vector<8x256xf32>
    %c1_16 = arith.constant 1 : index
    %c0_17 = arith.constant 0 : index
    %c0_18 = arith.constant 0 : index
    %23 = vector.load %arg1[%c1_16, %c0_17, %c0_18] : memref<2x8x256xf32, #tpu.memory_space<vmem>>, vector<1x8x256xf32>
    %24 = vector.shape_cast %23 : vector<1x8x256xf32> to vector<8x256xf32>
    %25 = vector.broadcast %2 : f32 to vector<8x256xf32>
    %26 = arith.mulf %25, %24 : vector<8x256xf32>
    %27 = vector.broadcast %1 : vector<8x1xf32> to vector<8x256xf32>
    %28 = arith.addf %22, %27 : vector<8x256xf32>
    %29 = vector.broadcast %3 : f32 to vector<8x256xf32>
    %30 = arith.mulf %29, %28 : vector<8x256xf32>
    %31 = arith.addf %26, %30 : vector<8x256xf32>
    %cst_19 = arith.constant dense<0.000000e+00> : vector<8xf32>
    %32 = vector.multi_reduction <add>, %31, %cst_19 [1] : vector<8x256xf32> to vector<8xf32>
    %33 = vector.shape_cast %32 : vector<8xf32> to vector<8x1xf32>
    %34 = arith.addf %19, %33 : vector<8x1xf32>
    %cst_20 = arith.constant 5.120000e+02 : f32
    %35 = vector.broadcast %cst_20 : f32 to vector<8x1xf32>
    %36 = arith.divf %34, %35 : vector<8x1xf32>
    %cst_21 = arith.constant 0.000000e+00 : f32
    %37 = vector.broadcast %cst_21 : f32 to vector<8x1xf32>
    %38 = vector.broadcast %36 : vector<8x1xf32> to vector<8x256xf32>
    %39 = arith.subf %16, %38 : vector<8x256xf32>
    %40 = arith.mulf %39, %39 : vector<8x256xf32>
    %cst_22 = arith.constant dense<0.000000e+00> : vector<8xf32>
    %41 = vector.multi_reduction <add>, %40, %cst_22 [1] : vector<8x256xf32> to vector<8xf32>
    %42 = vector.shape_cast %41 : vector<8xf32> to vector<8x1xf32>
    %43 = arith.addf %37, %42 : vector<8x1xf32>
    %44 = vector.broadcast %36 : vector<8x1xf32> to vector<8x256xf32>
    %45 = arith.subf %31, %44 : vector<8x256xf32>
    %46 = arith.mulf %45, %45 : vector<8x256xf32>
    %cst_23 = arith.constant dense<0.000000e+00> : vector<8xf32>
    %47 = vector.multi_reduction <add>, %46, %cst_23 [1] : vector<8x256xf32> to vector<8xf32>
    %48 = vector.shape_cast %47 : vector<8xf32> to vector<8x1xf32>
    %49 = arith.addf %43, %48 : vector<8x1xf32>
    %cst_24 = arith.constant 5.120000e+02 : f32
    %50 = vector.broadcast %cst_24 : f32 to vector<8x1xf32>
    %51 = arith.divf %49, %50 : vector<8x1xf32>
    %cst_25 = arith.constant 9.99999974E-6 : f32
    %52 = vector.broadcast %cst_25 : f32 to vector<8x1xf32>
    %53 = arith.addf %51, %52 : vector<8x1xf32>
    %54 = math.rsqrt %53 : vector<8x1xf32>
    %55 = vector.broadcast %36 : vector<8x1xf32> to vector<8x256xf32>
    %56 = arith.subf %16, %55 : vector<8x256xf32>
    %57 = vector.broadcast %54 : vector<8x1xf32> to vector<8x256xf32>
    %58 = arith.mulf %56, %57 : vector<8x256xf32>
    %cst_26 = arith.constant 0.000000e+00 : f32
    %59 = vector.broadcast %cst_26 : f32 to vector<8x256xf32>
    %60 = arith.maximumf %58, %59 : vector<8x256xf32>
    %c0_27 = arith.constant 0 : index
    %c0_28 = arith.constant 0 : index
    %c0_29 = arith.constant 0 : index
    %61 = vector.load %arg6[%c0_27, %c0_28, %c0_29] : memref<2x8x256xf32, #tpu.memory_space<vmem>>, vector<1x8x256xf32>
    %62 = vector.shape_cast %61 : vector<1x8x256xf32> to vector<8x256xf32>
    %63 = vector.shape_cast %60 : vector<8x256xf32> to vector<1x8x256xf32>
    tpu.vector_store %arg6[%c0_27, %c0_28, %c0_29], %63 {strides = array<i32>} : memref<2x8x256xf32, #tpu.memory_space<vmem>>, vector<1x8x256xf32>,
    %64 = vector.broadcast %36 : vector<8x1xf32> to vector<8x256xf32>
    %65 = arith.subf %31, %64 : vector<8x256xf32>
    %66 = vector.broadcast %54 : vector<8x1xf32> to vector<8x256xf32>
    %67 = arith.mulf %65, %66 : vector<8x256xf32>
    %cst_30 = arith.constant 0.000000e+00 : f32
    %68 = vector.broadcast %cst_30 : f32 to vector<8x256xf32>
    %69 = arith.maximumf %67, %68 : vector<8x256xf32>
    %c1_31 = arith.constant 1 : index
    %c0_32 = arith.constant 0 : index
    %c0_33 = arith.constant 0 : index
    %70 = vector.load %arg6[%c1_31, %c0_32, %c0_33] : memref<2x8x256xf32, #tpu.memory_space<vmem>>, vector<1x8x256xf32>
    %71 = vector.shape_cast %70 : vector<1x8x256xf32> to vector<8x256xf32>
    %72 = vector.shape_cast %69 : vector<8x256xf32> to vector<1x8x256xf32>
    tpu.vector_store %arg6[%c1_31, %c0_32, %c0_33], %72 {strides = array<i32>} : memref<2x8x256xf32, #tpu.memory_space<vmem>>, vector<1x8x256xf32>,
    return
  }
  func.func @transform_0(%arg0: i32) -> (i32, i32, i32) {
    %c0_i32 = arith.constant 0 : i32
    %c0_i32_0 = arith.constant 0 : i32
    %c0_i32_1 = arith.constant 0 : i32
    %c0_i32_2 = arith.constant 0 : i32
    return %c0_i32, %c0_i32_0, %c0_i32_1 : i32, i32, i32
  }
  func.func @transform_1(%arg0: i32) -> (i32, i32, i32) {
    %c0_i32 = arith.constant 0 : i32
    %c0_i32_0 = arith.constant 0 : i32
    %c0_i32_1 = arith.constant 0 : i32
    %c0_i32_2 = arith.constant 0 : i32
    return %c0_i32, %c0_i32_0, %c0_i32_1 : i32, i32, i32
  }
  func.func @transform_2(%arg0: i32) -> (i32, i32) {
    %c0_i32 = arith.constant 0 : i32
    %c0_i32_0 = arith.constant 0 : i32
    %c0_i32_1 = arith.constant 0 : i32
    return %c0_i32, %c0_i32_0 : i32, i32
  }
  func.func @transform_3(%arg0: i32) -> (i32, i32) {
    %c0_i32 = arith.constant 0 : i32
    %c0_i32_0 = arith.constant 0 : i32
    %c0_i32_1 = arith.constant 0 : i32
    return %c0_i32, %c0_i32_0 : i32, i32
  }
  func.func @transform_4(%arg0: i32) -> i32 {
    %c0_i32 = arith.constant 0 : i32
    %c0_i32_0 = arith.constant 0 : i32
    return %c0_i32 : i32
  }
  func.func @transform_5(%arg0: i32) -> (i32, i32, i32) {
    %c0_i32 = arith.constant 0 : i32
    %c0_i32_0 = arith.constant 0 : i32
    %c0_i32_1 = arith.constant 0 : i32
    %c0_i32_2 = arith.constant 0 : i32
    return %c0_i32, %c0_i32_0, %c0_i32_1 : i32, i32, i32
  }
}

</mosaic_0001>

<llo_original>
// kernel: crossatf_forward.3
$region0: #{crossatf_forward.3}
  #allocation0 [shape = 'u32[]', space=smem, size = 0x4, offset = 0x4, fixed_abs, tag = 'smem constant byte address 0x4 - core index']
  #allocation1 [shape = 'u32[144,128]{1,0:T(1,128)}', space=vmem, size = 0x12000, scoped, tag = 'internal scratch']
  %s0 = inlined_call_operand.vmem [shape: f32[2,8,256], index: 0, kind: input, shape index: {}]
  %s1 = inlined_call_operand.vmem [shape: f32[16,8], index: 1, kind: input, shape index: {}]
  %s2 = inlined_call_operand.vmem [shape: f32[24,16], index: 2, kind: input, shape index: {}]
  %s3 = inlined_call_operand.vmem [shape: f32[8,9], index: 3, kind: input, shape index: {}]
  %s4 = inlined_call_operand.vmem [shape: f32[9,256], index: 4, kind: input, shape index: {}]
  %s5 = inlined_call_operand.vmem [shape: f32[2,8,256], index: 5, kind: output, shape index: {}]
  %s6 = sld [smem:[#allocation0]]
  $region30: #{crossatf_forward.3} parent=0
    _
  %s8 = ssub.s32 1, %s6
  %s9 = scalar_select 0, %s8, %s6
  // Predicated region
  $region2: #{crossatf_forward.3} parent=0 // pred_check
    _
  $region3: #{crossatf_forward.3} parent=0 // pred_check_branch
    %11 = sbr.rel (0) target = $region5
  $region4: #{crossatf_forward.3} parent=0 // pred_region
    _
  $region5: #{crossatf_forward.3} parent=0 // pred_fallthru
    _
  // Predicated region
  $region6: #{crossatf_forward.3} parent=0 // pred_check
    _
  $region7: #{crossatf_forward.3} parent=0 // pred_check_branch
    %13 = sbr.rel (0) target = $region9
  $region8: #{crossatf_forward.3} parent=0 // pred_region
    _
  $region9: #{crossatf_forward.3} parent=0 // pred_fallthru
    _
  // Predicated region
  $region10: #{crossatf_forward.3} parent=0 // pred_check
    _
  $region11: #{crossatf_forward.3} parent=0 // pred_check_branch
    %15 = sbr.rel (0) target = $region13
  $region12: #{crossatf_forward.3} parent=0 // pred_region
    _
  $region13: #{crossatf_forward.3} parent=0 // pred_fallthru
    _
  // Predicated region
  $region14: #{crossatf_forward.3} parent=0 // pred_check
    _
  $region15: #{crossatf_forward.3} parent=0 // pred_check_branch
    %17 = sbr.rel (0) target = $region17
  $region16: #{crossatf_forward.3} parent=0 // pred_region
    _
  $region17: #{crossatf_forward.3} parent=0 // pred_fallthru
    _
  // Predicated region
  $region18: #{crossatf_forward.3} parent=0 // pred_check
    _
  $region19: #{crossatf_forward.3} parent=0 // pred_check_branch
    %19 = sbr.rel (0) target = $region21
  $region20: #{crossatf_forward.3} parent=0 // pred_region
    _
  $region21: #{crossatf_forward.3} parent=0 // pred_fallthru
    _
  %v20 = vld [vmem:[%s1] sm:$0xff]
  %v21 = vld [vmem:[%s1 + $0x8] sm:$0xff]
  %v22 = vld [vmem:[%s0] sm:$0xff]
  %v23 = vld [vmem:[%s0 + $0x8] sm:$0xff]
  %vm24 = vcmask 64512
  %v26 = vsel %vm24, %v20, 0
  %v29 = vsel %vm24, %v21, 0
  %31 = vmatprep.subr.mxu0 %v23
  %32 = vmatpush1.msra.mxu0 %v22
  %33 = vmatprep.subr.mxu0 0.0
  %34 = vmatpush1.msra.mxu0 0.0
  %35 = vmatprep.subr.mxu0 0.0
  %36 = vmatpush1.msra.mxu0 0.0
  %37 = vmatprep.subr.mxu0 0.0
  %38 = vmatpush1.msra.mxu0 0.0
  %39 = vmatprep.subr.mxu0 0.0
  %40 = vmatpush1.msra.mxu0 0.0
  %41 = vmatprep.subr.mxu0 0.0
  %42 = vmatpush1.msra.mxu0 0.0
  %43 = vmatprep.subr.mxu0 0.0
  %44 = vmatpush1.msra.mxu0 0.0
  %45 = vmatprep.subr.mxu0 0.0
  %46 = vmatpush1.msra.mxu0 0.0
  %47 = vmatprep.subr.mxu0 0.0
  %48 = vmatpush1.msra.mxu0 0.0
  %49 = vmatprep.subr.mxu0 0.0
  %50 = vmatpush1.msra.mxu0 0.0
  %51 = vmatprep.subr.mxu0 0.0
  %52 = vmatpush1.msra.mxu0 0.0
  %53 = vmatprep.subr.mxu0 0.0
  %54 = vmatpush1.msra.mxu0 0.0
  %55 = vmatprep.subr.mxu0 0.0
  %56 = vmatpush1.msra.mxu0 0.0
  %57 = vmatprep.subr.mxu0 0.0
  %58 = vmatpush1.msra.mxu0 0.0
  %59 = vmatprep.subr.mxu0 0.0
  %60 = vmatpush1.msra.mxu0 0.0
  %61 = vmatprep.subr.mxu0 0.0
  %62 = vmatpush1.msra.mxu0 0.0
  %63 = vmatprep.subr.mxu0 0.0
  %64 = vmatpush1.msra.mxu0 0.0
  %65 = vmatprep.subr.mxu0 0.0
  %66 = vmatpush1.msra.mxu0 0.0
  %67 = vmatprep.subr.mxu0 0.0
  %68 = vmatpush1.msra.mxu0 0.0
  %69 = vmatprep.subr.mxu0 0.0
  %70 = vmatpush1.msra.mxu0 0.0
  %71 = vmatprep.subr.mxu0 0.0
  %72 = vmatpush1.msra.mxu0 0.0
  %73 = vmatprep.subr.mxu0 0.0
  %74 = vmatpush1.msra.mxu0 0.0
  %75 = vmatprep.subr.mxu0 0.0
  %76 = vmatpush1.msra.mxu0 0.0
  %77 = vmatprep.subr.mxu0 0.0
  %78 = vmatpush1.msra.mxu0 0.0
  %79 = vmatprep.subr.mxu0 0.0
  %80 = vmatpush1.msra.mxu0 0.0
  %81 = vmatprep.subr.mxu0 0.0
  %82 = vmatpush1.msra.mxu0 0.0
  %83 = vmatprep.subr.mxu0 0.0
  %84 = vmatpush1.msra.mxu0 0.0
  %85 = vmatprep.subr.mxu0 0.0
  %86 = vmatpush1.msra.mxu0 0.0
  %87 = vmatprep.subr.mxu0 0.0
  %88 = vmatpush1.msra.mxu0 0.0
  %89 = vmatprep.subr.mxu0 0.0
  %90 = vmatpush1.msra.mxu0 0.0
  %91 = vmatprep.subr.mxu0 0.0
  %92 = vmatpush1.msra.mxu0 0.0
  %93 = vmatprep.subr.mxu0 0.0
  %94 = vmatpush1.msra.mxu0 0.0
  %95 = vmatprep.mubr.f32.mxu0 0.0
  %96 = vmatmul.mubr.f32.gmra.mrb[0].mxu0 %v26
  %v97 = vpop.f32.mrb[0].mxu0
  %v98 = vadd.f32 0.0, %v97
  %v99 = vpop.f32.mrb[0].mxu0
  %v100 = vadd.f32 0.0, %v99
  %101 = vmatprep.mubr.f32.mxu0 0.0
  %102 = vmatmul.mubr.f32.gmra.mrb[0].mxu0 %v29
  %v103 = vpop.f32.mrb[0].mxu0
  %v104 = vadd.f32 0.0, %v103
  %v105 = vpop.f32.mrb[0].mxu0
  %v106 = vadd.f32 0.0, %v105
  %107 = vdwg.mxu0
  %v108 = vadd.f32 %v98, %v100
  %109 = vadd.xlane.f32.xlu0 %v108
  %v110 = vpop.xlane.xlu0 %109
  %v111 = vadd.f32 %v104, %v106
  %112 = vadd.xlane.f32.xlu0 %v111
  %v113 = vpop.xlane.xlu0 %112
  %v114 = vadd.f32 %v110, 0.0
  %v115 = vadd.f32 %v113, 0.0
  %s116 = scalar_lea.vmem %s0, 16
  %v117 = vld [vmem:[%s116] sm:$0xff]
  %v118 = vld [vmem:[%s116 + $0x8] sm:$0xff]
  %119 = vmatprep.subr.mxu0 %v118
  %120 = vmatpush1.msra.mxu0 %v117
  %121 = vmatprep.subr.mxu0 0.0
  %122 = vmatpush1.msra.mxu0 0.0
  %123 = vmatprep.subr.mxu0 0.0
  %124 = vmatpush1.msra.mxu0 0.0
  %125 = vmatprep.subr.mxu0 0.0
  %126 = vmatpush1.msra.mxu0 0.0
  %127 = vmatprep.subr.mxu0 0.0
  %128 = vmatpush1.msra.mxu0 0.0
  %129 = vmatprep.subr.mxu0 0.0
  %130 = vmatpush1.msra.mxu0 0.0
  %131 = vmatprep.subr.mxu0 0.0
  %132 = vmatpush1.msra.mxu0 0.0
  %133 = vmatprep.subr.mxu0 0.0
  %134 = vmatpush1.msra.mxu0 0.0
  %135 = vmatprep.subr.mxu0 0.0
  %136 = vmatpush1.msra.mxu0 0.0
  %137 = vmatprep.subr.mxu0 0.0
  %138 = vmatpush1.msra.mxu0 0.0
  %139 = vmatprep.subr.mxu0 0.0
  %140 = vmatpush1.msra.mxu0 0.0
  %141 = vmatprep.subr.mxu0 0.0
  %142 = vmatpush1.msra.mxu0 0.0
  %143 = vmatprep.subr.mxu0 0.0
  %144 = vmatpush1.msra.mxu0 0.0
  %145 = vmatprep.subr.mxu0 0.0
  %146 = vmatpush1.msra.mxu0 0.0
  %147 = vmatprep.subr.mxu0 0.0
  %148 = vmatpush1.msra.mxu0 0.0
  %149 = vmatprep.subr.mxu0 0.0
  %150 = vmatpush1.msra.mxu0 0.0
  %151 = vmatprep.subr.mxu0 0.0
  %152 = vmatpush1.msra.mxu0 0.0
  %153 = vmatprep.subr.mxu0 0.0
  %154 = vmatpush1.msra.mxu0 0.0
  %155 = vmatprep.subr.mxu0 0.0
  %156 = vmatpush1.msra.mxu0 0.0
  %157 = vmatprep.subr.mxu0 0.0
  %158 = vmatpush1.msra.mxu0 0.0
  %159 = vmatprep.subr.mxu0 0.0
  %160 = vmatpush1.msra.mxu0 0.0
  %161 = vmatprep.subr.mxu0 0.0
  %162 = vmatpush1.msra.mxu0 0.0
  %163 = vmatprep.subr.mxu0 0.0
  %164 = vmatpush1.msra.mxu0 0.0
  %165 = vmatprep.subr.mxu0 0.0
  %166 = vmatpush1.msra.mxu0 0.0
  %167 = vmatprep.subr.mxu0 0.0
  %168 = vmatpush1.msra.mxu0 0.0
  %169 = vmatprep.subr.mxu0 0.0
  %170 = vmatpush1.msra.mxu0 0.0
  %171 = vmatprep.subr.mxu0 0.0
  %172 = vmatpush1.msra.mxu0 0.0
  %173 = vmatprep.subr.mxu0 0.0
  %174 = vmatpush1.msra.mxu0 0.0
  %175 = vmatprep.subr.mxu0 0.0
  %176 = vmatpush1.msra.mxu0 0.0
  %177 = vmatprep.subr.mxu0 0.0
  %178 = vmatpush1.msra.mxu0 0.0
  %179 = vmatprep.subr.mxu0 0.0
  %180 = vmatpush1.msra.mxu0 0.0
  %181 = vmatprep.subr.mxu0 0.0
  %182 = vmatpush1.msra.mxu0 0.0
  %183 = vmatprep.mubr.f32.mxu0 0.0
  %184 = vmatmul.mubr.f32.gmra.mrb[0].mxu0 %v26
  %v185 = vpop.f32.mrb[0].mxu0
  %v186 = vadd.f32 0.0, %v185
  %v187 = vpop.f32.mrb[0].mxu0
  %v188 = vadd.f32 0.0, %v187
  %189 = vmatprep.mubr.f32.mxu0 0.0
  %190 = vmatmul.mubr.f32.gmra.mrb[0].mxu0 %v29
  %v191 = vpop.f32.mrb[0].mxu0
  %v192 = vadd.f32 0.0, %v191
  %v193 = vpop.f32.mrb[0].mxu0
  %v194 = vadd.f32 0.0, %v193
  %195 = vdwg.mxu0
  %v196 = vadd.f32 %v186, %v188
  %197 = vadd.xlane.f32.xlu0 %v196
  %v198 = vpop.xlane.xlu0 %197
  %v199 = vadd.f32 %v192, %v194
  %200 = vadd.xlane.f32.xlu0 %v199
  %v201 = vpop.xlane.xlu0 %200
  %v202 = vadd.f32 %v114, %v198
  %v203 = vadd.f32 %v115, %v201
  %v204 = vrcp.pop 512.0
  %v205 = vmul.f32 %v202, %v204
  %v206 = vmul.f32 %v203, %v204
  %v207 = vsub.f32 %v98, %v205
  %v208 = vsub.f32 %v100, %v205
  %v209 = vsub.f32 %v104, %v206
  %v210 = vsub.f32 %v106, %v206
  %v211 = vmul.f32 %v207, %v207
  %v212 = vmul.f32 %v208, %v208
  %v213 = vmul.f32 %v209, %v209
  %v214 = vmul.f32 %v210, %v210
  %v215 = vadd.f32 %v211, %v212
  %216 = vadd.xlane.f32.xlu0 %v215
  %v217 = vpop.xlane.xlu0 %216
  %v218 = vadd.f32 %v213, %v214
  %219 = vadd.xlane.f32.xlu0 %v218
  %v220 = vpop.xlane.xlu0 %219
  %v221 = vadd.f32 %v217, 0.0
  %v222 = vadd.f32 %v220, 0.0
  %v223 = vsub.f32 %v186, %v205
  %v224 = vsub.f32 %v188, %v205
  %v225 = vsub.f32 %v192, %v206
  %v226 = vsub.f32 %v194, %v206
  %v227 = vmul.f32 %v223, %v223
  %v228 = vmul.f32 %v224, %v224
  %v229 = vmul.f32 %v225, %v225
  %v230 = vmul.f32 %v226, %v226
  %v231 = vadd.f32 %v227, %v228
  %232 = vadd.xlane.f32.xlu0 %v231
  %v233 = vpop.xlane.xlu0 %232
  %v234 = vadd.f32 %v229, %v230
  %235 = vadd.xlane.f32.xlu0 %v234
  %v236 = vpop.xlane.xlu0 %235
  %v237 = vadd.f32 %v221, %v233
  %v238 = vadd.f32 %v222, %v236
  %v239 = vmul.f32 %v237, %v204
  %v240 = vmul.f32 %v238, %v204
  %v241 = vadd.f32 %v239, 1e-05
  %v242 = vadd.f32 %v240, 1e-05
  %v243 = vrsqrt.pop %v241
  %v244 = vrsqrt.pop %v242
  %v245 = vld [vmem:[%s2] sm:$0xff]
  %v246 = vld [vmem:[%s2 + $0x8] sm:$0xff]
  %v247 = vld [vmem:[%s2 + $0x10] sm:$0xff]
  %v248 = vld [vmem:[%s3] sm:$0xff]
  %v249 = vmul.f32 %v207, %v243
  %v250 = vmul.f32 %v208, %v243
  %v251 = vmul.f32 %v209, %v244
  %v252 = vmul.f32 %v210, %v244
  %v253 = vmax.f32 %v249, 0.0
  %v254 = vmax.f32 %v250, 0.0
  %v255 = vmax.f32 %v251, 0.0
  %v256 = vmax.f32 %v252, 0.0
  %vm257 = vcmask 130048
  %v259 = vsel %vm257, %v245, 0
  %v262 = vsel %vm257, %v246, 0
  %v265 = vsel %vm257, %v247, 0
  %267 = vmatprep.subr.mxu0 %v254
  %268 = vmatpush1.msra.mxu0 %v253
  %269 = vmatprep.subr.mxu0 %v256
  %270 = vmatpush1.msra.mxu0 %v255
  %271 = vmatprep.subr.mxu0 0.0
  %272 = vmatpush1.msra.mxu0 0.0
  %273 = vmatprep.subr.mxu0 0.0
  %274 = vmatpush1.msra.mxu0 0.0
  %275 = vmatprep.subr.mxu0 0.0
  %276 = vmatpush1.msra.mxu0 0.0
  %277 = vmatprep.subr.mxu0 0.0
  %278 = vmatpush1.msra.mxu0 0.0
  %279 = vmatprep.subr.mxu0 0.0
  %280 = vmatpush1.msra.mxu0 0.0
  %281 = vmatprep.subr.mxu0 0.0
  %282 = vmatpush1.msra.mxu0 0.0
  %283 = vmatprep.subr.mxu0 0.0
  %284 = vmatpush1.msra.mxu0 0.0
  %285 = vmatprep.subr.mxu0 0.0
  %286 = vmatpush1.msra.mxu0 0.0
  %287 = vmatprep.subr.mxu0 0.0
  %288 = vmatpush1.msra.mxu0 0.0
  %289 = vmatprep.subr.mxu0 0.0
  %290 = vmatpush1.msra.mxu0 0.0
  %291 = vmatprep.subr.mxu0 0.0
  %292 = vmatpush1.msra.mxu0 0.0
  %293 = vmatprep.subr.mxu0 0.0
  %294 = vmatpush1.msra.mxu0 0.0
  %295 = vmatprep.subr.mxu0 0.0
  %296 = vmatpush1.msra.mxu0 0.0
  %297 = vmatprep.subr.mxu0 0.0
  %298 = vmatpush1.msra.mxu0 0.0
  %299 = vmatprep.subr.mxu0 0.0
  %300 = vmatpush1.msra.mxu0 0.0
  %301 = vmatprep.subr.mxu0 0.0
  %302 = vmatpush1.msra.mxu0 0.0
  %303 = vmatprep.subr.mxu0 0.0
  %304 = vmatpush1.msra.mxu0 0.0
  %305 = vmatprep.subr.mxu0 0.0
  %306 = vmatpush1.msra.mxu0 0.0
  %307 = vmatprep.subr.mxu0 0.0
  %308 = vmatpush1.msra.mxu0 0.0
  %309 = vmatprep.subr.mxu0 0.0
  %310 = vmatpush1.msra.mxu0 0.0
  %311 = vmatprep.subr.mxu0 0.0
  %312 = vmatpush1.msra.mxu0 0.0
  %313 = vmatprep.subr.mxu0 0.0
  %314 = vmatpush1.msra.mxu0 0.0
  %315 = vmatprep.subr.mxu0 0.0
  %316 = vmatpush1.msra.mxu0 0.0
  %317 = vmatprep.subr.mxu0 0.0
  %318 = vmatpush1.msra.mxu0 0.0
  %319 = vmatprep.subr.mxu0 0.0
  %320 = vmatpush1.msra.mxu0 0.0
  %321 = vmatprep.subr.mxu0 0.0
  %322 = vmatpush1.msra.mxu0 0.0
  %323 = vmatprep.subr.mxu0 0.0
  %324 = vmatpush1.msra.mxu0 0.0
  %325 = vmatprep.subr.mxu0 0.0
  %326 = vmatpush1.msra.mxu0 0.0
  %327 = vmatprep.subr.mxu0 0.0
  %328 = vmatpush1.msra.mxu0 0.0
  %329 = vmatprep.subr.mxu0 0.0
  %330 = vmatpush1.msra.mxu0 0.0
  %331 = vmatprep.mubr.f32.mxu0 0.0
  %332 = vmatmul.mubr.f32.gmra.mrb[0].mxu0 %v259
  %v333 = vpop.f32.mrb[0].mxu0
  %v334 = vadd.f32 0.0, %v333
  %v335 = vpop.f32.mrb[0].mxu0
  %v336 = vadd.f32 0.0, %v335
  %337 = vmatprep.mubr.f32.mxu0 0.0
  %338 = vmatmul.mubr.f32.gmra.mrb[0].mxu0 %v262
  %v339 = vpop.f32.mrb[0].mxu0
  %v340 = vadd.f32 0.0, %v339
  %v341 = vpop.f32.mrb[0].mxu0
  %v342 = vadd.f32 0.0, %v341
  %343 = vmatprep.mubr.f32.mxu0 0.0
  %344 = vmatmul.mubr.f32.gmra.mrb[0].mxu0 %v265
  %v345 = vpop.f32.mrb[0].mxu0
  %v346 = vadd.f32 0.0, %v345
  %v347 = vpop.f32.mrb[0].mxu0
  %v348 = vadd.f32 0.0, %v347
  %349 = vdwg.mxu0
  %350 = vrot.lane.b32.xlu0 %v340, 17
  %v351 = vpop.permute.xlu0 %350
  %352 = vrot.lane.b32.xlu0 %v342, 17
  %v353 = vpop.permute.xlu0 %352
  %v354 = vlaneseq
  %v355 = vand.u32 %v354, 127
  %vm356 = vcmp.lt.s32.totalorder %v355, 17
  %v357 = vsel %vm356, %v351, %v353
  %v358 = vsel %vm356, %v353, %v351
  %359 = vrot.lane.b32.xlu0 %v346, 17
  %v360 = vpop.permute.xlu0 %359
  %361 = vrot.lane.b32.xlu0 %v348, 17
  %v362 = vpop.permute.xlu0 %361
  %v363 = vsel %vm356, %v360, %v362
  %v364 = vsel %vm356, %v362, %v360
  %v365 = vld [vmem:[%s4] ss:$8 sm:$0x3]
  %v367 = vlaneseq
  %v368 = vshrl.u32 %v367, 7
  %v369 = vsub.s32 0, %v368
  %v370 = vrot.slane %v365, %v369
  %v371 = vlaneseq
  %v372 = vshrl.u32 %v371, 7
  %v373 = vsub.s32 1, %v372
  %v374 = vrot.slane %v365, %v373
  %v377 = vmul.f32 %v358, %v370
  %v378 = vmul.f32 %v357, %v374
  %380 = vset.pattern.permute.xlu0 0
  %381 = vperm.xlu0 %380, %v248
  %v382 = vpop.permute.xlu0 %381
  %v384 = vadd.f32 %v377, %v382
  %v385 = vadd.f32 %v378, %v382
  %v386 = vmul.f32 %v364, %v370
  %v387 = vmul.f32 %v363, %v374
  %v388 = vmul.f32 %v334, %v384
  %v389 = vmul.f32 %v336, %v385
  %v390 = vsub.f32 -inf, %v388
  %v391 = vsub.f32 -inf, %v389
  %v392 = vmul.f32 %v390, 1.442695
  %v393 = vpow.pop %v392
  %v394 = vmul.f32 %v391, 1.442695
  %v395 = vpow.pop %v394
  %v396 = vsub.f32 %v388, %v388
  %v397 = vsub.f32 %v389, %v389
  %v398 = vmul.f32 %v396, 1.442695
  %v399 = vpow.pop %v398
  %v400 = vmul.f32 %v397, 1.442695
  %v401 = vpow.pop %v400
  %v402 = vmul.f32 %v393, 0.0
  %v403 = vmul.f32 %v395, 0.0
  %v404 = vadd.f32 %v402, %v399
  %v405 = vadd.f32 %v403, %v401
  %v406 = vmul.f32 %v399, %v386
  %v407 = vmul.f32 %v401, %v387
  %v408 = vadd.f32 %v402, %v406
  %v409 = vadd.f32 %v403, %v407
  %410 = vrot.lane.b32.xlu0 %v340, 16
  %v411 = vpop.permute.xlu0 %410
  %412 = vrot.lane.b32.xlu0 %v342, 16
  %v413 = vpop.permute.xlu0 %412
  %vm414 = vcmp.lt.s32.totalorder %v355, 16
  %v415 = vsel %vm414, %v411, %v413
  %v416 = vsel %vm414, %v413, %v411
  %417 = vrot.lane.b32.xlu0 %v346, 16
  %v418 = vpop.permute.xlu0 %417
  %419 = vrot.lane.b32.xlu0 %v348, 16
  %v420 = vpop.permute.xlu0 %419
  %v421 = vsel %vm414, %v418, %v420
  %v422 = vsel %vm414, %v420, %v418
  %s423 = scalar_lea.vmem %s4, 1
  %v424 = vld [vmem:[%s423] ss:$8 sm:$0x3]
  %v426 = vlaneseq
  %v427 = vshrl.u32 %v426, 7
  %v428 = vsub.s32 0, %v427
  %v429 = vrot.slane %v424, %v428
  %v430 = vlaneseq
  %v431 = vshrl.u32 %v430, 7
  %v432 = vsub.s32 1, %v431
  %v433 = vrot.slane %v424, %v432
  %v436 = vmul.f32 %v416, %v429
  %v437 = vmul.f32 %v415, %v433
  %438 = vset.pattern.permute.xlu0 1
  %439 = vperm.xlu0 %438, %v248
  %v440 = vpop.permute.xlu0 %439
  %v442 = vadd.f32 %v436, %v440
  %v443 = vadd.f32 %v437, %v440
  %v444 = vmul.f32 %v422, %v429
  %v445 = vmul.f32 %v421, %v433
  %v446 = vmul.f32 %v334, %v442
  %v447 = vmul.f32 %v336, %v443
  %v448 = vmax.f32 %v388, %v446
  %v449 = vmax.f32 %v389, %v447
  %v450 = vsub.f32 %v388, %v448
  %v451 = vsub.f32 %v389, %v449
  %v452 = vmul.f32 %v450, 1.442695
  %v453 = vpow.pop %v452
  %v454 = vmul.f32 %v451, 1.442695
  %v455 = vpow.pop %v454
  %v456 = vsub.f32 %v446, %v448
  %v457 = vsub.f32 %v447, %v449
  %v458 = vmul.f32 %v456, 1.442695
  %v459 = vpow.pop %v458
  %v460 = vmul.f32 %v457, 1.442695
  %v461 = vpow.pop %v460
  %v462 = vmul.f32 %v404, %v453
  %v463 = vmul.f32 %v405, %v455
  %v464 = vadd.f32 %v462, %v459
  %v465 = vadd.f32 %v463, %v461
  %v466 = vmul.f32 %v408, %v453
  %v467 = vmul.f32 %v409, %v455
  %v468 = vmul.f32 %v459, %v444
  %v469 = vmul.f32 %v461, %v445
  %v470 = vadd.f32 %v466, %v468
  %v471 = vadd.f32 %v467, %v469
  %472 = vrot.lane.b32.xlu0 %v340, 15
  %v473 = vpop.permute.xlu0 %472
  %474 = vrot.lane.b32.xlu0 %v342, 15
  %v475 = vpop.permute.xlu0 %474
  %vm476 = vcmp.lt.s32.totalorder %v355, 15
  %v477 = vsel %vm476, %v473, %v475
  %v478 = vsel %vm476, %v475, %v473
  %479 = vrot.lane.b32.xlu0 %v346, 15
  %v480 = vpop.permute.xlu0 %479
  %481 = vrot.lane.b32.xlu0 %v348, 15
  %v482 = vpop.permute.xlu0 %481
  %v483 = vsel %vm476, %v480, %v482
  %v484 = vsel %vm476, %v482, %v480
  %s485 = scalar_lea.vmem %s4, 2
  %v486 = vld [vmem:[%s485] ss:$8 sm:$0x3]
  %v488 = vlaneseq
  %v489 = vshrl.u32 %v488, 7
  %v490 = vsub.s32 0, %v489
  %v491 = vrot.slane %v486, %v490
  %v492 = vlaneseq
  %v493 = vshrl.u32 %v492, 7
  %v494 = vsub.s32 1, %v493
  %v495 = vrot.slane %v486, %v494
  %v498 = vmul.f32 %v478, %v491
  %v499 = vmul.f32 %v477, %v495
  %500 = vset.pattern.permute.xlu0 2
  %501 = vperm.xlu0 %500, %v248
  %v502 = vpop.permute.xlu0 %501
  %v504 = vadd.f32 %v498, %v502
  %v505 = vadd.f32 %v499, %v502
  %v506 = vmul.f32 %v484, %v491
  %v507 = vmul.f32 %v483, %v495
  %v508 = vmul.f32 %v334, %v504
  %v509 = vmul.f32 %v336, %v505
  %v510 = vmax.f32 %v448, %v508
  %v511 = vmax.f32 %v449, %v509
  %v512 = vsub.f32 %v448, %v510
  %v513 = vsub.f32 %v449, %v511
  %v514 = vmul.f32 %v512, 1.442695
  %v515 = vpow.pop %v514
  %v516 = vmul.f32 %v513, 1.442695
  %v517 = vpow.pop %v516
  %v518 = vsub.f32 %v508, %v510
  %v519 = vsub.f32 %v509, %v511
  %v520 = vmul.f32 %v518, 1.442695
  %v521 = vpow.pop %v520
  %v522 = vmul.f32 %v519, 1.442695
  %v523 = vpow.pop %v522
  %v524 = vmul.f32 %v464, %v515
  %v525 = vmul.f32 %v465, %v517
  %v526 = vadd.f32 %v524, %v521
  %v527 = vadd.f32 %v525, %v523
  %v528 = vmul.f32 %v470, %v515
  %v529 = vmul.f32 %v471, %v517
  %v530 = vmul.f32 %v521, %v506
  %v531 = vmul.f32 %v523, %v507
  %v532 = vadd.f32 %v528, %v530
  %v533 = vadd.f32 %v529, %v531
  %534 = vrot.lane.b32.xlu0 %v340, 1
  %v535 = vpop.permute.xlu0 %534
  %536 = vrot.lane.b32.xlu0 %v342, 1
  %v537 = vpop.permute.xlu0 %536
  %vm538 = vcmp.lt.s32.totalorder %v355, 1
  %v539 = vsel %vm538, %v535, %v537
  %v540 = vsel %vm538, %v537, %v535
  %541 = vrot.lane.b32.xlu0 %v346, 1
  %v542 = vpop.permute.xlu0 %541
  %543 = vrot.lane.b32.xlu0 %v348, 1
  %v544 = vpop.permute.xlu0 %543
  %v545 = vsel %vm538, %v542, %v544
  %v546 = vsel %vm538, %v544, %v542
  %s547 = scalar_lea.vmem %s4, 3
  %v548 = vld [vmem:[%s547] ss:$8 sm:$0x3]
  %v550 = vlaneseq
  %v551 = vshrl.u32 %v550, 7
  %v552 = vsub.s32 0, %v551
  %v553 = vrot.slane %v548, %v552
  %v554 = vlaneseq
  %v555 = vshrl.u32 %v554, 7
  %v556 = vsub.s32 1, %v555
  %v557 = vrot.slane %v548, %v556
  %v560 = vmul.f32 %v540, %v553
  %v561 = vmul.f32 %v539, %v557
  %562 = vset.pattern.permute.xlu0 3
  %563 = vperm.xlu0 %562, %v248
  %v564 = vpop.permute.xlu0 %563
  %v566 = vadd.f32 %v560, %v564
  %v567 = vadd.f32 %v561, %v564
  %v568 = vmul.f32 %v546, %v553
  %v569 = vmul.f32 %v545, %v557
  %v570 = vmul.f32 %v334, %v566
  %v571 = vmul.f32 %v336, %v567
  %v572 = vmax.f32 %v510, %v570
  %v573 = vmax.f32 %v511, %v571
  %v574 = vsub.f32 %v510, %v572
  %v575 = vsub.f32 %v511, %v573
  %v576 = vmul.f32 %v574, 1.442695
  %v577 = vpow.pop %v576
  %v578 = vmul.f32 %v575, 1.442695
  %v579 = vpow.pop %v578
  %v580 = vsub.f32 %v570, %v572
  %v581 = vsub.f32 %v571, %v573
  %v582 = vmul.f32 %v580, 1.442695
  %v583 = vpow.pop %v582
  %v584 = vmul.f32 %v581, 1.442695
  %v585 = vpow.pop %v584
  %v586 = vmul.f32 %v526, %v577
  %v587 = vmul.f32 %v527, %v579
  %v588 = vadd.f32 %v586, %v583
  %v589 = vadd.f32 %v587, %v585
  %v590 = vmul.f32 %v532, %v577
  %v591 = vmul.f32 %v533, %v579
  %v592 = vmul.f32 %v583, %v568
  %v593 = vmul.f32 %v585, %v569
  %v594 = vadd.f32 %v590, %v592
  %v595 = vadd.f32 %v591, %v593
  %s596 = scalar_lea.vmem %s4, 4
  %v597 = vld [vmem:[%s596] ss:$8 sm:$0x3]
  %v599 = vlaneseq
  %v600 = vshrl.u32 %v599, 7
  %v601 = vsub.s32 0, %v600
  %v602 = vrot.slane %v597, %v601
  %v603 = vlaneseq
  %v604 = vshrl.u32 %v603, 7
  %v605 = vsub.s32 1, %v604
  %v606 = vrot.slane %v597, %v605
  %v609 = vmul.f32 %v340, %v602
  %v610 = vmul.f32 %v342, %v606
  %611 = vset.pattern.permute.xlu0 4
  %612 = vperm.xlu0 %611, %v248
  %v613 = vpop.permute.xlu0 %612
  %v615 = vadd.f32 %v609, %v613
  %v616 = vadd.f32 %v610, %v613
  %v617 = vmul.f32 %v346, %v602
  %v618 = vmul.f32 %v348, %v606
  %v619 = vmul.f32 %v334, %v615
  %v620 = vmul.f32 %v336, %v616
  %v621 = vmax.f32 %v572, %v619
  %v622 = vmax.f32 %v573, %v620
  %v623 = vsub.f32 %v572, %v621
  %v624 = vsub.f32 %v573, %v622
  %v625 = vmul.f32 %v623, 1.442695
  %v626 = vpow.pop %v625
  %v627 = vmul.f32 %v624, 1.442695
  %v628 = vpow.pop %v627
  %v629 = vsub.f32 %v619, %v621
  %v630 = vsub.f32 %v620, %v622
  %v631 = vmul.f32 %v629, 1.442695
  %v632 = vpow.pop %v631
  %v633 = vmul.f32 %v630, 1.442695
  %v634 = vpow.pop %v633
  %v635 = vmul.f32 %v588, %v626
  %v636 = vmul.f32 %v589, %v628
  %v637 = vadd.f32 %v635, %v632
  %v638 = vadd.f32 %v636, %v634
  %v639 = vmul.f32 %v594, %v626
  %v640 = vmul.f32 %v595, %v628
  %v641 = vmul.f32 %v632, %v617
  %v642 = vmul.f32 %v634, %v618
  %v643 = vadd.f32 %v639, %v641
  %v644 = vadd.f32 %v640, %v642
  %645 = vrot.lane.b32.xlu0 %v340, 127
  %v646 = vpop.permute.xlu0 %645
  %647 = vrot.lane.b32.xlu0 %v342, 127
  %v648 = vpop.permute.xlu0 %647
  %vm649 = vcmp.lt.s32.totalorder %v355, 127
  %v650 = vsel %vm649, %v646, %v648
  %v651 = vsel %vm649, %v648, %v646
  %652 = vrot.lane.b32.xlu0 %v346, 127
  %v653 = vpop.permute.xlu0 %652
  %654 = vrot.lane.b32.xlu0 %v348, 127
  %v655 = vpop.permute.xlu0 %654
  %v656 = vsel %vm649, %v653, %v655
  %v657 = vsel %vm649, %v655, %v653
  %s658 = scalar_lea.vmem %s4, 5
  %v659 = vld [vmem:[%s658] ss:$8 sm:$0x3]
  %v661 = vlaneseq
  %v662 = vshrl.u32 %v661, 7
  %v663 = vsub.s32 0, %v662
  %v664 = vrot.slane %v659, %v663
  %v665 = vlaneseq
  %v666 = vshrl.u32 %v665, 7
  %v667 = vsub.s32 1, %v666
  %v668 = vrot.slane %v659, %v667
  %v671 = vmul.f32 %v650, %v664
  %v672 = vmul.f32 %v651, %v668
  %673 = vset.pattern.permute.xlu0 5
  %674 = vperm.xlu0 %673, %v248
  %v675 = vpop.permute.xlu0 %674
  %v677 = vadd.f32 %v671, %v675
  %v678 = vadd.f32 %v672, %v675
  %v679 = vmul.f32 %v656, %v664
  %v680 = vmul.f32 %v657, %v668
  %v681 = vmul.f32 %v334, %v677
  %v682 = vmul.f32 %v336, %v678
  %v683 = vmax.f32 %v621, %v681
  %v684 = vmax.f32 %v622, %v682
  %v685 = vsub.f32 %v621, %v683
  %v686 = vsub.f32 %v622, %v684
  %v687 = vmul.f32 %v685, 1.442695
  %v688 = vpow.pop %v687
  %v689 = vmul.f32 %v686, 1.442695
  %v690 = vpow.pop %v689
  %v691 = vsub.f32 %v681, %v683
  %v692 = vsub.f32 %v682, %v684
  %v693 = vmul.f32 %v691, 1.442695
  %v694 = vpow.pop %v693
  %v695 = vmul.f32 %v692, 1.442695
  %v696 = vpow.pop %v695
  %v697 = vmul.f32 %v637, %v688
  %v698 = vmul.f32 %v638, %v690
  %v699 = vadd.f32 %v697, %v694
  %v700 = vadd.f32 %v698, %v696
  %v701 = vmul.f32 %v643, %v688
  %v702 = vmul.f32 %v644, %v690
  %v703 = vmul.f32 %v694, %v679
  %v704 = vmul.f32 %v696, %v680
  %v705 = vadd.f32 %v701, %v703
  %v706 = vadd.f32 %v702, %v704
  %707 = vrot.lane.b32.xlu0 %v340, 113
  %v708 = vpop.permute.xlu0 %707
  %709 = vrot.lane.b32.xlu0 %v342, 113
  %v710 = vpop.permute.xlu0 %709
  %vm711 = vcmp.lt.s32.totalorder %v355, 113
  %v712 = vsel %vm711, %v708, %v710
  %v713 = vsel %vm711, %v710, %v708
  %714 = vrot.lane.b32.xlu0 %v346, 113
  %v715 = vpop.permute.xlu0 %714
  %716 = vrot.lane.b32.xlu0 %v348, 113
  %v717 = vpop.permute.xlu0 %716
  %v718 = vsel %vm711, %v715, %v717
  %v719 = vsel %vm711, %v717, %v715
  %s720 = scalar_lea.vmem %s4, 6
  %v721 = vld [vmem:[%s720] ss:$8 sm:$0x3]
  %v723 = vlaneseq
  %v724 = vshrl.u32 %v723, 7
  %v725 = vsub.s32 0, %v724
  %v726 = vrot.slane %v721, %v725
  %v727 = vlaneseq
  %v728 = vshrl.u32 %v727, 7
  %v729 = vsub.s32 1, %v728
  %v730 = vrot.slane %v721, %v729
  %v733 = vmul.f32 %v712, %v726
  %v734 = vmul.f32 %v713, %v730
  %735 = vset.pattern.permute.xlu0 6
  %736 = vperm.xlu0 %735, %v248
  %v737 = vpop.permute.xlu0 %736
  %v739 = vadd.f32 %v733, %v737
  %v740 = vadd.f32 %v734, %v737
  %v741 = vmul.f32 %v718, %v726
  %v742 = vmul.f32 %v719, %v730
  %v743 = vmul.f32 %v334, %v739
  %v744 = vmul.f32 %v336, %v740
  %v745 = vmax.f32 %v683, %v743
  %v746 = vmax.f32 %v684, %v744
  %v747 = vsub.f32 %v683, %v745
  %v748 = vsub.f32 %v684, %v746
  %v749 = vmul.f32 %v747, 1.442695
  %v750 = vpow.pop %v749
  %v751 = vmul.f32 %v748, 1.442695
  %v752 = vpow.pop %v751
  %v753 = vsub.f32 %v743, %v745
  %v754 = vsub.f32 %v744, %v746
  %v755 = vmul.f32 %v753, 1.442695
  %v756 = vpow.pop %v755
  %v757 = vmul.f32 %v754, 1.442695
  %v758 = vpow.pop %v757
  %v759 = vmul.f32 %v699, %v750
  %v760 = vmul.f32 %v700, %v752
  %v761 = vadd.f32 %v759, %v756
  %v762 = vadd.f32 %v760, %v758
  %v763 = vmul.f32 %v705, %v750
  %v764 = vmul.f32 %v706, %v752
  %v765 = vmul.f32 %v756, %v741
  %v766 = vmul.f32 %v758, %v742
  %v767 = vadd.f32 %v763, %v765
  %v768 = vadd.f32 %v764, %v766
  %769 = vrot.lane.b32.xlu0 %v340, 112
  %v770 = vpop.permute.xlu0 %769
  %771 = vrot.lane.b32.xlu0 %v342, 112
  %v772 = vpop.permute.xlu0 %771
  %vm773 = vcmp.lt.s32.totalorder %v355, 112
  %v774 = vsel %vm773, %v770, %v772
  %v775 = vsel %vm773, %v772, %v770
  %776 = vrot.lane.b32.xlu0 %v346, 112
  %v777 = vpop.permute.xlu0 %776
  %778 = vrot.lane.b32.xlu0 %v348, 112
  %v779 = vpop.permute.xlu0 %778
  %v780 = vsel %vm773, %v777, %v779
  %v781 = vsel %vm773, %v779, %v777
  %s782 = scalar_lea.vmem %s4, 7
  %v783 = vld [vmem:[%s782] ss:$8 sm:$0x3]
  %v785 = vlaneseq
  %v786 = vshrl.u32 %v785, 7
  %v787 = vsub.s32 0, %v786
  %v788 = vrot.slane %v783, %v787
  %v789 = vlaneseq
  %v790 = vshrl.u32 %v789, 7
  %v791 = vsub.s32 1, %v790
  %v792 = vrot.slane %v783, %v791
  %v795 = vmul.f32 %v774, %v788
  %v796 = vmul.f32 %v775, %v792
  %797 = vset.pattern.permute.xlu0 7
  %798 = vperm.xlu0 %797, %v248
  %v799 = vpop.permute.xlu0 %798
  %v801 = vadd.f32 %v795, %v799
  %v802 = vadd.f32 %v796, %v799
  %v803 = vmul.f32 %v780, %v788
  %v804 = vmul.f32 %v781, %v792
  %v805 = vmul.f32 %v334, %v801
  %v806 = vmul.f32 %v336, %v802
  %v807 = vmax.f32 %v745, %v805
  %v808 = vmax.f32 %v746, %v806
  %v809 = vsub.f32 %v745, %v807
  %v810 = vsub.f32 %v746, %v808
  %v811 = vmul.f32 %v809, 1.442695
  %v812 = vpow.pop %v811
  %v813 = vmul.f32 %v810, 1.442695
  %v814 = vpow.pop %v813
  %v815 = vsub.f32 %v805, %v807
  %v816 = vsub.f32 %v806, %v808
  %v817 = vmul.f32 %v815, 1.442695
  %v818 = vpow.pop %v817
  %v819 = vmul.f32 %v816, 1.442695
  %v820 = vpow.pop %v819
  %v821 = vmul.f32 %v761, %v812
  %v822 = vmul.f32 %v762, %v814
  %v823 = vadd.f32 %v821, %v818
  %v824 = vadd.f32 %v822, %v820
  %v825 = vmul.f32 %v767, %v812
  %v826 = vmul.f32 %v768, %v814
  %v827 = vmul.f32 %v818, %v803
  %v828 = vmul.f32 %v820, %v804
  %v829 = vadd.f32 %v825, %v827
  %v830 = vadd.f32 %v826, %v828
  %831 = vrot.lane.b32.xlu0 %v340, 111
  %v832 = vpop.permute.xlu0 %831
  %833 = vrot.lane.b32.xlu0 %v342, 111
  %v834 = vpop.permute.xlu0 %833
  %vm835 = vcmp.lt.s32.totalorder %v355, 111
  %v836 = vsel %vm835, %v832, %v834
  %v837 = vsel %vm835, %v834, %v832
  %838 = vrot.lane.b32.xlu0 %v346, 111
  %v839 = vpop.permute.xlu0 %838
  %840 = vrot.lane.b32.xlu0 %v348, 111
  %v841 = vpop.permute.xlu0 %840
  %v842 = vsel %vm835, %v839, %v841
  %v843 = vsel %vm835, %v841, %v839
  %s844 = scalar_lea.vmem %s4, 16
  %v845 = vld [vmem:[%s844] ss:$8 sm:$0x3]
  %v847 = vlaneseq
  %v848 = vshrl.u32 %v847, 7
  %v849 = vsub.s32 0, %v848
  %v850 = vrot.slane %v845, %v849
  %v851 = vlaneseq
  %v852 = vshrl.u32 %v851, 7
  %v853 = vsub.s32 1, %v852
  %v854 = vrot.slane %v845, %v853
  %v857 = vmul.f32 %v836, %v850
  %v858 = vmul.f32 %v837, %v854
  %859 = vset.pattern.permute.xlu0 8
  %860 = vperm.xlu0 %859, %v248
  %v861 = vpop.permute.xlu0 %860
  %v863 = vadd.f32 %v857, %v861
  %v864 = vadd.f32 %v858, %v861
  %v865 = vmul.f32 %v842, %v850
  %v866 = vmul.f32 %v843, %v854
  %v867 = vmul.f32 %v334, %v863
  %v868 = vmul.f32 %v336, %v864
  %v869 = vmax.f32 %v807, %v867
  %v870 = vmax.f32 %v808, %v868
  %v871 = vsub.f32 %v807, %v869
  %v872 = vsub.f32 %v808, %v870
  %v873 = vmul.f32 %v871, 1.442695
  %v874 = vpow.pop %v873
  %v875 = vmul.f32 %v872, 1.442695
  %v876 = vpow.pop %v875
  %v877 = vsub.f32 %v867, %v869
  %v878 = vsub.f32 %v868, %v870
  %v879 = vmul.f32 %v877, 1.442695
  %v880 = vpow.pop %v879
  %v881 = vmul.f32 %v878, 1.442695
  %v882 = vpow.pop %v881
  %v883 = vmul.f32 %v823, %v874
  %v884 = vmul.f32 %v824, %v876
  %v885 = vadd.f32 %v883, %v880
  %v886 = vadd.f32 %v884, %v882
  %v887 = vmul.f32 %v829, %v874
  %v888 = vmul.f32 %v830, %v876
  %v889 = vmul.f32 %v880, %v865
  %v890 = vmul.f32 %v882, %v866
  %v891 = vadd.f32 %v887, %v889
  %v892 = vadd.f32 %v888, %v890
  %v893 = vrcp.pop %v885
  %v894 = vrcp.pop %v886
  %v895 = vmul.f32 %v891, %v893
  %v896 = vmul.f32 %v892, %v894
  %897 = vst [vmem:[%s5] sm:$0xff] %v895
  %898 = vst [vmem:[%s5 + $0x8] sm:$0xff] %v896
  %v899 = vmul.f32 %v223, %v243
  %v900 = vmul.f32 %v224, %v243
  %v901 = vmul.f32 %v225, %v244
  %v902 = vmul.f32 %v226, %v244
  %v903 = vmax.f32 %v899, 0.0
  %v904 = vmax.f32 %v900, 0.0
  %v905 = vmax.f32 %v901, 0.0
  %v906 = vmax.f32 %v902, 0.0
  %907 = vmatprep.subr.mxu0 %v904
  %908 = vmatpush1.msra.mxu0 %v903
  %909 = vmatprep.subr.mxu0 %v906
  %910 = vmatpush1.msra.mxu0 %v905
  %911 = vmatprep.subr.mxu0 0.0
  %912 = vmatpush1.msra.mxu0 0.0
  %913 = vmatprep.subr.mxu0 0.0
  %914 = vmatpush1.msra.mxu0 0.0
  %915 = vmatprep.subr.mxu0 0.0
  %916 = vmatpush1.msra.mxu0 0.0
  %917 = vmatprep.subr.mxu0 0.0
  %918 = vmatpush1.msra.mxu0 0.0
  %919 = vmatprep.subr.mxu0 0.0
  %920 = vmatpush1.msra.mxu0 0.0
  %921 = vmatprep.subr.mxu0 0.0
  %922 = vmatpush1.msra.mxu0 0.0
  %923 = vmatprep.subr.mxu0 0.0
  %924 = vmatpush1.msra.mxu0 0.0
  %925 = vmatprep.subr.mxu0 0.0
  %926 = vmatpush1.msra.mxu0 0.0
  %927 = vmatprep.subr.mxu0 0.0
  %928 = vmatpush1.msra.mxu0 0.0
  %929 = vmatprep.subr.mxu0 0.0
  %930 = vmatpush1.msra.mxu0 0.0
  %931 = vmatprep.subr.mxu0 0.0
  %932 = vmatpush1.msra.mxu0 0.0
  %933 = vmatprep.subr.mxu0 0.0
  %934 = vmatpush1.msra.mxu0 0.0
  %935 = vmatprep.subr.mxu0 0.0
  %936 = vmatpush1.msra.mxu0 0.0
  %937 = vmatprep.subr.mxu0 0.0
  %938 = vmatpush1.msra.mxu0 0.0
  %939 = vmatprep.subr.mxu0 0.0
  %940 = vmatpush1.msra.mxu0 0.0
  %941 = vmatprep.subr.mxu0 0.0
  %942 = vmatpush1.msra.mxu0 0.0
  %943 = vmatprep.subr.mxu0 0.0
  %944 = vmatpush1.msra.mxu0 0.0
  %945 = vmatprep.subr.mxu0 0.0
  %946 = vmatpush1.msra.mxu0 0.0
  %947 = vmatprep.subr.mxu0 0.0
  %948 = vmatpush1.msra.mxu0 0.0
  %949 = vmatprep.subr.mxu0 0.0
  %950 = vmatpush1.msra.mxu0 0.0
  %951 = vmatprep.subr.mxu0 0.0
  %952 = vmatpush1.msra.mxu0 0.0
  %953 = vmatprep.subr.mxu0 0.0
  %954 = vmatpush1.msra.mxu0 0.0
  %955 = vmatprep.subr.mxu0 0.0
  %956 = vmatpush1.msra.mxu0 0.0
  %957 = vmatprep.subr.mxu0 0.0
  %958 = vmatpush1.msra.mxu0 0.0
  %959 = vmatprep.subr.mxu0 0.0
  %960 = vmatpush1.msra.mxu0 0.0
  %961 = vmatprep.subr.mxu0 0.0
  %962 = vmatpush1.msra.mxu0 0.0
  %963 = vmatprep.subr.mxu0 0.0
  %964 = vmatpush1.msra.mxu0 0.0
  %965 = vmatprep.subr.mxu0 0.0
  %966 = vmatpush1.msra.mxu0 0.0
  %967 = vmatprep.subr.mxu0 0.0
  %968 = vmatpush1.msra.mxu0 0.0
  %969 = vmatprep.subr.mxu0 0.0
  %970 = vmatpush1.msra.mxu0 0.0
  %971 = vmatprep.mubr.f32.mxu0 0.0
  %972 = vmatmul.mubr.f32.gmra.mrb[0].mxu0 %v259
  %v973 = vpop.f32.mrb[0].mxu0
  %v974 = vadd.f32 0.0, %v973
  %v975 = vpop.f32.mrb[0].mxu0
  %v976 = vadd.f32 0.0, %v975
  %977 = vmatprep.mubr.f32.mxu0 0.0
  %978 = vmatmul.mubr.f32.gmra.mrb[0].mxu0 %v262
  %v979 = vpop.f32.mrb[0].mxu0
  %v980 = vadd.f32 0.0, %v979
  %v981 = vpop.f32.mrb[0].mxu0
  %v982 = vadd.f32 0.0, %v981
  %983 = vmatprep.mubr.f32.mxu0 0.0
  %984 = vmatmul.mubr.f32.gmra.mrb[0].mxu0 %v265
  %v985 = vpop.f32.mrb[0].mxu0
  %v986 = vadd.f32 0.0, %v985
  %v987 = vpop.f32.mrb[0].mxu0
  %v988 = vadd.f32 0.0, %v987
  %989 = vdwg.mxu0
  %990 = vrot.lane.b32.xlu0 %v980, 17
  %v991 = vpop.permute.xlu0 %990
  %992 = vrot.lane.b32.xlu0 %v982, 17
  %v993 = vpop.permute.xlu0 %992
  %v994 = vsel %vm356, %v991, %v993
  %v995 = vsel %vm356, %v993, %v991
  %996 = vrot.lane.b32.xlu0 %v986, 17
  %v997 = vpop.permute.xlu0 %996
  %998 = vrot.lane.b32.xlu0 %v988, 17
  %v999 = vpop.permute.xlu0 %998
  %v1000 = vsel %vm356, %v997, %v999
  %v1001 = vsel %vm356, %v999, %v997
  %v1002 = vld [vmem:[%s4] ss:$8 sm:$0x3]
  %v1004 = vlaneseq
  %v1005 = vshrl.u32 %v1004, 7
  %v1006 = vsub.s32 0, %v1005
  %v1007 = vrot.slane %v1002, %v1006
  %v1008 = vlaneseq
  %v1009 = vshrl.u32 %v1008, 7
  %v1010 = vsub.s32 1, %v1009
  %v1011 = vrot.slane %v1002, %v1010
  %v1014 = vmul.f32 %v995, %v1007
  %v1015 = vmul.f32 %v994, %v1011
  %v1016 = vadd.f32 %v1014, %v382
  %v1017 = vadd.f32 %v1015, %v382
  %v1018 = vmul.f32 %v1001, %v1007
  %v1019 = vmul.f32 %v1000, %v1011
  %v1020 = vmul.f32 %v974, %v1016
  %v1021 = vmul.f32 %v976, %v1017
  %v1022 = vsub.f32 -inf, %v1020
  %v1023 = vsub.f32 -inf, %v1021
  %v1024 = vmul.f32 %v1022, 1.442695
  %v1025 = vpow.pop %v1024
  %v1026 = vmul.f32 %v1023, 1.442695
  %v1027 = vpow.pop %v1026
  %v1028 = vsub.f32 %v1020, %v1020
  %v1029 = vsub.f32 %v1021, %v1021
  %v1030 = vmul.f32 %v1028, 1.442695
  %v1031 = vpow.pop %v1030
  %v1032 = vmul.f32 %v1029, 1.442695
  %v1033 = vpow.pop %v1032
  %v1034 = vmul.f32 %v1025, 0.0
  %v1035 = vmul.f32 %v1027, 0.0
  %v1036 = vadd.f32 %v1034, %v1031
  %v1037 = vadd.f32 %v1035, %v1033
  %v1038 = vmul.f32 %v1031, %v1018
  %v1039 = vmul.f32 %v1033, %v1019
  %v1040 = vadd.f32 %v1034, %v1038
  %v1041 = vadd.f32 %v1035, %v1039
  %1042 = vrot.lane.b32.xlu0 %v980, 16
  %v1043 = vpop.permute.xlu0 %1042
  %1044 = vrot.lane.b32.xlu0 %v982, 16
  %v1045 = vpop.permute.xlu0 %1044
  %v1046 = vsel %vm414, %v1043, %v1045
  %v1047 = vsel %vm414, %v1045, %v1043
  %1048 = vrot.lane.b32.xlu0 %v986, 16
  %v1049 = vpop.permute.xlu0 %1048
  %1050 = vrot.lane.b32.xlu0 %v988, 16
  %v1051 = vpop.permute.xlu0 %1050
  %v1052 = vsel %vm414, %v1049, %v1051
  %v1053 = vsel %vm414, %v1051, %v1049
  %v1054 = vld [vmem:[%s423] ss:$8 sm:$0x3]
  %v1056 = vlaneseq
  %v1057 = vshrl.u32 %v1056, 7
  %v1058 = vsub.s32 0, %v1057
  %v1059 = vrot.slane %v1054, %v1058
  %v1060 = vlaneseq
  %v1061 = vshrl.u32 %v1060, 7
  %v1062 = vsub.s32 1, %v1061
  %v1063 = vrot.slane %v1054, %v1062
  %v1066 = vmul.f32 %v1047, %v1059
  %v1067 = vmul.f32 %v1046, %v1063
  %v1068 = vadd.f32 %v1066, %v440
  %v1069 = vadd.f32 %v1067, %v440
  %v1070 = vmul.f32 %v1053, %v1059
  %v1071 = vmul.f32 %v1052, %v1063
  %v1072 = vmul.f32 %v974, %v1068
  %v1073 = vmul.f32 %v976, %v1069
  %v1074 = vmax.f32 %v1020, %v1072
  %v1075 = vmax.f32 %v1021, %v1073
  %v1076 = vsub.f32 %v1020, %v1074
  %v1077 = vsub.f32 %v1021, %v1075
  %v1078 = vmul.f32 %v1076, 1.442695
  %v1079 = vpow.pop %v1078
  %v1080 = vmul.f32 %v1077, 1.442695
  %v1081 = vpow.pop %v1080
  %v1082 = vsub.f32 %v1072, %v1074
  %v1083 = vsub.f32 %v1073, %v1075
  %v1084 = vmul.f32 %v1082, 1.442695
  %v1085 = vpow.pop %v1084
  %v1086 = vmul.f32 %v1083, 1.442695
  %v1087 = vpow.pop %v1086
  %v1088 = vmul.f32 %v1036, %v1079
  %v1089 = vmul.f32 %v1037, %v1081
  %v1090 = vadd.f32 %v1088, %v1085
  %v1091 = vadd.f32 %v1089, %v1087
  %v1092 = vmul.f32 %v1040, %v1079
  %v1093 = vmul.f32 %v1041, %v1081
  %v1094 = vmul.f32 %v1085, %v1070
  %v1095 = vmul.f32 %v1087, %v1071
  %v1096 = vadd.f32 %v1092, %v1094
  %v1097 = vadd.f32 %v1093, %v1095
  %1098 = vrot.lane.b32.xlu0 %v980, 15
  %v1099 = vpop.permute.xlu0 %1098
  %1100 = vrot.lane.b32.xlu0 %v982, 15
  %v1101 = vpop.permute.xlu0 %1100
  %v1102 = vsel %vm476, %v1099, %v1101
  %v1103 = vsel %vm476, %v1101, %v1099
  %1104 = vrot.lane.b32.xlu0 %v986, 15
  %v1105 = vpop.permute.xlu0 %1104
  %1106 = vrot.lane.b32.xlu0 %v988, 15
  %v1107 = vpop.permute.xlu0 %1106
  %v1108 = vsel %vm476, %v1105, %v1107
  %v1109 = vsel %vm476, %v1107, %v1105
  %v1110 = vld [vmem:[%s485] ss:$8 sm:$0x3]
  %v1112 = vlaneseq
  %v1113 = vshrl.u32 %v1112, 7
  %v1114 = vsub.s32 0, %v1113
  %v1115 = vrot.slane %v1110, %v1114
  %v1116 = vlaneseq
  %v1117 = vshrl.u32 %v1116, 7
  %v1118 = vsub.s32 1, %v1117
  %v1119 = vrot.slane %v1110, %v1118
  %v1122 = vmul.f32 %v1103, %v1115
  %v1123 = vmul.f32 %v1102, %v1119
  %v1124 = vadd.f32 %v1122, %v502
  %v1125 = vadd.f32 %v1123, %v502
  %v1126 = vmul.f32 %v1109, %v1115
  %v1127 = vmul.f32 %v1108, %v1119
  %v1128 = vmul.f32 %v974, %v1124
  %v1129 = vmul.f32 %v976, %v1125
  %v1130 = vmax.f32 %v1074, %v1128
  %v1131 = vmax.f32 %v1075, %v1129
  %v1132 = vsub.f32 %v1074, %v1130
  %v1133 = vsub.f32 %v1075, %v1131
  %v1134 = vmul.f32 %v1132, 1.442695
  %v1135 = vpow.pop %v1134
  %v1136 = vmul.f32 %v1133, 1.442695
  %v1137 = vpow.pop %v1136
  %v1138 = vsub.f32 %v1128, %v1130
  %v1139 = vsub.f32 %v1129, %v1131
  %v1140 = vmul.f32 %v1138, 1.442695
  %v1141 = vpow.pop %v1140
  %v1142 = vmul.f32 %v1139, 1.442695
  %v1143 = vpow.pop %v1142
  %v1144 = vmul.f32 %v1090, %v1135
  %v1145 = vmul.f32 %v1091, %v1137
  %v1146 = vadd.f32 %v1144, %v1141
  %v1147 = vadd.f32 %v1145, %v1143
  %v1148 = vmul.f32 %v1096, %v1135
  %v1149 = vmul.f32 %v1097, %v1137
  %v1150 = vmul.f32 %v1141, %v1126
  %v1151 = vmul.f32 %v1143, %v1127
  %v1152 = vadd.f32 %v1148, %v1150
  %v1153 = vadd.f32 %v1149, %v1151
  %1154 = vrot.lane.b32.xlu0 %v980, 1
  %v1155 = vpop.permute.xlu0 %1154
  %1156 = vrot.lane.b32.xlu0 %v982, 1
  %v1157 = vpop.permute.xlu0 %1156
  %v1158 = vsel %vm538, %v1155, %v1157
  %v1159 = vsel %vm538, %v1157, %v1155
  %1160 = vrot.lane.b32.xlu0 %v986, 1
  %v1161 = vpop.permute.xlu0 %1160
  %1162 = vrot.lane.b32.xlu0 %v988, 1
  %v1163 = vpop.permute.xlu0 %1162
  %v1164 = vsel %vm538, %v1161, %v1163
  %v1165 = vsel %vm538, %v1163, %v1161
  %v1166 = vld [vmem:[%s547] ss:$8 sm:$0x3]
  %v1168 = vlaneseq
  %v1169 = vshrl.u32 %v1168, 7
  %v1170 = vsub.s32 0, %v1169
  %v1171 = vrot.slane %v1166, %v1170
  %v1172 = vlaneseq
  %v1173 = vshrl.u32 %v1172, 7
  %v1174 = vsub.s32 1, %v1173
  %v1175 = vrot.slane %v1166, %v1174
  %v1178 = vmul.f32 %v1159, %v1171
  %v1179 = vmul.f32 %v1158, %v1175
  %v1180 = vadd.f32 %v1178, %v564
  %v1181 = vadd.f32 %v1179, %v564
  %v1182 = vmul.f32 %v1165, %v1171
  %v1183 = vmul.f32 %v1164, %v1175
  %v1184 = vmul.f32 %v974, %v1180
  %v1185 = vmul.f32 %v976, %v1181
  %v1186 = vmax.f32 %v1130, %v1184
  %v1187 = vmax.f32 %v1131, %v1185
  %v1188 = vsub.f32 %v1130, %v1186
  %v1189 = vsub.f32 %v1131, %v1187
  %v1190 = vmul.f32 %v1188, 1.442695
  %v1191 = vpow.pop %v1190
  %v1192 = vmul.f32 %v1189, 1.442695
  %v1193 = vpow.pop %v1192
  %v1194 = vsub.f32 %v1184, %v1186
  %v1195 = vsub.f32 %v1185, %v1187
  %v1196 = vmul.f32 %v1194, 1.442695
  %v1197 = vpow.pop %v1196
  %v1198 = vmul.f32 %v1195, 1.442695
  %v1199 = vpow.pop %v1198
  %v1200 = vmul.f32 %v1146, %v1191
  %v1201 = vmul.f32 %v1147, %v1193
  %v1202 = vadd.f32 %v1200, %v1197
  %v1203 = vadd.f32 %v1201, %v1199
  %v1204 = vmul.f32 %v1152, %v1191
  %v1205 = vmul.f32 %v1153, %v1193
  %v1206 = vmul.f32 %v1197, %v1182
  %v1207 = vmul.f32 %v1199, %v1183
  %v1208 = vadd.f32 %v1204, %v1206
  %v1209 = vadd.f32 %v1205, %v1207
  %v1210 = vld [vmem:[%s596] ss:$8 sm:$0x3]
  %v1212 = vlaneseq
  %v1213 = vshrl.u32 %v1212, 7
  %v1214 = vsub.s32 0, %v1213
  %v1215 = vrot.slane %v1210, %v1214
  %v1216 = vlaneseq
  %v1217 = vshrl.u32 %v1216, 7
  %v1218 = vsub.s32 1, %v1217
  %v1219 = vrot.slane %v1210, %v1218
  %v1222 = vmul.f32 %v980, %v1215
  %v1223 = vmul.f32 %v982, %v1219
  %v1224 = vadd.f32 %v1222, %v613
  %v1225 = vadd.f32 %v1223, %v613
  %v1226 = vmul.f32 %v986, %v1215
  %v1227 = vmul.f32 %v988, %v1219
  %v1228 = vmul.f32 %v974, %v1224
  %v1229 = vmul.f32 %v976, %v1225
  %v1230 = vmax.f32 %v1186, %v1228
  %v1231 = vmax.f32 %v1187, %v1229
  %v1232 = vsub.f32 %v1186, %v1230
  %v1233 = vsub.f32 %v1187, %v1231
  %v1234 = vmul.f32 %v1232, 1.442695
  %v1235 = vpow.pop %v1234
  %v1236 = vmul.f32 %v1233, 1.442695
  %v1237 = vpow.pop %v1236
  %v1238 = vsub.f32 %v1228, %v1230
  %v1239 = vsub.f32 %v1229, %v1231
  %v1240 = vmul.f32 %v1238, 1.442695
  %v1241 = vpow.pop %v1240
  %v1242 = vmul.f32 %v1239, 1.442695
  %v1243 = vpow.pop %v1242
  %v1244 = vmul.f32 %v1202, %v1235
  %v1245 = vmul.f32 %v1203, %v1237
  %v1246 = vadd.f32 %v1244, %v1241
  %v1247 = vadd.f32 %v1245, %v1243
  %v1248 = vmul.f32 %v1208, %v1235
  %v1249 = vmul.f32 %v1209, %v1237
  %v1250 = vmul.f32 %v1241, %v1226
  %v1251 = vmul.f32 %v1243, %v1227
  %v1252 = vadd.f32 %v1248, %v1250
  %v1253 = vadd.f32 %v1249, %v1251
  %1254 = vrot.lane.b32.xlu0 %v980, 127
  %v1255 = vpop.permute.xlu0 %1254
  %1256 = vrot.lane.b32.xlu0 %v982, 127
  %v1257 = vpop.permute.xlu0 %1256
  %v1258 = vsel %vm649, %v1255, %v1257
  %v1259 = vsel %vm649, %v1257, %v1255
  %1260 = vrot.lane.b32.xlu0 %v986, 127
  %v1261 = vpop.permute.xlu0 %1260
  %1262 = vrot.lane.b32.xlu0 %v988, 127
  %v1263 = vpop.permute.xlu0 %1262
  %v1264 = vsel %vm649, %v1261, %v1263
  %v1265 = vsel %vm649, %v1263, %v1261
  %v1266 = vld [vmem:[%s658] ss:$8 sm:$0x3]
  %v1268 = vlaneseq
  %v1269 = vshrl.u32 %v1268, 7
  %v1270 = vsub.s32 0, %v1269
  %v1271 = vrot.slane %v1266, %v1270
  %v1272 = vlaneseq
  %v1273 = vshrl.u32 %v1272, 7
  %v1274 = vsub.s32 1, %v1273
  %v1275 = vrot.slane %v1266, %v1274
  %v1278 = vmul.f32 %v1258, %v1271
  %v1279 = vmul.f32 %v1259, %v1275
  %v1280 = vadd.f32 %v1278, %v675
  %v1281 = vadd.f32 %v1279, %v675
  %v1282 = vmul.f32 %v1264, %v1271
  %v1283 = vmul.f32 %v1265, %v1275
  %v1284 = vmul.f32 %v974, %v1280
  %v1285 = vmul.f32 %v976, %v1281
  %v1286 = vmax.f32 %v1230, %v1284
  %v1287 = vmax.f32 %v1231, %v1285
  %v1288 = vsub.f32 %v1230, %v1286
  %v1289 = vsub.f32 %v1231, %v1287
  %v1290 = vmul.f32 %v1288, 1.442695
  %v1291 = vpow.pop %v1290
  %v1292 = vmul.f32 %v1289, 1.442695
  %v1293 = vpow.pop %v1292
  %v1294 = vsub.f32 %v1284, %v1286
  %v1295 = vsub.f32 %v1285, %v1287
  %v1296 = vmul.f32 %v1294, 1.442695
  %v1297 = vpow.pop %v1296
  %v1298 = vmul.f32 %v1295, 1.442695
  %v1299 = vpow.pop %v1298
  %v1300 = vmul.f32 %v1246, %v1291
  %v1301 = vmul.f32 %v1247, %v1293
  %v1302 = vadd.f32 %v1300, %v1297
  %v1303 = vadd.f32 %v1301, %v1299
  %v1304 = vmul.f32 %v1252, %v1291
  %v1305 = vmul.f32 %v1253, %v1293
  %v1306 = vmul.f32 %v1297, %v1282
  %v1307 = vmul.f32 %v1299, %v1283
  %v1308 = vadd.f32 %v1304, %v1306
  %v1309 = vadd.f32 %v1305, %v1307
  %1310 = vrot.lane.b32.xlu0 %v980, 113
  %v1311 = vpop.permute.xlu0 %1310
  %1312 = vrot.lane.b32.xlu0 %v982, 113
  %v1313 = vpop.permute.xlu0 %1312
  %v1314 = vsel %vm711, %v1311, %v1313
  %v1315 = vsel %vm711, %v1313, %v1311
  %1316 = vrot.lane.b32.xlu0 %v986, 113
  %v1317 = vpop.permute.xlu0 %1316
  %1318 = vrot.lane.b32.xlu0 %v988, 113
  %v1319 = vpop.permute.xlu0 %1318
  %v1320 = vsel %vm711, %v1317, %v1319
  %v1321 = vsel %vm711, %v1319, %v1317
  %v1322 = vld [vmem:[%s720] ss:$8 sm:$0x3]
  %v1324 = vlaneseq
  %v1325 = vshrl.u32 %v1324, 7
  %v1326 = vsub.s32 0, %v1325
  %v1327 = vrot.slane %v1322, %v1326
  %v1328 = vlaneseq
  %v1329 = vshrl.u32 %v1328, 7
  %v1330 = vsub.s32 1, %v1329
  %v1331 = vrot.slane %v1322, %v1330
  %v1334 = vmul.f32 %v1314, %v1327
  %v1335 = vmul.f32 %v1315, %v1331
  %v1336 = vadd.f32 %v1334, %v737
  %v1337 = vadd.f32 %v1335, %v737
  %v1338 = vmul.f32 %v1320, %v1327
  %v1339 = vmul.f32 %v1321, %v1331
  %v1340 = vmul.f32 %v974, %v1336
  %v1341 = vmul.f32 %v976, %v1337
  %v1342 = vmax.f32 %v1286, %v1340
  %v1343 = vmax.f32 %v1287, %v1341
  %v1344 = vsub.f32 %v1286, %v1342
  %v1345 = vsub.f32 %v1287, %v1343
  %v1346 = vmul.f32 %v1344, 1.442695
  %v1347 = vpow.pop %v1346
  %v1348 = vmul.f32 %v1345, 1.442695
  %v1349 = vpow.pop %v1348
  %v1350 = vsub.f32 %v1340, %v1342
  %v1351 = vsub.f32 %v1341, %v1343
  %v1352 = vmul.f32 %v1350, 1.442695
  %v1353 = vpow.pop %v1352
  %v1354 = vmul.f32 %v1351, 1.442695
  %v1355 = vpow.pop %v1354
  %v1356 = vmul.f32 %v1302, %v1347
  %v1357 = vmul.f32 %v1303, %v1349
  %v1358 = vadd.f32 %v1356, %v1353
  %v1359 = vadd.f32 %v1357, %v1355
  %v1360 = vmul.f32 %v1308, %v1347
  %v1361 = vmul.f32 %v1309, %v1349
  %v1362 = vmul.f32 %v1353, %v1338
  %v1363 = vmul.f32 %v1355, %v1339
  %v1364 = vadd.f32 %v1360, %v1362
  %v1365 = vadd.f32 %v1361, %v1363
  %1366 = vrot.lane.b32.xlu0 %v980, 112
  %v1367 = vpop.permute.xlu0 %1366
  %1368 = vrot.lane.b32.xlu0 %v982, 112
  %v1369 = vpop.permute.xlu0 %1368
  %v1370 = vsel %vm773, %v1367, %v1369
  %v1371 = vsel %vm773, %v1369, %v1367
  %1372 = vrot.lane.b32.xlu0 %v986, 112
  %v1373 = vpop.permute.xlu0 %1372
  %1374 = vrot.lane.b32.xlu0 %v988, 112
  %v1375 = vpop.permute.xlu0 %1374
  %v1376 = vsel %vm773, %v1373, %v1375
  %v1377 = vsel %vm773, %v1375, %v1373
  %v1378 = vld [vmem:[%s782] ss:$8 sm:$0x3]
  %v1380 = vlaneseq
  %v1381 = vshrl.u32 %v1380, 7
  %v1382 = vsub.s32 0, %v1381
  %v1383 = vrot.slane %v1378, %v1382
  %v1384 = vlaneseq
  %v1385 = vshrl.u32 %v1384, 7
  %v1386 = vsub.s32 1, %v1385
  %v1387 = vrot.slane %v1378, %v1386
  %v1390 = vmul.f32 %v1370, %v1383
  %v1391 = vmul.f32 %v1371, %v1387
  %v1392 = vadd.f32 %v1390, %v799
  %v1393 = vadd.f32 %v1391, %v799
  %v1394 = vmul.f32 %v1376, %v1383
  %v1395 = vmul.f32 %v1377, %v1387
  %v1396 = vmul.f32 %v974, %v1392
  %v1397 = vmul.f32 %v976, %v1393
  %v1398 = vmax.f32 %v1342, %v1396
  %v1399 = vmax.f32 %v1343, %v1397
  %v1400 = vsub.f32 %v1342, %v1398
  %v1401 = vsub.f32 %v1343, %v1399
  %v1402 = vmul.f32 %v1400, 1.442695
  %v1403 = vpow.pop %v1402
  %v1404 = vmul.f32 %v1401, 1.442695
  %v1405 = vpow.pop %v1404
  %v1406 = vsub.f32 %v1396, %v1398
  %v1407 = vsub.f32 %v1397, %v1399
  %v1408 = vmul.f32 %v1406, 1.442695
  %v1409 = vpow.pop %v1408
  %v1410 = vmul.f32 %v1407, 1.442695
  %v1411 = vpow.pop %v1410
  %v1412 = vmul.f32 %v1358, %v1403
  %v1413 = vmul.f32 %v1359, %v1405
  %v1414 = vadd.f32 %v1412, %v1409
  %v1415 = vadd.f32 %v1413, %v1411
  %v1416 = vmul.f32 %v1364, %v1403
  %v1417 = vmul.f32 %v1365, %v1405
  %v1418 = vmul.f32 %v1409, %v1394
  %v1419 = vmul.f32 %v1411, %v1395
  %v1420 = vadd.f32 %v1416, %v1418
  %v1421 = vadd.f32 %v1417, %v1419
  %1422 = vrot.lane.b32.xlu0 %v980, 111
  %v1423 = vpop.permute.xlu0 %1422
  %1424 = vrot.lane.b32.xlu0 %v982, 111
  %v1425 = vpop.permute.xlu0 %1424
  %v1426 = vsel %vm835, %v1423, %v1425
  %v1427 = vsel %vm835, %v1425, %v1423
  %1428 = vrot.lane.b32.xlu0 %v986, 111
  %v1429 = vpop.permute.xlu0 %1428
  %1430 = vrot.lane.b32.xlu0 %v988, 111
  %v1431 = vpop.permute.xlu0 %1430
  %v1432 = vsel %vm835, %v1429, %v1431
  %v1433 = vsel %vm835, %v1431, %v1429
  %v1434 = vld [vmem:[%s844] ss:$8 sm:$0x3]
  %v1436 = vlaneseq
  %v1437 = vshrl.u32 %v1436, 7
  %v1438 = vsub.s32 0, %v1437
  %v1439 = vrot.slane %v1434, %v1438
  %v1440 = vlaneseq
  %v1441 = vshrl.u32 %v1440, 7
  %v1442 = vsub.s32 1, %v1441
  %v1443 = vrot.slane %v1434, %v1442
  %v1446 = vmul.f32 %v1426, %v1439
  %v1447 = vmul.f32 %v1427, %v1443
  %v1448 = vadd.f32 %v1446, %v861
  %v1449 = vadd.f32 %v1447, %v861
  %v1450 = vmul.f32 %v1432, %v1439
  %v1451 = vmul.f32 %v1433, %v1443
  %v1452 = vmul.f32 %v974, %v1448
  %v1453 = vmul.f32 %v976, %v1449
  %v1454 = vmax.f32 %v1398, %v1452
  %v1455 = vmax.f32 %v1399, %v1453
  %v1456 = vsub.f32 %v1398, %v1454
  %v1457 = vsub.f32 %v1399, %v1455
  %v1458 = vmul.f32 %v1456, 1.442695
  %v1459 = vpow.pop %v1458
  %v1460 = vmul.f32 %v1457, 1.442695
  %v1461 = vpow.pop %v1460
  %v1462 = vsub.f32 %v1452, %v1454
  %v1463 = vsub.f32 %v1453, %v1455
  %v1464 = vmul.f32 %v1462, 1.442695
  %v1465 = vpow.pop %v1464
  %v1466 = vmul.f32 %v1463, 1.442695
  %v1467 = vpow.pop %v1466
  %v1468 = vmul.f32 %v1414, %v1459
  %v1469 = vmul.f32 %v1415, %v1461
  %v1470 = vadd.f32 %v1468, %v1465
  %v1471 = vadd.f32 %v1469, %v1467
  %v1472 = vmul.f32 %v1420, %v1459
  %v1473 = vmul.f32 %v1421, %v1461
  %v1474 = vmul.f32 %v1465, %v1450
  %v1475 = vmul.f32 %v1467, %v1451
  %v1476 = vadd.f32 %v1472, %v1474
  %v1477 = vadd.f32 %v1473, %v1475
  %v1478 = vrcp.pop %v1470
  %v1479 = vrcp.pop %v1471
  %v1480 = vmul.f32 %v1476, %v1478
  %v1481 = vmul.f32 %v1477, %v1479
  %s1482 = scalar_lea.vmem %s5, 16
  %1483 = vst [vmem:[%s1482] sm:$0xff] %v1480
  %1484 = vst [vmem:[%s1482 + $0x8] sm:$0xff] %v1481
  // Predicated region
  $region22: #{crossatf_forward.3} parent=0 // pred_check
    _
  $region23: #{crossatf_forward.3} parent=0 // pred_check_branch
    %1486 = sbr.rel (0) target = $region25
  $region24: #{crossatf_forward.3} parent=0 // pred_region
    _
  $region25: #{crossatf_forward.3} parent=0 // pred_fallthru
    _
  // Predicated region
  $region26: #{crossatf_forward.3} parent=0 // pred_check
    _
  $region27: #{crossatf_forward.3} parent=0 // pred_check_branch
    %1488 = sbr.rel (0) target = $region29
  $region28: #{crossatf_forward.3} parent=0 // pred_region
    _
  $region29: #{crossatf_forward.3} parent=0 // pred_fallthru
    _

// kernel: custom-call
$region0: #{custom-call}
  %s0 = inlined_call_operand.hbm [shape: c64[8,8,16,16], index: 0, kind: input, shape index: {}]
  %s1 = inlined_call_operand.vmem [shape: f32[8,8,16,16], index: 1, kind: output, shape index: {}]
  $region1: #{custom-call} parent=0
    #allocation0 [shape = 's32[1]{0}', space=sflag, size = 0x4, scoped, tag = 'scoped memory for custom-call']
    %2 = vsyncpa [#allocation0], 0
    %s3 = sshll.u32 %s1, 4
    %s4 = int_to_ptr.vmem [resolvable:$true] %s3
    %6 = dma.hbm_to_vmem [thread:$0]  %s0, 16384, %s4, [#allocation0]
    %7 = dma.done [#allocation0], 16384
    %8 = vsyncpa [#allocation0], 1

// kernel: custom-call.1
$region0: #{custom-call.1}
  %s0 = inlined_call_operand.hbm [shape: c64[8,8,16,16], index: 0, kind: input, shape index: {}]
  %s1 = inlined_call_operand.vmem [shape: f32[8,8,16,16], index: 1, kind: output, shape index: {}]
  %s2 = scalar_lea.hbm %s0, 16384
  $region1: #{custom-call.1} parent=0
    #allocation0 [shape = 's32[1]{0}', space=sflag, size = 0x4, scoped, tag = 'scoped memory for custom-call.1']
    %3 = vsyncpa [#allocation0], 0
    %s4 = sshll.u32 %s1, 4
    %s5 = int_to_ptr.vmem [resolvable:$true] %s4
    %7 = dma.hbm_to_vmem [thread:$0]  %s2, 16384, %s5, [#allocation0]
    %8 = dma.done [#allocation0], 16384
    %9 = vsyncpa [#allocation0], 1

// kernel: crossatf_forward.4
$region0: #{crossatf_forward.4}
  #allocation0 [shape = 'u32[]', space=smem, size = 0x4, offset = 0x4, fixed_abs, tag = 'smem constant byte address 0x4 - core index']
  #allocation1 [shape = 'u32[144,128]{1,0:T(1,128)}', space=vmem, size = 0x12000, scoped, tag = 'internal scratch']
  %s0 = inlined_call_operand.vmem [shape: f32[2,8,256], index: 0, kind: input, shape index: {}]
  %s1 = inlined_call_operand.vmem [shape: f32[2,8,256], index: 1, kind: input, shape index: {}]
  %s2 = inlined_call_operand.vmem [shape: f32[8,8,256], index: 2, kind: input, shape index: {}]
  %s3 = inlined_call_operand.vmem [shape: f32[8,8,256], index: 3, kind: input, shape index: {}]
  %s4 = inlined_call_operand.vmem [shape: f32[2,8,256], index: 4, kind: output, shape index: {0}]
  %s5 = inlined_call_operand.vmem [shape: f32[2,8,256], index: 5, kind: output, shape index: {1}]
  %6 = xla_tuple %s4, %s5
  %s7 = sld [smem:[#allocation0]]
  $region34: #{crossatf_forward.4} parent=0
    _
  %s9 = ssub.s32 1, %s7
  %s10 = scalar_select 0, %s9, %s7
  // Predicated region
  $region2: #{crossatf_forward.4} parent=0 // pred_check
    _
  $region3: #{crossatf_forward.4} parent=0 // pred_check_branch
    %12 = sbr.rel (0) target = $region5
  $region4: #{crossatf_forward.4} parent=0 // pred_region
    _
  $region5: #{crossatf_forward.4} parent=0 // pred_fallthru
    _
  // Predicated region
  $region6: #{crossatf_forward.4} parent=0 // pred_check
    _
  $region7: #{crossatf_forward.4} parent=0 // pred_check_branch
    %14 = sbr.rel (0) target = $region9
  $region8: #{crossatf_forward.4} parent=0 // pred_region
    _
  $region9: #{crossatf_forward.4} parent=0 // pred_fallthru
    _
  // Predicated region
  $region10: #{crossatf_forward.4} parent=0 // pred_check
    _
  $region11: #{crossatf_forward.4} parent=0 // pred_check_branch
    %16 = sbr.rel (0) target = $region13
  $region12: #{crossatf_forward.4} parent=0 // pred_region
    _
  $region13: #{crossatf_forward.4} parent=0 // pred_fallthru
    _
  // Predicated region
  $region14: #{crossatf_forward.4} parent=0 // pred_check
    _
  $region15: #{crossatf_forward.4} parent=0 // pred_check_branch
    %18 = sbr.rel (0) target = $region17
  $region16: #{crossatf_forward.4} parent=0 // pred_region
    _
  $region17: #{crossatf_forward.4} parent=0 // pred_fallthru
    _
  %v19 = vld [vmem:[%s0] sm:$0xff]
  %v20 = vld [vmem:[%s0 + $0x8] sm:$0xff]
  %v21 = vld [vmem:[%s1] sm:$0xff]
  %v22 = vld [vmem:[%s1 + $0x8] sm:$0xff]
  %v23 = vld [vmem:[%s2] sm:$0xff]
  %v24 = vld [vmem:[%s2 + $0x8] sm:$0xff]
  %v25 = vld [vmem:[%s3] sm:$0xff]
  %v26 = vld [vmem:[%s3 + $0x8] sm:$0xff]
  %v27 = vlaneseq
  %v28 = vshrl.u32 %v27, 7
  %v29 = vsub.s32 0, %v28
  %v30 = vrot.slane %v19, %v29
  %v31 = vlaneseq
  %v32 = vshrl.u32 %v31, 7
  %v33 = vsub.s32 0, %v32
  %v34 = vrot.slane %v20, %v33
  %v35 = vmul.f32 %v30, %v23
  %v36 = vmul.f32 %v34, %v24
  %v37 = vadd.f32 %v35, 0.0
  %v38 = vadd.f32 %v36, 0.0
  %v39 = vlaneseq
  %v40 = vshrl.u32 %v39, 7
  %v41 = vsub.s32 0, %v40
  %v42 = vrot.slane %v21, %v41
  %v43 = vlaneseq
  %v44 = vshrl.u32 %v43, 7
  %v45 = vsub.s32 0, %v44
  %v46 = vrot.slane %v22, %v45
  %v47 = vmul.f32 %v42, %v25
  %v48 = vmul.f32 %v46, %v26
  %v49 = vsub.f32 %v37, %v47
  %v50 = vsub.f32 %v38, %v48
  %v51 = vmul.f32 %v30, %v25
  %v52 = vmul.f32 %v34, %v26
  %v53 = vadd.f32 %v51, 0.0
  %v54 = vadd.f32 %v52, 0.0
  %v55 = vmul.f32 %v42, %v23
  %v56 = vmul.f32 %v46, %v24
  %v57 = vadd.f32 %v53, %v55
  %v58 = vadd.f32 %v54, %v56
  %s59 = scalar_lea.vmem %s2, 16
  %v60 = vld [vmem:[%s59] sm:$0xff]
  %v61 = vld [vmem:[%s59 + $0x8] sm:$0xff]
  %s62 = scalar_lea.vmem %s3, 16
  %v63 = vld [vmem:[%s62] sm:$0xff]
  %v64 = vld [vmem:[%s62 + $0x8] sm:$0xff]
  %v65 = vlaneseq
  %v66 = vshrl.u32 %v65, 7
  %v67 = vsub.s32 1, %v66
  %v68 = vrot.slane %v19, %v67
  %v69 = vlaneseq
  %v70 = vshrl.u32 %v69, 7
  %v71 = vsub.s32 1, %v70
  %v72 = vrot.slane %v20, %v71
  %v73 = vmul.f32 %v68, %v60
  %v74 = vmul.f32 %v72, %v61
  %v75 = vadd.f32 %v49, %v73
  %v76 = vadd.f32 %v50, %v74
  %v77 = vlaneseq
  %v78 = vshrl.u32 %v77, 7
  %v79 = vsub.s32 1, %v78
  %v80 = vrot.slane %v21, %v79
  %v81 = vlaneseq
  %v82 = vshrl.u32 %v81, 7
  %v83 = vsub.s32 1, %v82
  %v84 = vrot.slane %v22, %v83
  %v85 = vmul.f32 %v80, %v63
  %v86 = vmul.f32 %v84, %v64
  %v87 = vsub.f32 %v75, %v85
  %v88 = vsub.f32 %v76, %v86
  %v89 = vmul.f32 %v68, %v63
  %v90 = vmul.f32 %v72, %v64
  %v91 = vadd.f32 %v57, %v89
  %v92 = vadd.f32 %v58, %v90
  %v93 = vmul.f32 %v80, %v60
  %v94 = vmul.f32 %v84, %v61
  %v95 = vadd.f32 %v91, %v93
  %v96 = vadd.f32 %v92, %v94
  %s97 = scalar_lea.vmem %s2, 32
  %v98 = vld [vmem:[%s97] sm:$0xff]
  %v99 = vld [vmem:[%s97 + $0x8] sm:$0xff]
  %s100 = scalar_lea.vmem %s3, 32
  %v101 = vld [vmem:[%s100] sm:$0xff]
  %v102 = vld [vmem:[%s100 + $0x8] sm:$0xff]
  %v103 = vlaneseq
  %v104 = vshrl.u32 %v103, 7
  %v105 = vsub.s32 2, %v104
  %v106 = vrot.slane %v19, %v105
  %v107 = vlaneseq
  %v108 = vshrl.u32 %v107, 7
  %v109 = vsub.s32 2, %v108
  %v110 = vrot.slane %v20, %v109
  %v111 = vmul.f32 %v106, %v98
  %v112 = vmul.f32 %v110, %v99
  %v113 = vadd.f32 %v87, %v111
  %v114 = vadd.f32 %v88, %v112
  %v115 = vlaneseq
  %v116 = vshrl.u32 %v115, 7
  %v117 = vsub.s32 2, %v116
  %v118 = vrot.slane %v21, %v117
  %v119 = vlaneseq
  %v120 = vshrl.u32 %v119, 7
  %v121 = vsub.s32 2, %v120
  %v122 = vrot.slane %v22, %v121
  %v123 = vmul.f32 %v118, %v101
  %v124 = vmul.f32 %v122, %v102
  %v125 = vsub.f32 %v113, %v123
  %v126 = vsub.f32 %v114, %v124
  %v127 = vmul.f32 %v106, %v101
  %v128 = vmul.f32 %v110, %v102
  %v129 = vadd.f32 %v95, %v127
  %v130 = vadd.f32 %v96, %v128
  %v131 = vmul.f32 %v118, %v98
  %v132 = vmul.f32 %v122, %v99
  %v133 = vadd.f32 %v129, %v131
  %v134 = vadd.f32 %v130, %v132
  %s135 = scalar_lea.vmem %s2, 48
  %v136 = vld [vmem:[%s135] sm:$0xff]
  %v137 = vld [vmem:[%s135 + $0x8] sm:$0xff]
  %s138 = scalar_lea.vmem %s3, 48
  %v139 = vld [vmem:[%s138] sm:$0xff]
  %v140 = vld [vmem:[%s138 + $0x8] sm:$0xff]
  %v141 = vlaneseq
  %v142 = vshrl.u32 %v141, 7
  %v143 = vsub.s32 3, %v142
  %v144 = vrot.slane %v19, %v143
  %v145 = vlaneseq
  %v146 = vshrl.u32 %v145, 7
  %v147 = vsub.s32 3, %v146
  %v148 = vrot.slane %v20, %v147
  %v149 = vmul.f32 %v144, %v136
  %v150 = vmul.f32 %v148, %v137
  %v151 = vadd.f32 %v125, %v149
  %v152 = vadd.f32 %v126, %v150
  %v153 = vlaneseq
  %v154 = vshrl.u32 %v153, 7
  %v155 = vsub.s32 3, %v154
  %v156 = vrot.slane %v21, %v155
  %v157 = vlaneseq
  %v158 = vshrl.u32 %v157, 7
  %v159 = vsub.s32 3, %v158
  %v160 = vrot.slane %v22, %v159
  %v161 = vmul.f32 %v156, %v139
  %v162 = vmul.f32 %v160, %v140
  %v163 = vsub.f32 %v151, %v161
  %v164 = vsub.f32 %v152, %v162
  %v165 = vmul.f32 %v144, %v139
  %v166 = vmul.f32 %v148, %v140
  %v167 = vadd.f32 %v133, %v165
  %v168 = vadd.f32 %v134, %v166
  %v169 = vmul.f32 %v156, %v136
  %v170 = vmul.f32 %v160, %v137
  %v171 = vadd.f32 %v167, %v169
  %v172 = vadd.f32 %v168, %v170
  %s173 = scalar_lea.vmem %s2, 64
  %v174 = vld [vmem:[%s173] sm:$0xff]
  %v175 = vld [vmem:[%s173 + $0x8] sm:$0xff]
  %s176 = scalar_lea.vmem %s3, 64
  %v177 = vld [vmem:[%s176] sm:$0xff]
  %v178 = vld [vmem:[%s176 + $0x8] sm:$0xff]
  %v179 = vlaneseq
  %v180 = vshrl.u32 %v179, 7
  %v181 = vsub.s32 4, %v180
  %v182 = vrot.slane %v19, %v181
  %v183 = vlaneseq
  %v184 = vshrl.u32 %v183, 7
  %v185 = vsub.s32 4, %v184
  %v186 = vrot.slane %v20, %v185
  %v187 = vmul.f32 %v182, %v174
  %v188 = vmul.f32 %v186, %v175
  %v189 = vadd.f32 %v163, %v187
  %v190 = vadd.f32 %v164, %v188
  %v191 = vlaneseq
  %v192 = vshrl.u32 %v191, 7
  %v193 = vsub.s32 4, %v192
  %v194 = vrot.slane %v21, %v193
  %v195 = vlaneseq
  %v196 = vshrl.u32 %v195, 7
  %v197 = vsub.s32 4, %v196
  %v198 = vrot.slane %v22, %v197
  %v199 = vmul.f32 %v194, %v177
  %v200 = vmul.f32 %v198, %v178
  %v201 = vsub.f32 %v189, %v199
  %v202 = vsub.f32 %v190, %v200
  %v203 = vmul.f32 %v182, %v177
  %v204 = vmul.f32 %v186, %v178
  %v205 = vadd.f32 %v171, %v203
  %v206 = vadd.f32 %v172, %v204
  %v207 = vmul.f32 %v194, %v174
  %v208 = vmul.f32 %v198, %v175
  %v209 = vadd.f32 %v205, %v207
  %v210 = vadd.f32 %v206, %v208
  %s211 = scalar_lea.vmem %s2, 80
  %v212 = vld [vmem:[%s211] sm:$0xff]
  %v213 = vld [vmem:[%s211 + $0x8] sm:$0xff]
  %s214 = scalar_lea.vmem %s3, 80
  %v215 = vld [vmem:[%s214] sm:$0xff]
  %v216 = vld [vmem:[%s214 + $0x8] sm:$0xff]
  %v217 = vlaneseq
  %v218 = vshrl.u32 %v217, 7
  %v219 = vsub.s32 5, %v218
  %v220 = vrot.slane %v19, %v219
  %v221 = vlaneseq
  %v222 = vshrl.u32 %v221, 7
  %v223 = vsub.s32 5, %v222
  %v224 = vrot.slane %v20, %v223
  %v225 = vmul.f32 %v220, %v212
  %v226 = vmul.f32 %v224, %v213
  %v227 = vadd.f32 %v201, %v225
  %v228 = vadd.f32 %v202, %v226
  %v229 = vlaneseq
  %v230 = vshrl.u32 %v229, 7
  %v231 = vsub.s32 5, %v230
  %v232 = vrot.slane %v21, %v231
  %v233 = vlaneseq
  %v234 = vshrl.u32 %v233, 7
  %v235 = vsub.s32 5, %v234
  %v236 = vrot.slane %v22, %v235
  %v237 = vmul.f32 %v232, %v215
  %v238 = vmul.f32 %v236, %v216
  %v239 = vsub.f32 %v227, %v237
  %v240 = vsub.f32 %v228, %v238
  %v241 = vmul.f32 %v220, %v215
  %v242 = vmul.f32 %v224, %v216
  %v243 = vadd.f32 %v209, %v241
  %v244 = vadd.f32 %v210, %v242
  %v245 = vmul.f32 %v232, %v212
  %v246 = vmul.f32 %v236, %v213
  %v247 = vadd.f32 %v243, %v245
  %v248 = vadd.f32 %v244, %v246
  %s249 = scalar_lea.vmem %s2, 96
  %v250 = vld [vmem:[%s249] sm:$0xff]
  %v251 = vld [vmem:[%s249 + $0x8] sm:$0xff]
  %s252 = scalar_lea.vmem %s3, 96
  %v253 = vld [vmem:[%s252] sm:$0xff]
  %v254 = vld [vmem:[%s252 + $0x8] sm:$0xff]
  %v255 = vlaneseq
  %v256 = vshrl.u32 %v255, 7
  %v257 = vsub.s32 6, %v256
  %v258 = vrot.slane %v19, %v257
  %v259 = vlaneseq
  %v260 = vshrl.u32 %v259, 7
  %v261 = vsub.s32 6, %v260
  %v262 = vrot.slane %v20, %v261
  %v263 = vmul.f32 %v258, %v250
  %v264 = vmul.f32 %v262, %v251
  %v265 = vadd.f32 %v239, %v263
  %v266 = vadd.f32 %v240, %v264
  %v267 = vlaneseq
  %v268 = vshrl.u32 %v267, 7
  %v269 = vsub.s32 6, %v268
  %v270 = vrot.slane %v21, %v269
  %v271 = vlaneseq
  %v272 = vshrl.u32 %v271, 7
  %v273 = vsub.s32 6, %v272
  %v274 = vrot.slane %v22, %v273
  %v275 = vmul.f32 %v270, %v253
  %v276 = vmul.f32 %v274, %v254
  %v277 = vsub.f32 %v265, %v275
  %v278 = vsub.f32 %v266, %v276
  %v279 = vmul.f32 %v258, %v253
  %v280 = vmul.f32 %v262, %v254
  %v281 = vadd.f32 %v247, %v279
  %v282 = vadd.f32 %v248, %v280
  %v283 = vmul.f32 %v270, %v250
  %v284 = vmul.f32 %v274, %v251
  %v285 = vadd.f32 %v281, %v283
  %v286 = vadd.f32 %v282, %v284
  %s287 = scalar_lea.vmem %s2, 112
  %v288 = vld [vmem:[%s287] sm:$0xff]
  %v289 = vld [vmem:[%s287 + $0x8] sm:$0xff]
  %s290 = scalar_lea.vmem %s3, 112
  %v291 = vld [vmem:[%s290] sm:$0xff]
  %v292 = vld [vmem:[%s290 + $0x8] sm:$0xff]
  %v293 = vlaneseq
  %v294 = vshrl.u32 %v293, 7
  %v295 = vsub.s32 7, %v294
  %v296 = vrot.slane %v19, %v295
  %v297 = vlaneseq
  %v298 = vshrl.u32 %v297, 7
  %v299 = vsub.s32 7, %v298
  %v300 = vrot.slane %v20, %v299
  %v301 = vmul.f32 %v296, %v288
  %v302 = vmul.f32 %v300, %v289
  %v303 = vadd.f32 %v277, %v301
  %v304 = vadd.f32 %v278, %v302
  %v305 = vlaneseq
  %v306 = vshrl.u32 %v305, 7
  %v307 = vsub.s32 7, %v306
  %v308 = vrot.slane %v21, %v307
  %v309 = vlaneseq
  %v310 = vshrl.u32 %v309, 7
  %v311 = vsub.s32 7, %v310
  %v312 = vrot.slane %v22, %v311
  %v313 = vmul.f32 %v308, %v291
  %v314 = vmul.f32 %v312, %v292
  %v315 = vsub.f32 %v303, %v313
  %v316 = vsub.f32 %v304, %v314
  %v317 = vmul.f32 %v296, %v291
  %v318 = vmul.f32 %v300, %v292
  %v319 = vadd.f32 %v285, %v317
  %v320 = vadd.f32 %v286, %v318
  %v321 = vmul.f32 %v308, %v288
  %v322 = vmul.f32 %v312, %v289
  %v323 = vadd.f32 %v319, %v321
  %v324 = vadd.f32 %v320, %v322
  %325 = vst [vmem:[%s4] sm:$0xff] %v315
  %326 = vst [vmem:[%s4 + $0x8] sm:$0xff] %v316
  %327 = vst [vmem:[%s5] sm:$0xff] %v323
  %328 = vst [vmem:[%s5 + $0x8] sm:$0xff] %v324
  %s329 = scalar_lea.vmem %s0, 16
  %v330 = vld [vmem:[%s329] sm:$0xff]
  %v331 = vld [vmem:[%s329 + $0x8] sm:$0xff]
  %s332 = scalar_lea.vmem %s1, 16
  %v333 = vld [vmem:[%s332] sm:$0xff]
  %v334 = vld [vmem:[%s332 + $0x8] sm:$0xff]
  %v335 = vld [vmem:[%s2] sm:$0xff]
  %v336 = vld [vmem:[%s2 + $0x8] sm:$0xff]
  %v337 = vld [vmem:[%s3] sm:$0xff]
  %v338 = vld [vmem:[%s3 + $0x8] sm:$0xff]
  %v339 = vlaneseq
  %v340 = vshrl.u32 %v339, 7
  %v341 = vsub.s32 0, %v340
  %v342 = vrot.slane %v330, %v341
  %v343 = vlaneseq
  %v344 = vshrl.u32 %v343, 7
  %v345 = vsub.s32 0, %v344
  %v346 = vrot.slane %v331, %v345
  %v347 = vmul.f32 %v342, %v335
  %v348 = vmul.f32 %v346, %v336
  %v349 = vadd.f32 %v347, 0.0
  %v350 = vadd.f32 %v348, 0.0
  %v351 = vlaneseq
  %v352 = vshrl.u32 %v351, 7
  %v353 = vsub.s32 0, %v352
  %v354 = vrot.slane %v333, %v353
  %v355 = vlaneseq
  %v356 = vshrl.u32 %v355, 7
  %v357 = vsub.s32 0, %v356
  %v358 = vrot.slane %v334, %v357
  %v359 = vmul.f32 %v354, %v337
  %v360 = vmul.f32 %v358, %v338
  %v361 = vsub.f32 %v349, %v359
  %v362 = vsub.f32 %v350, %v360
  %v363 = vmul.f32 %v342, %v337
  %v364 = vmul.f32 %v346, %v338
  %v365 = vadd.f32 %v363, 0.0
  %v366 = vadd.f32 %v364, 0.0
  %v367 = vmul.f32 %v354, %v335
  %v368 = vmul.f32 %v358, %v336
  %v369 = vadd.f32 %v365, %v367
  %v370 = vadd.f32 %v366, %v368
  %v371 = vld [vmem:[%s59] sm:$0xff]
  %v372 = vld [vmem:[%s59 + $0x8] sm:$0xff]
  %v373 = vld [vmem:[%s62] sm:$0xff]
  %v374 = vld [vmem:[%s62 + $0x8] sm:$0xff]
  %v375 = vlaneseq
  %v376 = vshrl.u32 %v375, 7
  %v377 = vsub.s32 1, %v376
  %v378 = vrot.slane %v330, %v377
  %v379 = vlaneseq
  %v380 = vshrl.u32 %v379, 7
  %v381 = vsub.s32 1, %v380
  %v382 = vrot.slane %v331, %v381
  %v383 = vmul.f32 %v378, %v371
  %v384 = vmul.f32 %v382, %v372
  %v385 = vadd.f32 %v361, %v383
  %v386 = vadd.f32 %v362, %v384
  %v387 = vlaneseq
  %v388 = vshrl.u32 %v387, 7
  %v389 = vsub.s32 1, %v388
  %v390 = vrot.slane %v333, %v389
  %v391 = vlaneseq
  %v392 = vshrl.u32 %v391, 7
  %v393 = vsub.s32 1, %v392
  %v394 = vrot.slane %v334, %v393
  %v395 = vmul.f32 %v390, %v373
  %v396 = vmul.f32 %v394, %v374
  %v397 = vsub.f32 %v385, %v395
  %v398 = vsub.f32 %v386, %v396
  %v399 = vmul.f32 %v378, %v373
  %v400 = vmul.f32 %v382, %v374
  %v401 = vadd.f32 %v369, %v399
  %v402 = vadd.f32 %v370, %v400
  %v403 = vmul.f32 %v390, %v371
  %v404 = vmul.f32 %v394, %v372
  %v405 = vadd.f32 %v401, %v403
  %v406 = vadd.f32 %v402, %v404
  %v407 = vld [vmem:[%s97] sm:$0xff]
  %v408 = vld [vmem:[%s97 + $0x8] sm:$0xff]
  %v409 = vld [vmem:[%s100] sm:$0xff]
  %v410 = vld [vmem:[%s100 + $0x8] sm:$0xff]
  %v411 = vlaneseq
  %v412 = vshrl.u32 %v411, 7
  %v413 = vsub.s32 2, %v412
  %v414 = vrot.slane %v330, %v413
  %v415 = vlaneseq
  %v416 = vshrl.u32 %v415, 7
  %v417 = vsub.s32 2, %v416
  %v418 = vrot.slane %v331, %v417
  %v419 = vmul.f32 %v414, %v407
  %v420 = vmul.f32 %v418, %v408
  %v421 = vadd.f32 %v397, %v419
  %v422 = vadd.f32 %v398, %v420
  %v423 = vlaneseq
  %v424 = vshrl.u32 %v423, 7
  %v425 = vsub.s32 2, %v424
  %v426 = vrot.slane %v333, %v425
  %v427 = vlaneseq
  %v428 = vshrl.u32 %v427, 7
  %v429 = vsub.s32 2, %v428
  %v430 = vrot.slane %v334, %v429
  %v431 = vmul.f32 %v426, %v409
  %v432 = vmul.f32 %v430, %v410
  %v433 = vsub.f32 %v421, %v431
  %v434 = vsub.f32 %v422, %v432
  %v435 = vmul.f32 %v414, %v409
  %v436 = vmul.f32 %v418, %v410
  %v437 = vadd.f32 %v405, %v435
  %v438 = vadd.f32 %v406, %v436
  %v439 = vmul.f32 %v426, %v407
  %v440 = vmul.f32 %v430, %v408
  %v441 = vadd.f32 %v437, %v439
  %v442 = vadd.f32 %v438, %v440
  %v443 = vld [vmem:[%s135] sm:$0xff]
  %v444 = vld [vmem:[%s135 + $0x8] sm:$0xff]
  %v445 = vld [vmem:[%s138] sm:$0xff]
  %v446 = vld [vmem:[%s138 + $0x8] sm:$0xff]
  %v447 = vlaneseq
  %v448 = vshrl.u32 %v447, 7
  %v449 = vsub.s32 3, %v448
  %v450 = vrot.slane %v330, %v449
  %v451 = vlaneseq
  %v452 = vshrl.u32 %v451, 7
  %v453 = vsub.s32 3, %v452
  %v454 = vrot.slane %v331, %v453
  %v455 = vmul.f32 %v450, %v443
  %v456 = vmul.f32 %v454, %v444
  %v457 = vadd.f32 %v433, %v455
  %v458 = vadd.f32 %v434, %v456
  %v459 = vlaneseq
  %v460 = vshrl.u32 %v459, 7
  %v461 = vsub.s32 3, %v460
  %v462 = vrot.slane %v333, %v461
  %v463 = vlaneseq
  %v464 = vshrl.u32 %v463, 7
  %v465 = vsub.s32 3, %v464
  %v466 = vrot.slane %v334, %v465
  %v467 = vmul.f32 %v462, %v445
  %v468 = vmul.f32 %v466, %v446
  %v469 = vsub.f32 %v457, %v467
  %v470 = vsub.f32 %v458, %v468
  %v471 = vmul.f32 %v450, %v445
  %v472 = vmul.f32 %v454, %v446
  %v473 = vadd.f32 %v441, %v471
  %v474 = vadd.f32 %v442, %v472
  %v475 = vmul.f32 %v462, %v443
  %v476 = vmul.f32 %v466, %v444
  %v477 = vadd.f32 %v473, %v475
  %v478 = vadd.f32 %v474, %v476
  %v479 = vld [vmem:[%s173] sm:$0xff]
  %v480 = vld [vmem:[%s173 + $0x8] sm:$0xff]
  %v481 = vld [vmem:[%s176] sm:$0xff]
  %v482 = vld [vmem:[%s176 + $0x8] sm:$0xff]
  %v483 = vlaneseq
  %v484 = vshrl.u32 %v483, 7
  %v485 = vsub.s32 4, %v484
  %v486 = vrot.slane %v330, %v485
  %v487 = vlaneseq
  %v488 = vshrl.u32 %v487, 7
  %v489 = vsub.s32 4, %v488
  %v490 = vrot.slane %v331, %v489
  %v491 = vmul.f32 %v486, %v479
  %v492 = vmul.f32 %v490, %v480
  %v493 = vadd.f32 %v469, %v491
  %v494 = vadd.f32 %v470, %v492
  %v495 = vlaneseq
  %v496 = vshrl.u32 %v495, 7
  %v497 = vsub.s32 4, %v496
  %v498 = vrot.slane %v333, %v497
  %v499 = vlaneseq
  %v500 = vshrl.u32 %v499, 7
  %v501 = vsub.s32 4, %v500
  %v502 = vrot.slane %v334, %v501
  %v503 = vmul.f32 %v498, %v481
  %v504 = vmul.f32 %v502, %v482
  %v505 = vsub.f32 %v493, %v503
  %v506 = vsub.f32 %v494, %v504
  %v507 = vmul.f32 %v486, %v481
  %v508 = vmul.f32 %v490, %v482
  %v509 = vadd.f32 %v477, %v507
  %v510 = vadd.f32 %v478, %v508
  %v511 = vmul.f32 %v498, %v479
  %v512 = vmul.f32 %v502, %v480
  %v513 = vadd.f32 %v509, %v511
  %v514 = vadd.f32 %v510, %v512
  %v515 = vld [vmem:[%s211] sm:$0xff]
  %v516 = vld [vmem:[%s211 + $0x8] sm:$0xff]
  %v517 = vld [vmem:[%s214] sm:$0xff]
  %v518 = vld [vmem:[%s214 + $0x8] sm:$0xff]
  %v519 = vlaneseq
  %v520 = vshrl.u32 %v519, 7
  %v521 = vsub.s32 5, %v520
  %v522 = vrot.slane %v330, %v521
  %v523 = vlaneseq
  %v524 = vshrl.u32 %v523, 7
  %v525 = vsub.s32 5, %v524
  %v526 = vrot.slane %v331, %v525
  %v527 = vmul.f32 %v522, %v515
  %v528 = vmul.f32 %v526, %v516
  %v529 = vadd.f32 %v505, %v527
  %v530 = vadd.f32 %v506, %v528
  %v531 = vlaneseq
  %v532 = vshrl.u32 %v531, 7
  %v533 = vsub.s32 5, %v532
  %v534 = vrot.slane %v333, %v533
  %v535 = vlaneseq
  %v536 = vshrl.u32 %v535, 7
  %v537 = vsub.s32 5, %v536
  %v538 = vrot.slane %v334, %v537
  %v539 = vmul.f32 %v534, %v517
  %v540 = vmul.f32 %v538, %v518
  %v541 = vsub.f32 %v529, %v539
  %v542 = vsub.f32 %v530, %v540
  %v543 = vmul.f32 %v522, %v517
  %v544 = vmul.f32 %v526, %v518
  %v545 = vadd.f32 %v513, %v543
  %v546 = vadd.f32 %v514, %v544
  %v547 = vmul.f32 %v534, %v515
  %v548 = vmul.f32 %v538, %v516
  %v549 = vadd.f32 %v545, %v547
  %v550 = vadd.f32 %v546, %v548
  %v551 = vld [vmem:[%s249] sm:$0xff]
  %v552 = vld [vmem:[%s249 + $0x8] sm:$0xff]
  %v553 = vld [vmem:[%s252] sm:$0xff]
  %v554 = vld [vmem:[%s252 + $0x8] sm:$0xff]
  %v555 = vlaneseq
  %v556 = vshrl.u32 %v555, 7
  %v557 = vsub.s32 6, %v556
  %v558 = vrot.slane %v330, %v557
  %v559 = vlaneseq
  %v560 = vshrl.u32 %v559, 7
  %v561 = vsub.s32 6, %v560
  %v562 = vrot.slane %v331, %v561
  %v563 = vmul.f32 %v558, %v551
  %v564 = vmul.f32 %v562, %v552
  %v565 = vadd.f32 %v541, %v563
  %v566 = vadd.f32 %v542, %v564
  %v567 = vlaneseq
  %v568 = vshrl.u32 %v567, 7
  %v569 = vsub.s32 6, %v568
  %v570 = vrot.slane %v333, %v569
  %v571 = vlaneseq
  %v572 = vshrl.u32 %v571, 7
  %v573 = vsub.s32 6, %v572
  %v574 = vrot.slane %v334, %v573
  %v575 = vmul.f32 %v570, %v553
  %v576 = vmul.f32 %v574, %v554
  %v577 = vsub.f32 %v565, %v575
  %v578 = vsub.f32 %v566, %v576
  %v579 = vmul.f32 %v558, %v553
  %v580 = vmul.f32 %v562, %v554
  %v581 = vadd.f32 %v549, %v579
  %v582 = vadd.f32 %v550, %v580
  %v583 = vmul.f32 %v570, %v551
  %v584 = vmul.f32 %v574, %v552
  %v585 = vadd.f32 %v581, %v583
  %v586 = vadd.f32 %v582, %v584
  %v587 = vld [vmem:[%s287] sm:$0xff]
  %v588 = vld [vmem:[%s287 + $0x8] sm:$0xff]
  %v589 = vld [vmem:[%s290] sm:$0xff]
  %v590 = vld [vmem:[%s290 + $0x8] sm:$0xff]
  %v591 = vlaneseq
  %v592 = vshrl.u32 %v591, 7
  %v593 = vsub.s32 7, %v592
  %v594 = vrot.slane %v330, %v593
  %v595 = vlaneseq
  %v596 = vshrl.u32 %v595, 7
  %v597 = vsub.s32 7, %v596
  %v598 = vrot.slane %v331, %v597
  %v599 = vmul.f32 %v594, %v587
  %v600 = vmul.f32 %v598, %v588
  %v601 = vadd.f32 %v577, %v599
  %v602 = vadd.f32 %v578, %v600
  %v603 = vlaneseq
  %v604 = vshrl.u32 %v603, 7
  %v605 = vsub.s32 7, %v604
  %v606 = vrot.slane %v333, %v605
  %v607 = vlaneseq
  %v608 = vshrl.u32 %v607, 7
  %v609 = vsub.s32 7, %v608
  %v610 = vrot.slane %v334, %v609
  %v611 = vmul.f32 %v606, %v589
  %v612 = vmul.f32 %v610, %v590
  %v613 = vsub.f32 %v601, %v611
  %v614 = vsub.f32 %v602, %v612
  %v615 = vmul.f32 %v594, %v589
  %v616 = vmul.f32 %v598, %v590
  %v617 = vadd.f32 %v585, %v615
  %v618 = vadd.f32 %v586, %v616
  %v619 = vmul.f32 %v606, %v587
  %v620 = vmul.f32 %v610, %v588
  %v621 = vadd.f32 %v617, %v619
  %v622 = vadd.f32 %v618, %v620
  %s623 = scalar_lea.vmem %s4, 16
  %624 = vst [vmem:[%s623] sm:$0xff] %v613
  %625 = vst [vmem:[%s623 + $0x8] sm:$0xff] %v614
  %s626 = scalar_lea.vmem %s5, 16
  %627 = vst [vmem:[%s626] sm:$0xff] %v621
  %628 = vst [vmem:[%s626 + $0x8] sm:$0xff] %v622
  // Predicated region
  $region18: #{crossatf_forward.4} parent=0 // pred_check
    _
  $region19: #{crossatf_forward.4} parent=0 // pred_check_branch
    %630 = sbr.rel (0) target = $region21
  $region20: #{crossatf_forward.4} parent=0 // pred_region
    _
  $region21: #{crossatf_forward.4} parent=0 // pred_fallthru
    _
  // Predicated region
  $region22: #{crossatf_forward.4} parent=0 // pred_check
    _
  $region23: #{crossatf_forward.4} parent=0 // pred_check_branch
    %632 = sbr.rel (0) target = $region25
  $region24: #{crossatf_forward.4} parent=0 // pred_region
    _
  $region25: #{crossatf_forward.4} parent=0 // pred_fallthru
    _
  // Predicated region
  $region26: #{crossatf_forward.4} parent=0 // pred_check
    _
  $region27: #{crossatf_forward.4} parent=0 // pred_check_branch
    %634 = sbr.rel (0) target = $region29
  $region28: #{crossatf_forward.4} parent=0 // pred_region
    _
  $region29: #{crossatf_forward.4} parent=0 // pred_fallthru
    _
  // Predicated region
  $region30: #{crossatf_forward.4} parent=0 // pred_check
    _
  $region31: #{crossatf_forward.4} parent=0 // pred_check_branch
    %636 = sbr.rel (0) target = $region33
  $region32: #{crossatf_forward.4} parent=0 // pred_region
    _
  $region33: #{crossatf_forward.4} parent=0 // pred_fallthru
    _

// kernel: crossatf_forward.5
$region0: #{crossatf_forward.5}
  #allocation0 [shape = 'u32[]', space=smem, size = 0x4, offset = 0x4, fixed_abs, tag = 'smem constant byte address 0x4 - core index']
  #allocation1 [shape = 'u32[144,128]{1,0:T(1,128)}', space=vmem, size = 0x12000, scoped, tag = 'internal scratch']
  %s0 = inlined_call_operand.vmem [shape: f32[2,8,256], index: 0, kind: input, shape index: {}]
  %s1 = inlined_call_operand.vmem [shape: f32[2,8,256], index: 1, kind: input, shape index: {}]
  %s2 = inlined_call_operand.vmem [shape: f32[8,8], index: 2, kind: input, shape index: {}]
  %s3 = inlined_call_operand.vmem [shape: f32[8,1], index: 3, kind: input, shape index: {}]
  %s4 = inlined_call_operand.vmem [shape: f32[2], index: 4, kind: input, shape index: {}]
  %s5 = inlined_call_operand.vmem [shape: f32[2,8,256], index: 5, kind: output, shape index: {}]
  %s6 = sld [smem:[#allocation0]]
  $region34: #{crossatf_forward.5} parent=0
    _
  %s8 = ssub.s32 1, %s6
  %s9 = scalar_select 0, %s8, %s6
  $region1: #{crossatf_forward.5} parent=0
    #allocation2 [shape = 'u8[512]{0}', space=smem, size = 0x200, scoped, tag = 'input window, operand 4, single buffered']
    #allocation3 [shape = 's32[1]{0}', space=sflag, size = 0x4, scoped, tag = 'scoped memory for crossatf_forward.5']
    %10 = vsyncpa [#allocation3], 0
    // Predicated region
    $region2: #{crossatf_forward.5} parent=1 // pred_check
      _
    $region3: #{crossatf_forward.5} parent=1 // pred_check_branch
      %12 = sbr.rel (0) target = $region5
    $region4: #{crossatf_forward.5} parent=1 // pred_region
      _
    $region5: #{crossatf_forward.5} parent=1 // pred_fallthru
      _
    // Predicated region
    $region6: #{crossatf_forward.5} parent=1 // pred_check
      _
    $region7: #{crossatf_forward.5} parent=1 // pred_check_branch
      %14 = sbr.rel (0) target = $region9
    $region8: #{crossatf_forward.5} parent=1 // pred_region
      _
    $region9: #{crossatf_forward.5} parent=1 // pred_fallthru
      _
    // Predicated region
    $region10: #{crossatf_forward.5} parent=1 // pred_check
      _
    $region11: #{crossatf_forward.5} parent=1 // pred_check_branch
      %16 = sbr.rel (0) target = $region13
    $region12: #{crossatf_forward.5} parent=1 // pred_region
      _
    $region13: #{crossatf_forward.5} parent=1 // pred_fallthru
      _
    // Predicated region
    $region14: #{crossatf_forward.5} parent=1 // pred_check
      _
    $region15: #{crossatf_forward.5} parent=1 // pred_check_branch
      %18 = sbr.rel (0) target = $region17
    $region16: #{crossatf_forward.5} parent=1 // pred_region
      _
    $region17: #{crossatf_forward.5} parent=1 // pred_fallthru
      _
    // Predicated region
    $region18: #{crossatf_forward.5} parent=1 // pred_check
      _
    $region19: #{crossatf_forward.5} parent=1 // pred_check_branch
      %20 = sbr.rel (0) target = $region21
    $region20: #{crossatf_forward.5} parent=1 // pred_region
      %s22 = ssub.s32 16, 16
      %23 = vsyncadd [#allocation3], %s22
      %s25 = sshll.u32 %s4, 4
      %s26 = int_to_ptr.vmem [resolvable:$true] %s25
      %28 = dma.vmem_to_smem %s26, 16, [#allocation2], [#allocation3]
    $region21: #{crossatf_forward.5} parent=1 // pred_fallthru
      _
    // Predicated region
    $region22: #{crossatf_forward.5} parent=1 // pred_check
      _
    $region23: #{crossatf_forward.5} parent=1 // pred_check_branch
      %30 = sbr.rel (0) target = $region25
    $region24: #{crossatf_forward.5} parent=1 // pred_region
      %31 = dma.done [#allocation3], 16
    $region25: #{crossatf_forward.5} parent=1 // pred_fallthru
      _
    %32 = sfence
    %v33 = vld [vmem:[%s2] sm:$0xff]
    %v34 = vld [vmem:[%s3] sm:$0xff]
    %s35 = sld [smem:[#allocation2]]
    %s36 = sld [smem:[#allocation2 + $0x1]]
    %v37 = vld [vmem:[%s1] sm:$0xff]
    %v38 = vld [vmem:[%s1 + $0x8] sm:$0xff]
    %v39 = vld [vmem:[%s0] sm:$0xff]
    %v40 = vld [vmem:[%s0 + $0x8] sm:$0xff]
    %v41 = vstv %s35
    %v42 = vmul.f32 %v41, %v39
    %v43 = vmul.f32 %v41, %v40
    %45 = vset.pattern.permute.xlu0 0
    %46 = vperm.xlu0 %45, %v34
    %v47 = vpop.permute.xlu0 %46
    %vm49 = vcmask 64512
    %v51 = vsel %vm49, %v33, 0
    %53 = vmatprep.subr.mxu0 %v38
    %54 = vmatpush1.msra.mxu0 %v37
    %55 = vmatprep.subr.mxu0 0.0
    %56 = vmatpush1.msra.mxu0 0.0
    %57 = vmatprep.subr.mxu0 0.0
    %58 = vmatpush1.msra.mxu0 0.0
    %59 = vmatprep.subr.mxu0 0.0
    %60 = vmatpush1.msra.mxu0 0.0
    %61 = vmatprep.subr.mxu0 0.0
    %62 = vmatpush1.msra.mxu0 0.0
    %63 = vmatprep.subr.mxu0 0.0
    %64 = vmatpush1.msra.mxu0 0.0
    %65 = vmatprep.subr.mxu0 0.0
    %66 = vmatpush1.msra.mxu0 0.0
    %67 = vmatprep.subr.mxu0 0.0
    %68 = vmatpush1.msra.mxu0 0.0
    %69 = vmatprep.subr.mxu0 0.0
    %70 = vmatpush1.msra.mxu0 0.0
    %71 = vmatprep.subr.mxu0 0.0
    %72 = vmatpush1.msra.mxu0 0.0
    %73 = vmatprep.subr.mxu0 0.0
    %74 = vmatpush1.msra.mxu0 0.0
    %75 = vmatprep.subr.mxu0 0.0
    %76 = vmatpush1.msra.mxu0 0.0
    %77 = vmatprep.subr.mxu0 0.0
    %78 = vmatpush1.msra.mxu0 0.0
    %79 = vmatprep.subr.mxu0 0.0
    %80 = vmatpush1.msra.mxu0 0.0
    %81 = vmatprep.subr.mxu0 0.0
    %82 = vmatpush1.msra.mxu0 0.0
    %83 = vmatprep.subr.mxu0 0.0
    %84 = vmatpush1.msra.mxu0 0.0
    %85 = vmatprep.subr.mxu0 0.0
    %86 = vmatpush1.msra.mxu0 0.0
    %87 = vmatprep.subr.mxu0 0.0
    %88 = vmatpush1.msra.mxu0 0.0
    %89 = vmatprep.subr.mxu0 0.0
    %90 = vmatpush1.msra.mxu0 0.0
    %91 = vmatprep.subr.mxu0 0.0
    %92 = vmatpush1.msra.mxu0 0.0
    %93 = vmatprep.subr.mxu0 0.0
    %94 = vmatpush1.msra.mxu0 0.0
    %95 = vmatprep.subr.mxu0 0.0
    %96 = vmatpush1.msra.mxu0 0.0
    %97 = vmatprep.subr.mxu0 0.0
    %98 = vmatpush1.msra.mxu0 0.0
    %99 = vmatprep.subr.mxu0 0.0
    %100 = vmatpush1.msra.mxu0 0.0
    %101 = vmatprep.subr.mxu0 0.0
    %102 = vmatpush1.msra.mxu0 0.0
    %103 = vmatprep.subr.mxu0 0.0
    %104 = vmatpush1.msra.mxu0 0.0
    %105 = vmatprep.subr.mxu0 0.0
    %106 = vmatpush1.msra.mxu0 0.0
    %107 = vmatprep.subr.mxu0 0.0
    %108 = vmatpush1.msra.mxu0 0.0
    %109 = vmatprep.subr.mxu0 0.0
    %110 = vmatpush1.msra.mxu0 0.0
    %111 = vmatprep.subr.mxu0 0.0
    %112 = vmatpush1.msra.mxu0 0.0
    %113 = vmatprep.subr.mxu0 0.0
    %114 = vmatpush1.msra.mxu0 0.0
    %115 = vmatprep.subr.mxu0 0.0
    %116 = vmatpush1.msra.mxu0 0.0
    %117 = vmatprep.mubr.f32.mxu0 0.0
    %118 = vmatmul.mubr.f32.gmra.mrb[0].mxu0 %v51
    %v119 = vpop.f32.mrb[0].mxu0
    %v120 = vadd.f32 %v47, %v119
    %v121 = vpop.f32.mrb[0].mxu0
    %v122 = vadd.f32 %v47, %v121
    %123 = vdwg.mxu0
    %v124 = vstv %s36
    %v125 = vmul.f32 %v124, %v120
    %v126 = vmul.f32 %v124, %v122
    %v127 = vadd.f32 %v42, %v125
    %v128 = vadd.f32 %v43, %v126
    %v129 = vadd.f32 %v127, %v128
    %130 = vadd.xlane.f32.xlu0 %v129
    %v131 = vpop.xlane.xlu0 %130
    %v132 = vadd.f32 %v131, 0.0
    %s133 = scalar_lea.vmem %s1, 16
    %v134 = vld [vmem:[%s133] sm:$0xff]
    %v135 = vld [vmem:[%s133 + $0x8] sm:$0xff]
    %s136 = scalar_lea.vmem %s0, 16
    %v137 = vld [vmem:[%s136] sm:$0xff]
    %v138 = vld [vmem:[%s136 + $0x8] sm:$0xff]
    %v139 = vmul.f32 %v41, %v137
    %v140 = vmul.f32 %v41, %v138
    %141 = vmatprep.subr.mxu0 %v135
    %142 = vmatpush1.msra.mxu0 %v134
    %143 = vmatprep.subr.mxu0 0.0
    %144 = vmatpush1.msra.mxu0 0.0
    %145 = vmatprep.subr.mxu0 0.0
    %146 = vmatpush1.msra.mxu0 0.0
    %147 = vmatprep.subr.mxu0 0.0
    %148 = vmatpush1.msra.mxu0 0.0
    %149 = vmatprep.subr.mxu0 0.0
    %150 = vmatpush1.msra.mxu0 0.0
    %151 = vmatprep.subr.mxu0 0.0
    %152 = vmatpush1.msra.mxu0 0.0
    %153 = vmatprep.subr.mxu0 0.0
    %154 = vmatpush1.msra.mxu0 0.0
    %155 = vmatprep.subr.mxu0 0.0
    %156 = vmatpush1.msra.mxu0 0.0
    %157 = vmatprep.subr.mxu0 0.0
    %158 = vmatpush1.msra.mxu0 0.0
    %159 = vmatprep.subr.mxu0 0.0
    %160 = vmatpush1.msra.mxu0 0.0
    %161 = vmatprep.subr.mxu0 0.0
    %162 = vmatpush1.msra.mxu0 0.0
    %163 = vmatprep.subr.mxu0 0.0
    %164 = vmatpush1.msra.mxu0 0.0
    %165 = vmatprep.subr.mxu0 0.0
    %166 = vmatpush1.msra.mxu0 0.0
    %167 = vmatprep.subr.mxu0 0.0
    %168 = vmatpush1.msra.mxu0 0.0
    %169 = vmatprep.subr.mxu0 0.0
    %170 = vmatpush1.msra.mxu0 0.0
    %171 = vmatprep.subr.mxu0 0.0
    %172 = vmatpush1.msra.mxu0 0.0
    %173 = vmatprep.subr.mxu0 0.0
    %174 = vmatpush1.msra.mxu0 0.0
    %175 = vmatprep.subr.mxu0 0.0
    %176 = vmatpush1.msra.mxu0 0.0
    %177 = vmatprep.subr.mxu0 0.0
    %178 = vmatpush1.msra.mxu0 0.0
    %179 = vmatprep.subr.mxu0 0.0
    %180 = vmatpush1.msra.mxu0 0.0
    %181 = vmatprep.subr.mxu0 0.0
    %182 = vmatpush1.msra.mxu0 0.0
    %183 = vmatprep.subr.mxu0 0.0
    %184 = vmatpush1.msra.mxu0 0.0
    %185 = vmatprep.subr.mxu0 0.0
    %186 = vmatpush1.msra.mxu0 0.0
    %187 = vmatprep.subr.mxu0 0.0
    %188 = vmatpush1.msra.mxu0 0.0
    %189 = vmatprep.subr.mxu0 0.0
    %190 = vmatpush1.msra.mxu0 0.0
    %191 = vmatprep.subr.mxu0 0.0
    %192 = vmatpush1.msra.mxu0 0.0
    %193 = vmatprep.subr.mxu0 0.0
    %194 = vmatpush1.msra.mxu0 0.0
    %195 = vmatprep.subr.mxu0 0.0
    %196 = vmatpush1.msra.mxu0 0.0
    %197 = vmatprep.subr.mxu0 0.0
    %198 = vmatpush1.msra.mxu0 0.0
    %199 = vmatprep.subr.mxu0 0.0
    %200 = vmatpush1.msra.mxu0 0.0
    %201 = vmatprep.subr.mxu0 0.0
    %202 = vmatpush1.msra.mxu0 0.0
    %203 = vmatprep.subr.mxu0 0.0
    %204 = vmatpush1.msra.mxu0 0.0
    %205 = vmatprep.mubr.f32.mxu0 0.0
    %206 = vmatmul.mubr.f32.gmra.mrb[0].mxu0 %v51
    %v207 = vpop.f32.mrb[0].mxu0
    %v208 = vadd.f32 %v47, %v207
    %v209 = vpop.f32.mrb[0].mxu0
    %v210 = vadd.f32 %v47, %v209
    %211 = vdwg.mxu0
    %v212 = vmul.f32 %v124, %v208
    %v213 = vmul.f32 %v124, %v210
    %v214 = vadd.f32 %v139, %v212
    %v215 = vadd.f32 %v140, %v213
    %v216 = vadd.f32 %v214, %v215
    %217 = vadd.xlane.f32.xlu0 %v216
    %v218 = vpop.xlane.xlu0 %217
    %v219 = vadd.f32 %v132, %v218
    %v220 = vrcp.pop 512.0
    %v221 = vmul.f32 %v219, %v220
    %v222 = vsub.f32 %v127, %v221
    %v223 = vsub.f32 %v128, %v221
    %v224 = vmul.f32 %v222, %v222
    %v225 = vmul.f32 %v223, %v223
    %v226 = vadd.f32 %v224, %v225
    %227 = vadd.xlane.f32.xlu0 %v226
    %v228 = vpop.xlane.xlu0 %227
    %v229 = vadd.f32 %v228, 0.0
    %v230 = vsub.f32 %v214, %v221
    %v231 = vsub.f32 %v215, %v221
    %v232 = vmul.f32 %v230, %v230
    %v233 = vmul.f32 %v231, %v231
    %v234 = vadd.f32 %v232, %v233
    %235 = vadd.xlane.f32.xlu0 %v234
    %v236 = vpop.xlane.xlu0 %235
    %v237 = vadd.f32 %v229, %v236
    %v238 = vmul.f32 %v237, %v220
    %v239 = vadd.f32 %v238, 1e-05
    %v240 = vrsqrt.pop %v239
    %v241 = vmul.f32 %v222, %v240
    %v242 = vmul.f32 %v223, %v240
    %v243 = vmax.f32 %v241, 0.0
    %v244 = vmax.f32 %v242, 0.0
    %245 = vst [vmem:[%s5] sm:$0xff] %v243
    %246 = vst [vmem:[%s5 + $0x8] sm:$0xff] %v244
    %v247 = vmul.f32 %v230, %v240
    %v248 = vmul.f32 %v231, %v240
    %v249 = vmax.f32 %v247, 0.0
    %v250 = vmax.f32 %v248, 0.0
    %s251 = scalar_lea.vmem %s5, 16
    %252 = vst [vmem:[%s251] sm:$0xff] %v249
    %253 = vst [vmem:[%s251 + $0x8] sm:$0xff] %v250
    // Predicated region
    $region26: #{crossatf_forward.5} parent=1 // pred_check
      _
    $region27: #{crossatf_forward.5} parent=1 // pred_check_branch
      %255 = sbr.rel (0) target = $region29
    $region28: #{crossatf_forward.5} parent=1 // pred_region
      _
    $region29: #{crossatf_forward.5} parent=1 // pred_fallthru
      _
    // Predicated region
    $region30: #{crossatf_forward.5} parent=1 // pred_check
      _
    $region31: #{crossatf_forward.5} parent=1 // pred_check_branch
      %257 = sbr.rel (0) target = $region33
    $region32: #{crossatf_forward.5} parent=1 // pred_region
      _
    $region33: #{crossatf_forward.5} parent=1 // pred_fallthru
      _
    %258 = vsyncpa [#allocation3], 1

</llo_original>
